<compile_context>
chip_gen: v6e
topology: v6e:2x2x1
jax: 0.10.0
libtpu: 0.0.40
codegen_flags: <defaults>
</compile_context>

<pallas_src>
import functools

import jax
import jax.numpy as jnp
from jax.experimental import pallas as pl
from jax.experimental.pallas import tpu as pltpu


# ------------------------------ Pallas kernel ------------------------------

def _silu(h):
    # SiLU = h * sigmoid(h); the reciprocal goes to the EUP (approx vrcp),
    # error ~1e-3 which is far inside the validation tolerance.
    return h * pl.reciprocal(1.0 + jnp.exp(-h), approx=True)


def _mv2_kernel(x_ref, w1_ref, b1_ref, wm_ref, b2_ref, w2_ref, b3_ref, o_ref,
                *, W, use_res):
    """Fused MV2Block for one group of Bt batch elements (lane-concatenated).

    x_ref  : (1, Cin, N)      f32  input, channel-major, N = Bt*H*W lanes
    w1_ref : (Chid, Cin)      f32  1x1 expand weight (BN folded)
    b1_ref : (Chid, 1)        f32  folded BN shift
    wm_ref : (9, Chid, N)     f32  depthwise tap weights * boundary masks
    b2_ref : (Chid, 1)        f32  folded BN shift
    w2_ref : (Cout, Chid)     f32  1x1 project weight (BN folded)
    b3_ref : (Cout, 1)        f32  folded BN shift
    o_ref  : (1, Cout, N)     f32
    """
    x32 = x_ref[0]                                         # (Cin, N), f32
    N = x32.shape[-1]

    # ---- pointwise expand: 1x1 conv (+ folded BN) + SiLU --------------------
    # f32 matmul: at K=Cin the MXU is <2% utilized either way; skipping the
    # bf16 pack keeps VALU free and precision high.
    h1 = jnp.dot(w1_ref[...], x32,
                 preferred_element_type=jnp.float32) + b1_ref[...]
    h1 = _silu(h1)

    # ---- depthwise 3x3, stride 1, pad 1 (+ folded BN) + SiLU ----------------
    # 8 static XLU lane-rolls of the flat (Chid, N) slab; tap weights already
    # carry the per-pixel boundary mask, so each tap is a single fused
    # multiply-add.  Accumulator starts from the (unshifted) center tap.
    acc = h1 * wm_ref[4]                                   # center tap (di=dj=0)
    t = 0
    for di in (-1, 0, 1):
        for dj in (-1, 0, 1):
            off = di * W + dj
            if off != 0:
                acc = acc + pltpu.roll(h1, (-off) % N, 1) * wm_ref[t]
            t += 1
    h2 = _silu(acc + b2_ref[...])

    # ---- pointwise project: 1x1 conv (+ folded BN), linear ------------------
    y = jnp.dot(w2_ref[...], h2,
                preferred_element_type=jnp.float32) + b3_ref[...]
    if use_res:
        y = y + x32                                        # residual add in f32
    o_ref[0] = y


# ------------------------------ wrapper / glue ------------------------------

def fold_bn(bn, eps=1e-5):
    gamma, beta, mean, var = bn
    scale = gamma * jax.lax.rsqrt(var + eps)
    shift = beta - mean * scale
    return scale, shift


def prepare_mv2_params(raw):
    """Fold inference-mode BatchNorm into conv weights once (outside the hot
    path).  All weights kept f32: the MXU has huge slack at these K."""
    s1, sh1 = fold_bn(raw["bn1"])
    s2, sh2 = fold_bn(raw["bn2"])
    s3, sh3 = fold_bn(raw["bn3"])
    hidden = raw["w_dw"].shape[0]
    w1 = (raw["w_pw1"][:, :, 0, 0] * s1[:, None]).astype(jnp.float32)   # (Chid, Cin)
    wdw = (raw["w_dw"].reshape(hidden, 9) * s2[:, None]).astype(jnp.float32)
    w2 = (raw["w_pw2"][:, :, 0, 0] * s3[:, None]).astype(jnp.float32)   # (Cout, Chid)
    return dict(
        w1=w1, b1=sh1.reshape(-1, 1).astype(jnp.float32),
        wdw=wdw, b2=sh2.reshape(-1, 1).astype(jnp.float32),
        w2=w2, b3=sh3.reshape(-1, 1).astype(jnp.float32))


def _dw_masks(H, W):
    """(9, H*W) 0/1 masks: tap (di,dj) is valid where the shifted pixel lies
    inside the image."""
    ii = jnp.arange(H)[:, None]
    jj = jnp.arange(W)[None, :]
    rows = []
    for di in (-1, 0, 1):
        for dj in (-1, 0, 1):
            m = ((ii + di >= 0) & (ii + di < H) & (jj + dj >= 0) & (jj + dj < W))
            rows.append(m.reshape(-1))
    return jnp.stack(rows).astype(jnp.float32)


def _pick_grouping(B):
    """Fold Bt images per grid step.  Two fat 'parallel' steps when B is even
    (one per v7x TensorCore; also minimal overhead on v5e/v6e), else B steps."""
    if B >= 2 and B % 2 == 0:
        return 2, B // 2
    return B, 1


def mv2block_forward(x_nchw, fp, *, stride, use_res):
    if stride != 1:
        # TODO(synk): stride=2 (subsampled depthwise output) not implemented.
        raise NotImplementedError("MV2Block Pallas kernel: stride=2 not implemented")
    B, Cin, H, W = x_nchw.shape
    P = H * W
    hidden = fp["w1"].shape[0]
    Cout = fp["w2"].shape[0]

    G, Bt = _pick_grouping(B)
    N = Bt * P

    # (B, Cin, H, W) -> (G, Cin, Bt*P): batch folded into the lane axis,
    # channel-major, flat spatial (cheap XLA layout plumbing outside kernel).
    x = (x_nchw.reshape(G, Bt, Cin, P)
               .transpose(0, 2, 1, 3)
               .reshape(G, Cin, N))

    # Combined masked depthwise tap weights: (9, Chid, P) tiled Bt x along
    # lanes.  The masks also kill any cross-image fetch introduced by rolling
    # over the concatenated lane axis.
    mask9 = _dw_masks(H, W)                                   # (9, P)
    wm = fp["wdw"].T[:, :, None] * mask9[:, None, :]          # (9, Chid, P)
    wm = jnp.tile(wm, (1, 1, Bt))                             # (9, Chid, N)

    kernel = functools.partial(_mv2_kernel, W=W, use_res=use_res)
    y = pl.pallas_call(
        kernel,
        out_shape=jax.ShapeDtypeStruct((G, Cout, N), jnp.float32),
        grid=(G,),
        in_specs=[
            pl.BlockSpec((1, Cin, N), lambda g: (g, 0, 0)),
            pl.BlockSpec((hidden, Cin), lambda g: (0, 0)),
            pl.BlockSpec((hidden, 1), lambda g: (0, 0)),
            pl.BlockSpec((9, hidden, N), lambda g: (0, 0, 0)),
            pl.BlockSpec((hidden, 1), lambda g: (0, 0)),
            pl.BlockSpec((Cout, hidden), lambda g: (0, 0)),
            pl.BlockSpec((Cout, 1), lambda g: (0, 0)),
        ],
        out_specs=pl.BlockSpec((1, Cout, N), lambda g: (g, 0, 0)),
        compiler_params=pltpu.CompilerParams(
            dimension_semantics=("parallel",)),
    )(x, fp["w1"], fp["b1"], wm, fp["b2"], fp["w2"], fp["b3"])

    # (G, Cout, Bt*P) -> (B, Cout, H, W)
    return (y.reshape(G, Cout, Bt, P)
             .transpose(0, 2, 1, 3)
             .reshape(B, Cout, H, W))


# --------------------------- pure-JAX reference ---------------------------

def mv2block_reference(x, raw, *, stride=1, eps=1e-5):
    def bn(y, p):
        g, b, m, v = p
        return ((y - m[None, :, None, None]) * jax.lax.rsqrt(v + eps)[None, :, None, None]
                * g[None, :, None, None] + b[None, :, None, None])

    dn = ("NCHW", "OIHW", "NCHW")
    hidden = raw["w_dw"].shape[0]
    y = jax.lax.conv_general_dilated(x, raw["w_pw1"], (1, 1), "VALID",
                                     dimension_numbers=dn)
    y = jax.nn.silu(bn(y, raw["bn1"]))
    y = jax.lax.conv_general_dilated(y, raw["w_dw"], (stride, stride),
                                     ((1, 1), (1, 1)), dimension_numbers=dn,
                                     feature_group_count=hidden)
    y = jax.nn.silu(bn(y, raw["bn2"]))
    y = jax.lax.conv_general_dilated(y, raw["w_pw2"], (1, 1), "VALID",
                                     dimension_numbers=dn)
    y = bn(y, raw["bn3"])
    if stride == 1 and x.shape[1] == y.shape[1]:
        y = x + y
    return y


# ------------------------------ parameter init ------------------------------

def init_mv2_params(key, inp, oup, expansion):
    hidden = inp * expansion
    ks = iter(jax.random.split(key, 16))

    def nrm(shape, s=0.05):
        return s * jax.random.normal(next(ks), shape, jnp.float32)

    def bn(c):
        gamma = 1.0 + nrm((c,))
        beta = nrm((c,))
        mean = nrm((c,), 0.1)
        var = 1.0 + jnp.abs(nrm((c,), 0.1))
        return (gamma, beta, mean, var)

    return dict(
        w_pw1=nrm((hidden, inp, 1, 1)),   # torch layout (Cout, Cin, kh, kw)
        bn1=bn(hidden),
        w_dw=nrm((hidden, 1, 3, 3)),
        bn2=bn(hidden),
        w_pw2=nrm((oup, hidden, 1, 1)),
        bn3=bn(oup),
    )


# ----------------------------------- main -----------------------------------

if __name__ == "__main__":
    # B=4 so the batch-folding path is exercised: 2 grid steps, Bt=2 images
    # per step, lane axis N = 2*256 = 512.
    B, Cin, H, W = 4, 4, 16, 16
    expansion, stride = 4, 1
    Cout = Cin                              # use_res_connect == True path

    key = jax.random.PRNGKey(0)
    pkey, xkey = jax.random.split(key)
    raw = init_mv2_params(pkey, Cin, Cout, expansion)
    x = jax.random.normal(xkey, (B, Cin, H, W), jnp.float32)

    folded = prepare_mv2_params(raw)        # BN folding, once
    use_res = (stride == 1 and Cin == Cout)
    fwd = jax.jit(functools.partial(mv2block_forward, stride=stride, use_res=use_res))

    y = fwd(x, folded)
    jax.block_until_ready(y)

    # correctness check against a pure-JAX (f32) reference of the same module
    y_ref = mv2block_reference(x, raw, stride=stride)
    assert y.shape == (B, Cout, H, W)
    assert bool(jnp.all(jnp.isfinite(y)))
    max_err = float(jnp.max(jnp.abs(y - y_ref)))
    assert max_err < 2e-2, f"max abs err {max_err}"
    print("KERNEL_OK")
</pallas_src>

<mosaic_0001>
module attributes {stable_mosaic.version = 11 : i64} {
  func.func @_mv2_kernel(%arg0: i32, %arg1: memref<1x4x512xf32, #tpu.memory_space<vmem>>, %arg2: memref<16x4xf32, #tpu.memory_space<vmem>>, %arg3: memref<16x1xf32, #tpu.memory_space<vmem>>, %arg4: memref<9x16x512xf32, #tpu.memory_space<vmem>>, %arg5: memref<16x1xf32, #tpu.memory_space<vmem>>, %arg6: memref<4x16xf32, #tpu.memory_space<vmem>>, %arg7: memref<4x1xf32, #tpu.memory_space<vmem>>, %arg8: memref<1x4x512xf32, #tpu.memory_space<vmem>>) attributes {dimension_semantics = [#tpu.dimension_semantics<parallel>], iteration_bounds = array<i64: 2>, scalar_prefetch = 0 : i64, scratch_operands = 0 : i64, tpu.core_type = #tpu.core_type<tc>, window_params = [{transform_indices = @transform_0, window_bounds = array<i64: 1, 4, 512>}, {pipeline_mode = #tpu.pipeline_mode<synchronous>, transform_indices = @transform_1, window_bounds = array<i64: 16, 4>}, {pipeline_mode = #tpu.pipeline_mode<synchronous>, transform_indices = @transform_2, window_bounds = array<i64: 16, 1>}, {pipeline_mode = #tpu.pipeline_mode<synchronous>, transform_indices = @transform_3, window_bounds = array<i64: 9, 16, 512>}, {pipeline_mode = #tpu.pipeline_mode<synchronous>, transform_indices = @transform_4, window_bounds = array<i64: 16, 1>}, {pipeline_mode = #tpu.pipeline_mode<synchronous>, transform_indices = @transform_5, window_bounds = array<i64: 4, 16>}, {pipeline_mode = #tpu.pipeline_mode<synchronous>, transform_indices = @transform_6, window_bounds = array<i64: 4, 1>}, {transform_indices = @transform_7, window_bounds = array<i64: 1, 4, 512>}]} {
    %c0 = arith.constant 0 : index
    %c0_0 = arith.constant 0 : index
    %c0_1 = arith.constant 0 : index
    %0 = vector.load %arg1[%c0, %c0_0, %c0_1] : memref<1x4x512xf32, #tpu.memory_space<vmem>>, vector<1x4x512xf32>
    %1 = vector.shape_cast %0 : vector<1x4x512xf32> to vector<4x512xf32>
    %c0_2 = arith.constant 0 : index
    %c0_3 = arith.constant 0 : index
    %2 = vector.load %arg2[%c0_2, %c0_3] : memref<16x4xf32, #tpu.memory_space<vmem>>, vector<16x4xf32>
    %cst = arith.constant dense<0.000000e+00> : vector<16x512xf32>
    %3 = tpu.matmul %2, %1, %cst {dimension_numbers = #tpu.dot_dimension_numbers<[1], [0], [0], [1], [0, 0, 1, 1], [], []>} : vector<16x4xf32>, vector<4x512xf32>, vector<16x512xf32> -> vector<16x512xf32>
    %c0_4 = arith.constant 0 : index
    %c0_5 = arith.constant 0 : index
    %4 = vector.load %arg3[%c0_4, %c0_5] : memref<16x1xf32, #tpu.memory_space<vmem>>, vector<16x1xf32>
    %5 = vector.broadcast %4 : vector<16x1xf32> to vector<16x512xf32>
    %6 = arith.addf %3, %5 : vector<16x512xf32>
    %cst_6 = arith.constant 0.000000e+00 : f32
    %7 = vector.broadcast %cst_6 : f32 to vector<16x512xf32>
    %8 = arith.subf %7, %6 : vector<16x512xf32>
    %9 = math.exp %8 : vector<16x512xf32>
    %cst_7 = arith.constant 1.000000e+00 : f32
    %10 = vector.broadcast %cst_7 : f32 to vector<16x512xf32>
    %11 = arith.addf %10, %9 : vector<16x512xf32>
    %12 = tpu.reciprocal %11 {approx = true} : vector<16x512xf32> -> vector<16x512xf32>
    %13 = arith.mulf %6, %12 : vector<16x512xf32>
    %c4 = arith.constant 4 : index
    %c0_8 = arith.constant 0 : index
    %c0_9 = arith.constant 0 : index
    %14 = vector.load %arg4[%c4, %c0_8, %c0_9] : memref<9x16x512xf32, #tpu.memory_space<vmem>>, vector<1x16x512xf32>
    %15 = vector.shape_cast %14 : vector<1x16x512xf32> to vector<16x512xf32>
    %16 = arith.mulf %13, %15 : vector<16x512xf32>
    %c17_i32 = arith.constant 17 : i32
    %17 = tpu.dynamic_rotate %13 by %c17_i32 dim 1 : vector<16x512xf32>, i32 -> vector<16x512xf32>
    %c0_10 = arith.constant 0 : index
    %c0_11 = arith.constant 0 : index
    %c0_12 = arith.constant 0 : index
    %18 = vector.load %arg4[%c0_10, %c0_11, %c0_12] : memref<9x16x512xf32, #tpu.memory_space<vmem>>, vector<1x16x512xf32>
    %19 = vector.shape_cast %18 : vector<1x16x512xf32> to vector<16x512xf32>
    %20 = arith.mulf %17, %19 : vector<16x512xf32>
    %21 = arith.addf %16, %20 : vector<16x512xf32>
    %c16_i32 = arith.constant 16 : i32
    %22 = tpu.dynamic_rotate %13 by %c16_i32 dim 1 : vector<16x512xf32>, i32 -> vector<16x512xf32>
    %c1 = arith.constant 1 : index
    %c0_13 = arith.constant 0 : index
    %c0_14 = arith.constant 0 : index
    %23 = vector.load %arg4[%c1, %c0_13, %c0_14] : memref<9x16x512xf32, #tpu.memory_space<vmem>>, vector<1x16x512xf32>
    %24 = vector.shape_cast %23 : vector<1x16x512xf32> to vector<16x512xf32>
    %25 = arith.mulf %22, %24 : vector<16x512xf32>
    %26 = arith.addf %21, %25 : vector<16x512xf32>
    %c15_i32 = arith.constant 15 : i32
    %27 = tpu.dynamic_rotate %13 by %c15_i32 dim 1 : vector<16x512xf32>, i32 -> vector<16x512xf32>
    %c2 = arith.constant 2 : index
    %c0_15 = arith.constant 0 : index
    %c0_16 = arith.constant 0 : index
    %28 = vector.load %arg4[%c2, %c0_15, %c0_16] : memref<9x16x512xf32, #tpu.memory_space<vmem>>, vector<1x16x512xf32>
    %29 = vector.shape_cast %28 : vector<1x16x512xf32> to vector<16x512xf32>
    %30 = arith.mulf %27, %29 : vector<16x512xf32>
    %31 = arith.addf %26, %30 : vector<16x512xf32>
    %c1_i32 = arith.constant 1 : i32
    %32 = tpu.dynamic_rotate %13 by %c1_i32 dim 1 : vector<16x512xf32>, i32 -> vector<16x512xf32>
    %c3 = arith.constant 3 : index
    %c0_17 = arith.constant 0 : index
    %c0_18 = arith.constant 0 : index
    %33 = vector.load %arg4[%c3, %c0_17, %c0_18] : memref<9x16x512xf32, #tpu.memory_space<vmem>>, vector<1x16x512xf32>
    %34 = vector.shape_cast %33 : vector<1x16x512xf32> to vector<16x512xf32>
    %35 = arith.mulf %32, %34 : vector<16x512xf32>
    %36 = arith.addf %31, %35 : vector<16x512xf32>
    %c511_i32 = arith.constant 511 : i32
    %37 = tpu.dynamic_rotate %13 by %c511_i32 dim 1 : vector<16x512xf32>, i32 -> vector<16x512xf32>
    %c5 = arith.constant 5 : index
    %c0_19 = arith.constant 0 : index
    %c0_20 = arith.constant 0 : index
    %38 = vector.load %arg4[%c5, %c0_19, %c0_20] : memref<9x16x512xf32, #tpu.memory_space<vmem>>, vector<1x16x512xf32>
    %39 = vector.shape_cast %38 : vector<1x16x512xf32> to vector<16x512xf32>
    %40 = arith.mulf %37, %39 : vector<16x512xf32>
    %41 = arith.addf %36, %40 : vector<16x512xf32>
    %c497_i32 = arith.constant 497 : i32
    %42 = tpu.dynamic_rotate %13 by %c497_i32 dim 1 : vector<16x512xf32>, i32 -> vector<16x512xf32>
    %c6 = arith.constant 6 : index
    %c0_21 = arith.constant 0 : index
    %c0_22 = arith.constant 0 : index
    %43 = vector.load %arg4[%c6, %c0_21, %c0_22] : memref<9x16x512xf32, #tpu.memory_space<vmem>>, vector<1x16x512xf32>
    %44 = vector.shape_cast %43 : vector<1x16x512xf32> to vector<16x512xf32>
    %45 = arith.mulf %42, %44 : vector<16x512xf32>
    %46 = arith.addf %41, %45 : vector<16x512xf32>
    %c496_i32 = arith.constant 496 : i32
    %47 = tpu.dynamic_rotate %13 by %c496_i32 dim 1 : vector<16x512xf32>, i32 -> vector<16x512xf32>
    %c7 = arith.constant 7 : index
    %c0_23 = arith.constant 0 : index
    %c0_24 = arith.constant 0 : index
    %48 = vector.load %arg4[%c7, %c0_23, %c0_24] : memref<9x16x512xf32, #tpu.memory_space<vmem>>, vector<1x16x512xf32>
    %49 = vector.shape_cast %48 : vector<1x16x512xf32> to vector<16x512xf32>
    %50 = arith.mulf %47, %49 : vector<16x512xf32>
    %51 = arith.addf %46, %50 : vector<16x512xf32>
    %c495_i32 = arith.constant 495 : i32
    %52 = tpu.dynamic_rotate %13 by %c495_i32 dim 1 : vector<16x512xf32>, i32 -> vector<16x512xf32>
    %c8 = arith.constant 8 : index
    %c0_25 = arith.constant 0 : index
    %c0_26 = arith.constant 0 : index
    %53 = vector.load %arg4[%c8, %c0_25, %c0_26] : memref<9x16x512xf32, #tpu.memory_space<vmem>>, vector<1x16x512xf32>
    %54 = vector.shape_cast %53 : vector<1x16x512xf32> to vector<16x512xf32>
    %55 = arith.mulf %52, %54 : vector<16x512xf32>
    %56 = arith.addf %51, %55 : vector<16x512xf32>
    %c0_27 = arith.constant 0 : index
    %c0_28 = arith.constant 0 : index
    %57 = vector.load %arg5[%c0_27, %c0_28] : memref<16x1xf32, #tpu.memory_space<vmem>>, vector<16x1xf32>
    %58 = vector.broadcast %57 : vector<16x1xf32> to vector<16x512xf32>
    %59 = arith.addf %56, %58 : vector<16x512xf32>
    %cst_29 = arith.constant 0.000000e+00 : f32
    %60 = vector.broadcast %cst_29 : f32 to vector<16x512xf32>
    %61 = arith.subf %60, %59 : vector<16x512xf32>
    %62 = math.exp %61 : vector<16x512xf32>
    %cst_30 = arith.constant 1.000000e+00 : f32
    %63 = vector.broadcast %cst_30 : f32 to vector<16x512xf32>
    %64 = arith.addf %63, %62 : vector<16x512xf32>
    %65 = tpu.reciprocal %64 {approx = true} : vector<16x512xf32> -> vector<16x512xf32>
    %66 = arith.mulf %59, %65 : vector<16x512xf32>
    %c0_31 = arith.constant 0 : index
    %c0_32 = arith.constant 0 : index
    %67 = vector.load %arg6[%c0_31, %c0_32] : memref<4x16xf32, #tpu.memory_space<vmem>>, vector<4x16xf32>
    %cst_33 = arith.constant dense<0.000000e+00> : vector<4x512xf32>
    %68 = tpu.matmul %67, %66, %cst_33 {dimension_numbers = #tpu.dot_dimension_numbers<[1], [0], [0], [1], [0, 0, 1, 1], [], []>} : vector<4x16xf32>, vector<16x512xf32>, vector<4x512xf32> -> vector<4x512xf32>
    %c0_34 = arith.constant 0 : index
    %c0_35 = arith.constant 0 : index
    %69 = vector.load %arg7[%c0_34, %c0_35] : memref<4x1xf32, #tpu.memory_space<vmem>>, vector<4x1xf32>
    %70 = vector.broadcast %69 : vector<4x1xf32> to vector<4x512xf32>
    %71 = arith.addf %68, %70 : vector<4x512xf32>
    %72 = arith.addf %71, %1 : vector<4x512xf32>
    %c0_36 = arith.constant 0 : index
    %c0_37 = arith.constant 0 : index
    %c0_38 = arith.constant 0 : index
    %73 = vector.load %arg8[%c0_36, %c0_37, %c0_38] : memref<1x4x512xf32, #tpu.memory_space<vmem>>, vector<1x4x512xf32>
    %74 = vector.shape_cast %73 : vector<1x4x512xf32> to vector<4x512xf32>
    %75 = vector.shape_cast %72 : vector<4x512xf32> to vector<1x4x512xf32>
    tpu.vector_store %arg8[%c0_36, %c0_37, %c0_38], %75 {strides = array<i32>} : memref<1x4x512xf32, #tpu.memory_space<vmem>>, vector<1x4x512xf32>,
    return
  }
  func.func @transform_0(%arg0: i32) -> (i32, i32, i32) {
    %c0_i32 = arith.constant 0 : i32
    %c0_i32_0 = arith.constant 0 : i32
    %c0_i32_1 = arith.constant 0 : i32
    return %arg0, %c0_i32, %c0_i32_0 : i32, i32, i32
  }
  func.func @transform_1(%arg0: i32) -> (i32, i32) {
    %c0_i32 = arith.constant 0 : i32
    %c0_i32_0 = arith.constant 0 : i32
    %c0_i32_1 = arith.constant 0 : i32
    return %c0_i32, %c0_i32_0 : i32, i32
  }
  func.func @transform_2(%arg0: i32) -> (i32, i32) {
    %c0_i32 = arith.constant 0 : i32
    %c0_i32_0 = arith.constant 0 : i32
    %c0_i32_1 = arith.constant 0 : i32
    return %c0_i32, %c0_i32_0 : i32, i32
  }
  func.func @transform_3(%arg0: i32) -> (i32, i32, i32) {
    %c0_i32 = arith.constant 0 : i32
    %c0_i32_0 = arith.constant 0 : i32
    %c0_i32_1 = arith.constant 0 : i32
    %c0_i32_2 = arith.constant 0 : i32
    return %c0_i32, %c0_i32_0, %c0_i32_1 : i32, i32, i32
  }
  func.func @transform_4(%arg0: i32) -> (i32, i32) {
    %c0_i32 = arith.constant 0 : i32
    %c0_i32_0 = arith.constant 0 : i32
    %c0_i32_1 = arith.constant 0 : i32
    return %c0_i32, %c0_i32_0 : i32, i32
  }
  func.func @transform_5(%arg0: i32) -> (i32, i32) {
    %c0_i32 = arith.constant 0 : i32
    %c0_i32_0 = arith.constant 0 : i32
    %c0_i32_1 = arith.constant 0 : i32
    return %c0_i32, %c0_i32_0 : i32, i32
  }
  func.func @transform_6(%arg0: i32) -> (i32, i32) {
    %c0_i32 = arith.constant 0 : i32
    %c0_i32_0 = arith.constant 0 : i32
    %c0_i32_1 = arith.constant 0 : i32
    return %c0_i32, %c0_i32_0 : i32, i32
  }
  func.func @transform_7(%arg0: i32) -> (i32, i32, i32) {
    %c0_i32 = arith.constant 0 : i32
    %c0_i32_0 = arith.constant 0 : i32
    %c0_i32_1 = arith.constant 0 : i32
    return %arg0, %c0_i32, %c0_i32_0 : i32, i32, i32
  }
}

</mosaic_0001>

<llo_original>
// kernel: tile.9
$region0: #{tile.9}
  %s0 = inlined_call_operand.vmem [shape: f32[9,16,2,256], index: 0, kind: input, shape index: {}]
  %s1 = inlined_call_operand.vmem [shape: f32[9,16,512], index: 1, kind: output, shape index: {}]
  $region1: #{tile.9} parent=0
    #allocation0 [shape = 'u8[1179648]{0}', space=vmem, size = 0x120000, scoped, tag = 'scoped mem for input reshape']
    %s3 = sshll.u32 1, 2
    %s4 = ssub.s32 %s3, 1
    %s5 = smul.addr 2, 287
    %s6 = scalar_lea.vmem %s0, %s5
    %v7 = vld [vmem:[%s6] sm:%s4]
    %s8 = scalar_lea.vmem [#allocation0], 2296
    %9 = vst [vmem:[%s8] sm:%s4] %v7
    %s10 = smul.addr 2, 286
    %s11 = scalar_lea.vmem %s0, %s10
    %v12 = vld [vmem:[%s11] sm:%s4]
    %s13 = scalar_lea.vmem [#allocation0], 2288
    %14 = vst [vmem:[%s13] sm:%s4] %v12
    %s15 = smul.addr 2, 285
    %s16 = scalar_lea.vmem %s0, %s15
    %v17 = vld [vmem:[%s16] sm:%s4]
    %s18 = scalar_lea.vmem [#allocation0], 2280
    %19 = vst [vmem:[%s18] sm:%s4] %v17
    %s20 = smul.addr 2, 284
    %s21 = scalar_lea.vmem %s0, %s20
    %v22 = vld [vmem:[%s21] sm:%s4]
    %s23 = scalar_lea.vmem [#allocation0], 2272
    %24 = vst [vmem:[%s23] sm:%s4] %v22
    %s25 = smul.addr 2, 283
    %s26 = scalar_lea.vmem %s0, %s25
    %v27 = vld [vmem:[%s26] sm:%s4]
    %s28 = scalar_lea.vmem [#allocation0], 2264
    %29 = vst [vmem:[%s28] sm:%s4] %v27
    %s30 = smul.addr 2, 282
    %s31 = scalar_lea.vmem %s0, %s30
    %v32 = vld [vmem:[%s31] sm:%s4]
    %s33 = scalar_lea.vmem [#allocation0], 2256
    %34 = vst [vmem:[%s33] sm:%s4] %v32
    %s35 = smul.addr 2, 281
    %s36 = scalar_lea.vmem %s0, %s35
    %v37 = vld [vmem:[%s36] sm:%s4]
    %s38 = scalar_lea.vmem [#allocation0], 2248
    %39 = vst [vmem:[%s38] sm:%s4] %v37
    %s40 = smul.addr 2, 280
    %s41 = scalar_lea.vmem %s0, %s40
    %v42 = vld [vmem:[%s41] sm:%s4]
    %s43 = scalar_lea.vmem [#allocation0], 2240
    %44 = vst [vmem:[%s43] sm:%s4] %v42
    %s45 = smul.addr 2, 279
    %s46 = scalar_lea.vmem %s0, %s45
    %v47 = vld [vmem:[%s46] sm:%s4]
    %s48 = scalar_lea.vmem [#allocation0], 2232
    %49 = vst [vmem:[%s48] sm:%s4] %v47
    %s50 = smul.addr 2, 278
    %s51 = scalar_lea.vmem %s0, %s50
    %v52 = vld [vmem:[%s51] sm:%s4]
    %s53 = scalar_lea.vmem [#allocation0], 2224
    %54 = vst [vmem:[%s53] sm:%s4] %v52
    %s55 = smul.addr 2, 277
    %s56 = scalar_lea.vmem %s0, %s55
    %v57 = vld [vmem:[%s56] sm:%s4]
    %s58 = scalar_lea.vmem [#allocation0], 2216
    %59 = vst [vmem:[%s58] sm:%s4] %v57
    %s60 = smul.addr 2, 276
    %s61 = scalar_lea.vmem %s0, %s60
    %v62 = vld [vmem:[%s61] sm:%s4]
    %s63 = scalar_lea.vmem [#allocation0], 2208
    %64 = vst [vmem:[%s63] sm:%s4] %v62
    %s65 = smul.addr 2, 275
    %s66 = scalar_lea.vmem %s0, %s65
    %v67 = vld [vmem:[%s66] sm:%s4]
    %s68 = scalar_lea.vmem [#allocation0], 2200
    %69 = vst [vmem:[%s68] sm:%s4] %v67
    %s70 = smul.addr 2, 274
    %s71 = scalar_lea.vmem %s0, %s70
    %v72 = vld [vmem:[%s71] sm:%s4]
    %s73 = scalar_lea.vmem [#allocation0], 2192
    %74 = vst [vmem:[%s73] sm:%s4] %v72
    %s75 = smul.addr 2, 273
    %s76 = scalar_lea.vmem %s0, %s75
    %v77 = vld [vmem:[%s76] sm:%s4]
    %s78 = scalar_lea.vmem [#allocation0], 2184
    %79 = vst [vmem:[%s78] sm:%s4] %v77
    %s80 = smul.addr 2, 272
    %s81 = scalar_lea.vmem %s0, %s80
    %v82 = vld [vmem:[%s81] sm:%s4]
    %s83 = scalar_lea.vmem [#allocation0], 2176
    %84 = vst [vmem:[%s83] sm:%s4] %v82
    %s85 = smul.addr 2, 271
    %s86 = scalar_lea.vmem %s0, %s85
    %v87 = vld [vmem:[%s86] sm:%s4]
    %s88 = scalar_lea.vmem [#allocation0], 2168
    %89 = vst [vmem:[%s88] sm:%s4] %v87
    %s90 = smul.addr 2, 270
    %s91 = scalar_lea.vmem %s0, %s90
    %v92 = vld [vmem:[%s91] sm:%s4]
    %s93 = scalar_lea.vmem [#allocation0], 2160
    %94 = vst [vmem:[%s93] sm:%s4] %v92
    %s95 = smul.addr 2, 269
    %s96 = scalar_lea.vmem %s0, %s95
    %v97 = vld [vmem:[%s96] sm:%s4]
    %s98 = scalar_lea.vmem [#allocation0], 2152
    %99 = vst [vmem:[%s98] sm:%s4] %v97
    %s100 = smul.addr 2, 268
    %s101 = scalar_lea.vmem %s0, %s100
    %v102 = vld [vmem:[%s101] sm:%s4]
    %s103 = scalar_lea.vmem [#allocation0], 2144
    %104 = vst [vmem:[%s103] sm:%s4] %v102
    %s105 = smul.addr 2, 267
    %s106 = scalar_lea.vmem %s0, %s105
    %v107 = vld [vmem:[%s106] sm:%s4]
    %s108 = scalar_lea.vmem [#allocation0], 2136
    %109 = vst [vmem:[%s108] sm:%s4] %v107
    %s110 = smul.addr 2, 266
    %s111 = scalar_lea.vmem %s0, %s110
    %v112 = vld [vmem:[%s111] sm:%s4]
    %s113 = scalar_lea.vmem [#allocation0], 2128
    %114 = vst [vmem:[%s113] sm:%s4] %v112
    %s115 = smul.addr 2, 265
    %s116 = scalar_lea.vmem %s0, %s115
    %v117 = vld [vmem:[%s116] sm:%s4]
    %s118 = scalar_lea.vmem [#allocation0], 2120
    %119 = vst [vmem:[%s118] sm:%s4] %v117
    %s120 = smul.addr 2, 264
    %s121 = scalar_lea.vmem %s0, %s120
    %v122 = vld [vmem:[%s121] sm:%s4]
    %s123 = scalar_lea.vmem [#allocation0], 2112
    %124 = vst [vmem:[%s123] sm:%s4] %v122
    %s125 = smul.addr 2, 263
    %s126 = scalar_lea.vmem %s0, %s125
    %v127 = vld [vmem:[%s126] sm:%s4]
    %s128 = scalar_lea.vmem [#allocation0], 2104
    %129 = vst [vmem:[%s128] sm:%s4] %v127
    %s130 = smul.addr 2, 262
    %s131 = scalar_lea.vmem %s0, %s130
    %v132 = vld [vmem:[%s131] sm:%s4]
    %s133 = scalar_lea.vmem [#allocation0], 2096
    %134 = vst [vmem:[%s133] sm:%s4] %v132
    %s135 = smul.addr 2, 261
    %s136 = scalar_lea.vmem %s0, %s135
    %v137 = vld [vmem:[%s136] sm:%s4]
    %s138 = scalar_lea.vmem [#allocation0], 2088
    %139 = vst [vmem:[%s138] sm:%s4] %v137
    %s140 = smul.addr 2, 260
    %s141 = scalar_lea.vmem %s0, %s140
    %v142 = vld [vmem:[%s141] sm:%s4]
    %s143 = scalar_lea.vmem [#allocation0], 2080
    %144 = vst [vmem:[%s143] sm:%s4] %v142
    %s145 = smul.addr 2, 259
    %s146 = scalar_lea.vmem %s0, %s145
    %v147 = vld [vmem:[%s146] sm:%s4]
    %s148 = scalar_lea.vmem [#allocation0], 2072
    %149 = vst [vmem:[%s148] sm:%s4] %v147
    %s150 = smul.addr 2, 258
    %s151 = scalar_lea.vmem %s0, %s150
    %v152 = vld [vmem:[%s151] sm:%s4]
    %s153 = scalar_lea.vmem [#allocation0], 2064
    %154 = vst [vmem:[%s153] sm:%s4] %v152
    %s155 = smul.addr 2, 257
    %s156 = scalar_lea.vmem %s0, %s155
    %v157 = vld [vmem:[%s156] sm:%s4]
    %s158 = scalar_lea.vmem [#allocation0], 2056
    %159 = vst [vmem:[%s158] sm:%s4] %v157
    %s160 = smul.addr 2, 256
    %s161 = scalar_lea.vmem %s0, %s160
    %v162 = vld [vmem:[%s161] sm:%s4]
    %s163 = scalar_lea.vmem [#allocation0], 2048
    %164 = vst [vmem:[%s163] sm:%s4] %v162
    %s165 = smul.addr 2, 255
    %s166 = scalar_lea.vmem %s0, %s165
    %v167 = vld [vmem:[%s166] sm:%s4]
    %s168 = scalar_lea.vmem [#allocation0], 2040
    %169 = vst [vmem:[%s168] sm:%s4] %v167
    %s170 = smul.addr 2, 254
    %s171 = scalar_lea.vmem %s0, %s170
    %v172 = vld [vmem:[%s171] sm:%s4]
    %s173 = scalar_lea.vmem [#allocation0], 2032
    %174 = vst [vmem:[%s173] sm:%s4] %v172
    %s175 = smul.addr 2, 253
    %s176 = scalar_lea.vmem %s0, %s175
    %v177 = vld [vmem:[%s176] sm:%s4]
    %s178 = scalar_lea.vmem [#allocation0], 2024
    %179 = vst [vmem:[%s178] sm:%s4] %v177
    %s180 = smul.addr 2, 252
    %s181 = scalar_lea.vmem %s0, %s180
    %v182 = vld [vmem:[%s181] sm:%s4]
    %s183 = scalar_lea.vmem [#allocation0], 2016
    %184 = vst [vmem:[%s183] sm:%s4] %v182
    %s185 = smul.addr 2, 251
    %s186 = scalar_lea.vmem %s0, %s185
    %v187 = vld [vmem:[%s186] sm:%s4]
    %s188 = scalar_lea.vmem [#allocation0], 2008
    %189 = vst [vmem:[%s188] sm:%s4] %v187
    %s190 = smul.addr 2, 250
    %s191 = scalar_lea.vmem %s0, %s190
    %v192 = vld [vmem:[%s191] sm:%s4]
    %s193 = scalar_lea.vmem [#allocation0], 2000
    %194 = vst [vmem:[%s193] sm:%s4] %v192
    %s195 = smul.addr 2, 249
    %s196 = scalar_lea.vmem %s0, %s195
    %v197 = vld [vmem:[%s196] sm:%s4]
    %s198 = scalar_lea.vmem [#allocation0], 1992
    %199 = vst [vmem:[%s198] sm:%s4] %v197
    %s200 = smul.addr 2, 248
    %s201 = scalar_lea.vmem %s0, %s200
    %v202 = vld [vmem:[%s201] sm:%s4]
    %s203 = scalar_lea.vmem [#allocation0], 1984
    %204 = vst [vmem:[%s203] sm:%s4] %v202
    %s205 = smul.addr 2, 247
    %s206 = scalar_lea.vmem %s0, %s205
    %v207 = vld [vmem:[%s206] sm:%s4]
    %s208 = scalar_lea.vmem [#allocation0], 1976
    %209 = vst [vmem:[%s208] sm:%s4] %v207
    %s210 = smul.addr 2, 246
    %s211 = scalar_lea.vmem %s0, %s210
    %v212 = vld [vmem:[%s211] sm:%s4]
    %s213 = scalar_lea.vmem [#allocation0], 1968
    %214 = vst [vmem:[%s213] sm:%s4] %v212
    %s215 = smul.addr 2, 245
    %s216 = scalar_lea.vmem %s0, %s215
    %v217 = vld [vmem:[%s216] sm:%s4]
    %s218 = scalar_lea.vmem [#allocation0], 1960
    %219 = vst [vmem:[%s218] sm:%s4] %v217
    %s220 = smul.addr 2, 244
    %s221 = scalar_lea.vmem %s0, %s220
    %v222 = vld [vmem:[%s221] sm:%s4]
    %s223 = scalar_lea.vmem [#allocation0], 1952
    %224 = vst [vmem:[%s223] sm:%s4] %v222
    %s225 = smul.addr 2, 243
    %s226 = scalar_lea.vmem %s0, %s225
    %v227 = vld [vmem:[%s226] sm:%s4]
    %s228 = scalar_lea.vmem [#allocation0], 1944
    %229 = vst [vmem:[%s228] sm:%s4] %v227
    %s230 = smul.addr 2, 242
    %s231 = scalar_lea.vmem %s0, %s230
    %v232 = vld [vmem:[%s231] sm:%s4]
    %s233 = scalar_lea.vmem [#allocation0], 1936
    %234 = vst [vmem:[%s233] sm:%s4] %v232
    %s235 = smul.addr 2, 241
    %s236 = scalar_lea.vmem %s0, %s235
    %v237 = vld [vmem:[%s236] sm:%s4]
    %s238 = scalar_lea.vmem [#allocation0], 1928
    %239 = vst [vmem:[%s238] sm:%s4] %v237
    %s240 = smul.addr 2, 240
    %s241 = scalar_lea.vmem %s0, %s240
    %v242 = vld [vmem:[%s241] sm:%s4]
    %s243 = scalar_lea.vmem [#allocation0], 1920
    %244 = vst [vmem:[%s243] sm:%s4] %v242
    %s245 = smul.addr 2, 239
    %s246 = scalar_lea.vmem %s0, %s245
    %v247 = vld [vmem:[%s246] sm:%s4]
    %s248 = scalar_lea.vmem [#allocation0], 1912
    %249 = vst [vmem:[%s248] sm:%s4] %v247
    %s250 = smul.addr 2, 238
    %s251 = scalar_lea.vmem %s0, %s250
    %v252 = vld [vmem:[%s251] sm:%s4]
    %s253 = scalar_lea.vmem [#allocation0], 1904
    %254 = vst [vmem:[%s253] sm:%s4] %v252
    %s255 = smul.addr 2, 237
    %s256 = scalar_lea.vmem %s0, %s255
    %v257 = vld [vmem:[%s256] sm:%s4]
    %s258 = scalar_lea.vmem [#allocation0], 1896
    %259 = vst [vmem:[%s258] sm:%s4] %v257
    %s260 = smul.addr 2, 236
    %s261 = scalar_lea.vmem %s0, %s260
    %v262 = vld [vmem:[%s261] sm:%s4]
    %s263 = scalar_lea.vmem [#allocation0], 1888
    %264 = vst [vmem:[%s263] sm:%s4] %v262
    %s265 = smul.addr 2, 235
    %s266 = scalar_lea.vmem %s0, %s265
    %v267 = vld [vmem:[%s266] sm:%s4]
    %s268 = scalar_lea.vmem [#allocation0], 1880
    %269 = vst [vmem:[%s268] sm:%s4] %v267
    %s270 = smul.addr 2, 234
    %s271 = scalar_lea.vmem %s0, %s270
    %v272 = vld [vmem:[%s271] sm:%s4]
    %s273 = scalar_lea.vmem [#allocation0], 1872
    %274 = vst [vmem:[%s273] sm:%s4] %v272
    %s275 = smul.addr 2, 233
    %s276 = scalar_lea.vmem %s0, %s275
    %v277 = vld [vmem:[%s276] sm:%s4]
    %s278 = scalar_lea.vmem [#allocation0], 1864
    %279 = vst [vmem:[%s278] sm:%s4] %v277
    %s280 = smul.addr 2, 232
    %s281 = scalar_lea.vmem %s0, %s280
    %v282 = vld [vmem:[%s281] sm:%s4]
    %s283 = scalar_lea.vmem [#allocation0], 1856
    %284 = vst [vmem:[%s283] sm:%s4] %v282
    %s285 = smul.addr 2, 231
    %s286 = scalar_lea.vmem %s0, %s285
    %v287 = vld [vmem:[%s286] sm:%s4]
    %s288 = scalar_lea.vmem [#allocation0], 1848
    %289 = vst [vmem:[%s288] sm:%s4] %v287
    %s290 = smul.addr 2, 230
    %s291 = scalar_lea.vmem %s0, %s290
    %v292 = vld [vmem:[%s291] sm:%s4]
    %s293 = scalar_lea.vmem [#allocation0], 1840
    %294 = vst [vmem:[%s293] sm:%s4] %v292
    %s295 = smul.addr 2, 229
    %s296 = scalar_lea.vmem %s0, %s295
    %v297 = vld [vmem:[%s296] sm:%s4]
    %s298 = scalar_lea.vmem [#allocation0], 1832
    %299 = vst [vmem:[%s298] sm:%s4] %v297
    %s300 = smul.addr 2, 228
    %s301 = scalar_lea.vmem %s0, %s300
    %v302 = vld [vmem:[%s301] sm:%s4]
    %s303 = scalar_lea.vmem [#allocation0], 1824
    %304 = vst [vmem:[%s303] sm:%s4] %v302
    %s305 = smul.addr 2, 227
    %s306 = scalar_lea.vmem %s0, %s305
    %v307 = vld [vmem:[%s306] sm:%s4]
    %s308 = scalar_lea.vmem [#allocation0], 1816
    %309 = vst [vmem:[%s308] sm:%s4] %v307
    %s310 = smul.addr 2, 226
    %s311 = scalar_lea.vmem %s0, %s310
    %v312 = vld [vmem:[%s311] sm:%s4]
    %s313 = scalar_lea.vmem [#allocation0], 1808
    %314 = vst [vmem:[%s313] sm:%s4] %v312
    %s315 = smul.addr 2, 225
    %s316 = scalar_lea.vmem %s0, %s315
    %v317 = vld [vmem:[%s316] sm:%s4]
    %s318 = scalar_lea.vmem [#allocation0], 1800
    %319 = vst [vmem:[%s318] sm:%s4] %v317
    %s320 = smul.addr 2, 224
    %s321 = scalar_lea.vmem %s0, %s320
    %v322 = vld [vmem:[%s321] sm:%s4]
    %s323 = scalar_lea.vmem [#allocation0], 1792
    %324 = vst [vmem:[%s323] sm:%s4] %v322
    %s325 = smul.addr 2, 223
    %s326 = scalar_lea.vmem %s0, %s325
    %v327 = vld [vmem:[%s326] sm:%s4]
    %s328 = scalar_lea.vmem [#allocation0], 1784
    %329 = vst [vmem:[%s328] sm:%s4] %v327
    %s330 = smul.addr 2, 222
    %s331 = scalar_lea.vmem %s0, %s330
    %v332 = vld [vmem:[%s331] sm:%s4]
    %s333 = scalar_lea.vmem [#allocation0], 1776
    %334 = vst [vmem:[%s333] sm:%s4] %v332
    %s335 = smul.addr 2, 221
    %s336 = scalar_lea.vmem %s0, %s335
    %v337 = vld [vmem:[%s336] sm:%s4]
    %s338 = scalar_lea.vmem [#allocation0], 1768
    %339 = vst [vmem:[%s338] sm:%s4] %v337
    %s340 = smul.addr 2, 220
    %s341 = scalar_lea.vmem %s0, %s340
    %v342 = vld [vmem:[%s341] sm:%s4]
    %s343 = scalar_lea.vmem [#allocation0], 1760
    %344 = vst [vmem:[%s343] sm:%s4] %v342
    %s345 = smul.addr 2, 219
    %s346 = scalar_lea.vmem %s0, %s345
    %v347 = vld [vmem:[%s346] sm:%s4]
    %s348 = scalar_lea.vmem [#allocation0], 1752
    %349 = vst [vmem:[%s348] sm:%s4] %v347
    %s350 = smul.addr 2, 218
    %s351 = scalar_lea.vmem %s0, %s350
    %v352 = vld [vmem:[%s351] sm:%s4]
    %s353 = scalar_lea.vmem [#allocation0], 1744
    %354 = vst [vmem:[%s353] sm:%s4] %v352
    %s355 = smul.addr 2, 217
    %s356 = scalar_lea.vmem %s0, %s355
    %v357 = vld [vmem:[%s356] sm:%s4]
    %s358 = scalar_lea.vmem [#allocation0], 1736
    %359 = vst [vmem:[%s358] sm:%s4] %v357
    %s360 = smul.addr 2, 216
    %s361 = scalar_lea.vmem %s0, %s360
    %v362 = vld [vmem:[%s361] sm:%s4]
    %s363 = scalar_lea.vmem [#allocation0], 1728
    %364 = vst [vmem:[%s363] sm:%s4] %v362
    %s365 = smul.addr 2, 215
    %s366 = scalar_lea.vmem %s0, %s365
    %v367 = vld [vmem:[%s366] sm:%s4]
    %s368 = scalar_lea.vmem [#allocation0], 1720
    %369 = vst [vmem:[%s368] sm:%s4] %v367
    %s370 = smul.addr 2, 214
    %s371 = scalar_lea.vmem %s0, %s370
    %v372 = vld [vmem:[%s371] sm:%s4]
    %s373 = scalar_lea.vmem [#allocation0], 1712
    %374 = vst [vmem:[%s373] sm:%s4] %v372
    %s375 = smul.addr 2, 213
    %s376 = scalar_lea.vmem %s0, %s375
    %v377 = vld [vmem:[%s376] sm:%s4]
    %s378 = scalar_lea.vmem [#allocation0], 1704
    %379 = vst [vmem:[%s378] sm:%s4] %v377
    %s380 = smul.addr 2, 212
    %s381 = scalar_lea.vmem %s0, %s380
    %v382 = vld [vmem:[%s381] sm:%s4]
    %s383 = scalar_lea.vmem [#allocation0], 1696
    %384 = vst [vmem:[%s383] sm:%s4] %v382
    %s385 = smul.addr 2, 211
    %s386 = scalar_lea.vmem %s0, %s385
    %v387 = vld [vmem:[%s386] sm:%s4]
    %s388 = scalar_lea.vmem [#allocation0], 1688
    %389 = vst [vmem:[%s388] sm:%s4] %v387
    %s390 = smul.addr 2, 210
    %s391 = scalar_lea.vmem %s0, %s390
    %v392 = vld [vmem:[%s391] sm:%s4]
    %s393 = scalar_lea.vmem [#allocation0], 1680
    %394 = vst [vmem:[%s393] sm:%s4] %v392
    %s395 = smul.addr 2, 209
    %s396 = scalar_lea.vmem %s0, %s395
    %v397 = vld [vmem:[%s396] sm:%s4]
    %s398 = scalar_lea.vmem [#allocation0], 1672
    %399 = vst [vmem:[%s398] sm:%s4] %v397
    %s400 = smul.addr 2, 208
    %s401 = scalar_lea.vmem %s0, %s400
    %v402 = vld [vmem:[%s401] sm:%s4]
    %s403 = scalar_lea.vmem [#allocation0], 1664
    %404 = vst [vmem:[%s403] sm:%s4] %v402
    %s405 = smul.addr 2, 207
    %s406 = scalar_lea.vmem %s0, %s405
    %v407 = vld [vmem:[%s406] sm:%s4]
    %s408 = scalar_lea.vmem [#allocation0], 1656
    %409 = vst [vmem:[%s408] sm:%s4] %v407
    %s410 = smul.addr 2, 206
    %s411 = scalar_lea.vmem %s0, %s410
    %v412 = vld [vmem:[%s411] sm:%s4]
    %s413 = scalar_lea.vmem [#allocation0], 1648
    %414 = vst [vmem:[%s413] sm:%s4] %v412
    %s415 = smul.addr 2, 205
    %s416 = scalar_lea.vmem %s0, %s415
    %v417 = vld [vmem:[%s416] sm:%s4]
    %s418 = scalar_lea.vmem [#allocation0], 1640
    %419 = vst [vmem:[%s418] sm:%s4] %v417
    %s420 = smul.addr 2, 204
    %s421 = scalar_lea.vmem %s0, %s420
    %v422 = vld [vmem:[%s421] sm:%s4]
    %s423 = scalar_lea.vmem [#allocation0], 1632
    %424 = vst [vmem:[%s423] sm:%s4] %v422
    %s425 = smul.addr 2, 203
    %s426 = scalar_lea.vmem %s0, %s425
    %v427 = vld [vmem:[%s426] sm:%s4]
    %s428 = scalar_lea.vmem [#allocation0], 1624
    %429 = vst [vmem:[%s428] sm:%s4] %v427
    %s430 = smul.addr 2, 202
    %s431 = scalar_lea.vmem %s0, %s430
    %v432 = vld [vmem:[%s431] sm:%s4]
    %s433 = scalar_lea.vmem [#allocation0], 1616
    %434 = vst [vmem:[%s433] sm:%s4] %v432
    %s435 = smul.addr 2, 201
    %s436 = scalar_lea.vmem %s0, %s435
    %v437 = vld [vmem:[%s436] sm:%s4]
    %s438 = scalar_lea.vmem [#allocation0], 1608
    %439 = vst [vmem:[%s438] sm:%s4] %v437
    %s440 = smul.addr 2, 200
    %s441 = scalar_lea.vmem %s0, %s440
    %v442 = vld [vmem:[%s441] sm:%s4]
    %s443 = scalar_lea.vmem [#allocation0], 1600
    %444 = vst [vmem:[%s443] sm:%s4] %v442
    %s445 = smul.addr 2, 199
    %s446 = scalar_lea.vmem %s0, %s445
    %v447 = vld [vmem:[%s446] sm:%s4]
    %s448 = scalar_lea.vmem [#allocation0], 1592
    %449 = vst [vmem:[%s448] sm:%s4] %v447
    %s450 = smul.addr 2, 198
    %s451 = scalar_lea.vmem %s0, %s450
    %v452 = vld [vmem:[%s451] sm:%s4]
    %s453 = scalar_lea.vmem [#allocation0], 1584
    %454 = vst [vmem:[%s453] sm:%s4] %v452
    %s455 = smul.addr 2, 197
    %s456 = scalar_lea.vmem %s0, %s455
    %v457 = vld [vmem:[%s456] sm:%s4]
    %s458 = scalar_lea.vmem [#allocation0], 1576
    %459 = vst [vmem:[%s458] sm:%s4] %v457
    %s460 = smul.addr 2, 196
    %s461 = scalar_lea.vmem %s0, %s460
    %v462 = vld [vmem:[%s461] sm:%s4]
    %s463 = scalar_lea.vmem [#allocation0], 1568
    %464 = vst [vmem:[%s463] sm:%s4] %v462
    %s465 = smul.addr 2, 195
    %s466 = scalar_lea.vmem %s0, %s465
    %v467 = vld [vmem:[%s466] sm:%s4]
    %s468 = scalar_lea.vmem [#allocation0], 1560
    %469 = vst [vmem:[%s468] sm:%s4] %v467
    %s470 = smul.addr 2, 194
    %s471 = scalar_lea.vmem %s0, %s470
    %v472 = vld [vmem:[%s471] sm:%s4]
    %s473 = scalar_lea.vmem [#allocation0], 1552
    %474 = vst [vmem:[%s473] sm:%s4] %v472
    %s475 = smul.addr 2, 193
    %s476 = scalar_lea.vmem %s0, %s475
    %v477 = vld [vmem:[%s476] sm:%s4]
    %s478 = scalar_lea.vmem [#allocation0], 1544
    %479 = vst [vmem:[%s478] sm:%s4] %v477
    %s480 = smul.addr 2, 192
    %s481 = scalar_lea.vmem %s0, %s480
    %v482 = vld [vmem:[%s481] sm:%s4]
    %s483 = scalar_lea.vmem [#allocation0], 1536
    %484 = vst [vmem:[%s483] sm:%s4] %v482
    %s485 = smul.addr 2, 191
    %s486 = scalar_lea.vmem %s0, %s485
    %v487 = vld [vmem:[%s486] sm:%s4]
    %s488 = scalar_lea.vmem [#allocation0], 1528
    %489 = vst [vmem:[%s488] sm:%s4] %v487
    %s490 = smul.addr 2, 190
    %s491 = scalar_lea.vmem %s0, %s490
    %v492 = vld [vmem:[%s491] sm:%s4]
    %s493 = scalar_lea.vmem [#allocation0], 1520
    %494 = vst [vmem:[%s493] sm:%s4] %v492
    %s495 = smul.addr 2, 189
    %s496 = scalar_lea.vmem %s0, %s495
    %v497 = vld [vmem:[%s496] sm:%s4]
    %s498 = scalar_lea.vmem [#allocation0], 1512
    %499 = vst [vmem:[%s498] sm:%s4] %v497
    %s500 = smul.addr 2, 188
    %s501 = scalar_lea.vmem %s0, %s500
    %v502 = vld [vmem:[%s501] sm:%s4]
    %s503 = scalar_lea.vmem [#allocation0], 1504
    %504 = vst [vmem:[%s503] sm:%s4] %v502
    %s505 = smul.addr 2, 187
    %s506 = scalar_lea.vmem %s0, %s505
    %v507 = vld [vmem:[%s506] sm:%s4]
    %s508 = scalar_lea.vmem [#allocation0], 1496
    %509 = vst [vmem:[%s508] sm:%s4] %v507
    %s510 = smul.addr 2, 186
    %s511 = scalar_lea.vmem %s0, %s510
    %v512 = vld [vmem:[%s511] sm:%s4]
    %s513 = scalar_lea.vmem [#allocation0], 1488
    %514 = vst [vmem:[%s513] sm:%s4] %v512
    %s515 = smul.addr 2, 185
    %s516 = scalar_lea.vmem %s0, %s515
    %v517 = vld [vmem:[%s516] sm:%s4]
    %s518 = scalar_lea.vmem [#allocation0], 1480
    %519 = vst [vmem:[%s518] sm:%s4] %v517
    %s520 = smul.addr 2, 184
    %s521 = scalar_lea.vmem %s0, %s520
    %v522 = vld [vmem:[%s521] sm:%s4]
    %s523 = scalar_lea.vmem [#allocation0], 1472
    %524 = vst [vmem:[%s523] sm:%s4] %v522
    %s525 = smul.addr 2, 183
    %s526 = scalar_lea.vmem %s0, %s525
    %v527 = vld [vmem:[%s526] sm:%s4]
    %s528 = scalar_lea.vmem [#allocation0], 1464
    %529 = vst [vmem:[%s528] sm:%s4] %v527
    %s530 = smul.addr 2, 182
    %s531 = scalar_lea.vmem %s0, %s530
    %v532 = vld [vmem:[%s531] sm:%s4]
    %s533 = scalar_lea.vmem [#allocation0], 1456
    %534 = vst [vmem:[%s533] sm:%s4] %v532
    %s535 = smul.addr 2, 181
    %s536 = scalar_lea.vmem %s0, %s535
    %v537 = vld [vmem:[%s536] sm:%s4]
    %s538 = scalar_lea.vmem [#allocation0], 1448
    %539 = vst [vmem:[%s538] sm:%s4] %v537
    %s540 = smul.addr 2, 180
    %s541 = scalar_lea.vmem %s0, %s540
    %v542 = vld [vmem:[%s541] sm:%s4]
    %s543 = scalar_lea.vmem [#allocation0], 1440
    %544 = vst [vmem:[%s543] sm:%s4] %v542
    %s545 = smul.addr 2, 179
    %s546 = scalar_lea.vmem %s0, %s545
    %v547 = vld [vmem:[%s546] sm:%s4]
    %s548 = scalar_lea.vmem [#allocation0], 1432
    %549 = vst [vmem:[%s548] sm:%s4] %v547
    %s550 = smul.addr 2, 178
    %s551 = scalar_lea.vmem %s0, %s550
    %v552 = vld [vmem:[%s551] sm:%s4]
    %s553 = scalar_lea.vmem [#allocation0], 1424
    %554 = vst [vmem:[%s553] sm:%s4] %v552
    %s555 = smul.addr 2, 177
    %s556 = scalar_lea.vmem %s0, %s555
    %v557 = vld [vmem:[%s556] sm:%s4]
    %s558 = scalar_lea.vmem [#allocation0], 1416
    %559 = vst [vmem:[%s558] sm:%s4] %v557
    %s560 = smul.addr 2, 176
    %s561 = scalar_lea.vmem %s0, %s560
    %v562 = vld [vmem:[%s561] sm:%s4]
    %s563 = scalar_lea.vmem [#allocation0], 1408
    %564 = vst [vmem:[%s563] sm:%s4] %v562
    %s565 = smul.addr 2, 175
    %s566 = scalar_lea.vmem %s0, %s565
    %v567 = vld [vmem:[%s566] sm:%s4]
    %s568 = scalar_lea.vmem [#allocation0], 1400
    %569 = vst [vmem:[%s568] sm:%s4] %v567
    %s570 = smul.addr 2, 174
    %s571 = scalar_lea.vmem %s0, %s570
    %v572 = vld [vmem:[%s571] sm:%s4]
    %s573 = scalar_lea.vmem [#allocation0], 1392
    %574 = vst [vmem:[%s573] sm:%s4] %v572
    %s575 = smul.addr 2, 173
    %s576 = scalar_lea.vmem %s0, %s575
    %v577 = vld [vmem:[%s576] sm:%s4]
    %s578 = scalar_lea.vmem [#allocation0], 1384
    %579 = vst [vmem:[%s578] sm:%s4] %v577
    %s580 = smul.addr 2, 172
    %s581 = scalar_lea.vmem %s0, %s580
    %v582 = vld [vmem:[%s581] sm:%s4]
    %s583 = scalar_lea.vmem [#allocation0], 1376
    %584 = vst [vmem:[%s583] sm:%s4] %v582
    %s585 = smul.addr 2, 171
    %s586 = scalar_lea.vmem %s0, %s585
    %v587 = vld [vmem:[%s586] sm:%s4]
    %s588 = scalar_lea.vmem [#allocation0], 1368
    %589 = vst [vmem:[%s588] sm:%s4] %v587
    %s590 = smul.addr 2, 170
    %s591 = scalar_lea.vmem %s0, %s590
    %v592 = vld [vmem:[%s591] sm:%s4]
    %s593 = scalar_lea.vmem [#allocation0], 1360
    %594 = vst [vmem:[%s593] sm:%s4] %v592
    %s595 = smul.addr 2, 169
    %s596 = scalar_lea.vmem %s0, %s595
    %v597 = vld [vmem:[%s596] sm:%s4]
    %s598 = scalar_lea.vmem [#allocation0], 1352
    %599 = vst [vmem:[%s598] sm:%s4] %v597
    %s600 = smul.addr 2, 168
    %s601 = scalar_lea.vmem %s0, %s600
    %v602 = vld [vmem:[%s601] sm:%s4]
    %s603 = scalar_lea.vmem [#allocation0], 1344
    %604 = vst [vmem:[%s603] sm:%s4] %v602
    %s605 = smul.addr 2, 167
    %s606 = scalar_lea.vmem %s0, %s605
    %v607 = vld [vmem:[%s606] sm:%s4]
    %s608 = scalar_lea.vmem [#allocation0], 1336
    %609 = vst [vmem:[%s608] sm:%s4] %v607
    %s610 = smul.addr 2, 166
    %s611 = scalar_lea.vmem %s0, %s610
    %v612 = vld [vmem:[%s611] sm:%s4]
    %s613 = scalar_lea.vmem [#allocation0], 1328
    %614 = vst [vmem:[%s613] sm:%s4] %v612
    %s615 = smul.addr 2, 165
    %s616 = scalar_lea.vmem %s0, %s615
    %v617 = vld [vmem:[%s616] sm:%s4]
    %s618 = scalar_lea.vmem [#allocation0], 1320
    %619 = vst [vmem:[%s618] sm:%s4] %v617
    %s620 = smul.addr 2, 164
    %s621 = scalar_lea.vmem %s0, %s620
    %v622 = vld [vmem:[%s621] sm:%s4]
    %s623 = scalar_lea.vmem [#allocation0], 1312
    %624 = vst [vmem:[%s623] sm:%s4] %v622
    %s625 = smul.addr 2, 163
    %s626 = scalar_lea.vmem %s0, %s625
    %v627 = vld [vmem:[%s626] sm:%s4]
    %s628 = scalar_lea.vmem [#allocation0], 1304
    %629 = vst [vmem:[%s628] sm:%s4] %v627
    %s630 = smul.addr 2, 162
    %s631 = scalar_lea.vmem %s0, %s630
    %v632 = vld [vmem:[%s631] sm:%s4]
    %s633 = scalar_lea.vmem [#allocation0], 1296
    %634 = vst [vmem:[%s633] sm:%s4] %v632
    %s635 = smul.addr 2, 161
    %s636 = scalar_lea.vmem %s0, %s635
    %v637 = vld [vmem:[%s636] sm:%s4]
    %s638 = scalar_lea.vmem [#allocation0], 1288
    %639 = vst [vmem:[%s638] sm:%s4] %v637
    %s640 = smul.addr 2, 160
    %s641 = scalar_lea.vmem %s0, %s640
    %v642 = vld [vmem:[%s641] sm:%s4]
    %s643 = scalar_lea.vmem [#allocation0], 1280
    %644 = vst [vmem:[%s643] sm:%s4] %v642
    %s645 = smul.addr 2, 159
    %s646 = scalar_lea.vmem %s0, %s645
    %v647 = vld [vmem:[%s646] sm:%s4]
    %s648 = scalar_lea.vmem [#allocation0], 1272
    %649 = vst [vmem:[%s648] sm:%s4] %v647
    %s650 = smul.addr 2, 158
    %s651 = scalar_lea.vmem %s0, %s650
    %v652 = vld [vmem:[%s651] sm:%s4]
    %s653 = scalar_lea.vmem [#allocation0], 1264
    %654 = vst [vmem:[%s653] sm:%s4] %v652
    %s655 = smul.addr 2, 157
    %s656 = scalar_lea.vmem %s0, %s655
    %v657 = vld [vmem:[%s656] sm:%s4]
    %s658 = scalar_lea.vmem [#allocation0], 1256
    %659 = vst [vmem:[%s658] sm:%s4] %v657
    %s660 = smul.addr 2, 156
    %s661 = scalar_lea.vmem %s0, %s660
    %v662 = vld [vmem:[%s661] sm:%s4]
    %s663 = scalar_lea.vmem [#allocation0], 1248
    %664 = vst [vmem:[%s663] sm:%s4] %v662
    %s665 = smul.addr 2, 155
    %s666 = scalar_lea.vmem %s0, %s665
    %v667 = vld [vmem:[%s666] sm:%s4]
    %s668 = scalar_lea.vmem [#allocation0], 1240
    %669 = vst [vmem:[%s668] sm:%s4] %v667
    %s670 = smul.addr 2, 154
    %s671 = scalar_lea.vmem %s0, %s670
    %v672 = vld [vmem:[%s671] sm:%s4]
    %s673 = scalar_lea.vmem [#allocation0], 1232
    %674 = vst [vmem:[%s673] sm:%s4] %v672
    %s675 = smul.addr 2, 153
    %s676 = scalar_lea.vmem %s0, %s675
    %v677 = vld [vmem:[%s676] sm:%s4]
    %s678 = scalar_lea.vmem [#allocation0], 1224
    %679 = vst [vmem:[%s678] sm:%s4] %v677
    %s680 = smul.addr 2, 152
    %s681 = scalar_lea.vmem %s0, %s680
    %v682 = vld [vmem:[%s681] sm:%s4]
    %s683 = scalar_lea.vmem [#allocation0], 1216
    %684 = vst [vmem:[%s683] sm:%s4] %v682
    %s685 = smul.addr 2, 151
    %s686 = scalar_lea.vmem %s0, %s685
    %v687 = vld [vmem:[%s686] sm:%s4]
    %s688 = scalar_lea.vmem [#allocation0], 1208
    %689 = vst [vmem:[%s688] sm:%s4] %v687
    %s690 = smul.addr 2, 150
    %s691 = scalar_lea.vmem %s0, %s690
    %v692 = vld [vmem:[%s691] sm:%s4]
    %s693 = scalar_lea.vmem [#allocation0], 1200
    %694 = vst [vmem:[%s693] sm:%s4] %v692
    %s695 = smul.addr 2, 149
    %s696 = scalar_lea.vmem %s0, %s695
    %v697 = vld [vmem:[%s696] sm:%s4]
    %s698 = scalar_lea.vmem [#allocation0], 1192
    %699 = vst [vmem:[%s698] sm:%s4] %v697
    %s700 = smul.addr 2, 148
    %s701 = scalar_lea.vmem %s0, %s700
    %v702 = vld [vmem:[%s701] sm:%s4]
    %s703 = scalar_lea.vmem [#allocation0], 1184
    %704 = vst [vmem:[%s703] sm:%s4] %v702
    %s705 = smul.addr 2, 147
    %s706 = scalar_lea.vmem %s0, %s705
    %v707 = vld [vmem:[%s706] sm:%s4]
    %s708 = scalar_lea.vmem [#allocation0], 1176
    %709 = vst [vmem:[%s708] sm:%s4] %v707
    %s710 = smul.addr 2, 146
    %s711 = scalar_lea.vmem %s0, %s710
    %v712 = vld [vmem:[%s711] sm:%s4]
    %s713 = scalar_lea.vmem [#allocation0], 1168
    %714 = vst [vmem:[%s713] sm:%s4] %v712
    %s715 = smul.addr 2, 145
    %s716 = scalar_lea.vmem %s0, %s715
    %v717 = vld [vmem:[%s716] sm:%s4]
    %s718 = scalar_lea.vmem [#allocation0], 1160
    %719 = vst [vmem:[%s718] sm:%s4] %v717
    %s720 = smul.addr 2, 144
    %s721 = scalar_lea.vmem %s0, %s720
    %v722 = vld [vmem:[%s721] sm:%s4]
    %s723 = scalar_lea.vmem [#allocation0], 1152
    %724 = vst [vmem:[%s723] sm:%s4] %v722
    %s725 = smul.addr 2, 143
    %s726 = scalar_lea.vmem %s0, %s725
    %v727 = vld [vmem:[%s726] sm:%s4]
    %s728 = scalar_lea.vmem [#allocation0], 1144
    %729 = vst [vmem:[%s728] sm:%s4] %v727
    %s730 = smul.addr 2, 142
    %s731 = scalar_lea.vmem %s0, %s730
    %v732 = vld [vmem:[%s731] sm:%s4]
    %s733 = scalar_lea.vmem [#allocation0], 1136
    %734 = vst [vmem:[%s733] sm:%s4] %v732
    %s735 = smul.addr 2, 141
    %s736 = scalar_lea.vmem %s0, %s735
    %v737 = vld [vmem:[%s736] sm:%s4]
    %s738 = scalar_lea.vmem [#allocation0], 1128
    %739 = vst [vmem:[%s738] sm:%s4] %v737
    %s740 = smul.addr 2, 140
    %s741 = scalar_lea.vmem %s0, %s740
    %v742 = vld [vmem:[%s741] sm:%s4]
    %s743 = scalar_lea.vmem [#allocation0], 1120
    %744 = vst [vmem:[%s743] sm:%s4] %v742
    %s745 = smul.addr 2, 139
    %s746 = scalar_lea.vmem %s0, %s745
    %v747 = vld [vmem:[%s746] sm:%s4]
    %s748 = scalar_lea.vmem [#allocation0], 1112
    %749 = vst [vmem:[%s748] sm:%s4] %v747
    %s750 = smul.addr 2, 138
    %s751 = scalar_lea.vmem %s0, %s750
    %v752 = vld [vmem:[%s751] sm:%s4]
    %s753 = scalar_lea.vmem [#allocation0], 1104
    %754 = vst [vmem:[%s753] sm:%s4] %v752
    %s755 = smul.addr 2, 137
    %s756 = scalar_lea.vmem %s0, %s755
    %v757 = vld [vmem:[%s756] sm:%s4]
    %s758 = scalar_lea.vmem [#allocation0], 1096
    %759 = vst [vmem:[%s758] sm:%s4] %v757
    %s760 = smul.addr 2, 136
    %s761 = scalar_lea.vmem %s0, %s760
    %v762 = vld [vmem:[%s761] sm:%s4]
    %s763 = scalar_lea.vmem [#allocation0], 1088
    %764 = vst [vmem:[%s763] sm:%s4] %v762
    %s765 = smul.addr 2, 135
    %s766 = scalar_lea.vmem %s0, %s765
    %v767 = vld [vmem:[%s766] sm:%s4]
    %s768 = scalar_lea.vmem [#allocation0], 1080
    %769 = vst [vmem:[%s768] sm:%s4] %v767
    %s770 = smul.addr 2, 134
    %s771 = scalar_lea.vmem %s0, %s770
    %v772 = vld [vmem:[%s771] sm:%s4]
    %s773 = scalar_lea.vmem [#allocation0], 1072
    %774 = vst [vmem:[%s773] sm:%s4] %v772
    %s775 = smul.addr 2, 133
    %s776 = scalar_lea.vmem %s0, %s775
    %v777 = vld [vmem:[%s776] sm:%s4]
    %s778 = scalar_lea.vmem [#allocation0], 1064
    %779 = vst [vmem:[%s778] sm:%s4] %v777
    %s780 = smul.addr 2, 132
    %s781 = scalar_lea.vmem %s0, %s780
    %v782 = vld [vmem:[%s781] sm:%s4]
    %s783 = scalar_lea.vmem [#allocation0], 1056
    %784 = vst [vmem:[%s783] sm:%s4] %v782
    %s785 = smul.addr 2, 131
    %s786 = scalar_lea.vmem %s0, %s785
    %v787 = vld [vmem:[%s786] sm:%s4]
    %s788 = scalar_lea.vmem [#allocation0], 1048
    %789 = vst [vmem:[%s788] sm:%s4] %v787
    %s790 = smul.addr 2, 130
    %s791 = scalar_lea.vmem %s0, %s790
    %v792 = vld [vmem:[%s791] sm:%s4]
    %s793 = scalar_lea.vmem [#allocation0], 1040
    %794 = vst [vmem:[%s793] sm:%s4] %v792
    %s795 = smul.addr 2, 129
    %s796 = scalar_lea.vmem %s0, %s795
    %v797 = vld [vmem:[%s796] sm:%s4]
    %s798 = scalar_lea.vmem [#allocation0], 1032
    %799 = vst [vmem:[%s798] sm:%s4] %v797
    %s800 = smul.addr 2, 128
    %s801 = scalar_lea.vmem %s0, %s800
    %v802 = vld [vmem:[%s801] sm:%s4]
    %s803 = scalar_lea.vmem [#allocation0], 1024
    %804 = vst [vmem:[%s803] sm:%s4] %v802
    %s805 = smul.addr 2, 127
    %s806 = scalar_lea.vmem %s0, %s805
    %v807 = vld [vmem:[%s806] sm:%s4]
    %s808 = scalar_lea.vmem [#allocation0], 1016
    %809 = vst [vmem:[%s808] sm:%s4] %v807
    %s810 = smul.addr 2, 126
    %s811 = scalar_lea.vmem %s0, %s810
    %v812 = vld [vmem:[%s811] sm:%s4]
    %s813 = scalar_lea.vmem [#allocation0], 1008
    %814 = vst [vmem:[%s813] sm:%s4] %v812
    %s815 = smul.addr 2, 125
    %s816 = scalar_lea.vmem %s0, %s815
    %v817 = vld [vmem:[%s816] sm:%s4]
    %s818 = scalar_lea.vmem [#allocation0], 1000
    %819 = vst [vmem:[%s818] sm:%s4] %v817
    %s820 = smul.addr 2, 124
    %s821 = scalar_lea.vmem %s0, %s820
    %v822 = vld [vmem:[%s821] sm:%s4]
    %s823 = scalar_lea.vmem [#allocation0], 992
    %824 = vst [vmem:[%s823] sm:%s4] %v822
    %s825 = smul.addr 2, 123
    %s826 = scalar_lea.vmem %s0, %s825
    %v827 = vld [vmem:[%s826] sm:%s4]
    %s828 = scalar_lea.vmem [#allocation0], 984
    %829 = vst [vmem:[%s828] sm:%s4] %v827
    %s830 = smul.addr 2, 122
    %s831 = scalar_lea.vmem %s0, %s830
    %v832 = vld [vmem:[%s831] sm:%s4]
    %s833 = scalar_lea.vmem [#allocation0], 976
    %834 = vst [vmem:[%s833] sm:%s4] %v832
    %s835 = smul.addr 2, 121
    %s836 = scalar_lea.vmem %s0, %s835
    %v837 = vld [vmem:[%s836] sm:%s4]
    %s838 = scalar_lea.vmem [#allocation0], 968
    %839 = vst [vmem:[%s838] sm:%s4] %v837
    %s840 = smul.addr 2, 120
    %s841 = scalar_lea.vmem %s0, %s840
    %v842 = vld [vmem:[%s841] sm:%s4]
    %s843 = scalar_lea.vmem [#allocation0], 960
    %844 = vst [vmem:[%s843] sm:%s4] %v842
    %s845 = smul.addr 2, 119
    %s846 = scalar_lea.vmem %s0, %s845
    %v847 = vld [vmem:[%s846] sm:%s4]
    %s848 = scalar_lea.vmem [#allocation0], 952
    %849 = vst [vmem:[%s848] sm:%s4] %v847
    %s850 = smul.addr 2, 118
    %s851 = scalar_lea.vmem %s0, %s850
    %v852 = vld [vmem:[%s851] sm:%s4]
    %s853 = scalar_lea.vmem [#allocation0], 944
    %854 = vst [vmem:[%s853] sm:%s4] %v852
    %s855 = smul.addr 2, 117
    %s856 = scalar_lea.vmem %s0, %s855
    %v857 = vld [vmem:[%s856] sm:%s4]
    %s858 = scalar_lea.vmem [#allocation0], 936
    %859 = vst [vmem:[%s858] sm:%s4] %v857
    %s860 = smul.addr 2, 116
    %s861 = scalar_lea.vmem %s0, %s860
    %v862 = vld [vmem:[%s861] sm:%s4]
    %s863 = scalar_lea.vmem [#allocation0], 928
    %864 = vst [vmem:[%s863] sm:%s4] %v862
    %s865 = smul.addr 2, 115
    %s866 = scalar_lea.vmem %s0, %s865
    %v867 = vld [vmem:[%s866] sm:%s4]
    %s868 = scalar_lea.vmem [#allocation0], 920
    %869 = vst [vmem:[%s868] sm:%s4] %v867
    %s870 = smul.addr 2, 114
    %s871 = scalar_lea.vmem %s0, %s870
    %v872 = vld [vmem:[%s871] sm:%s4]
    %s873 = scalar_lea.vmem [#allocation0], 912
    %874 = vst [vmem:[%s873] sm:%s4] %v872
    %s875 = smul.addr 2, 113
    %s876 = scalar_lea.vmem %s0, %s875
    %v877 = vld [vmem:[%s876] sm:%s4]
    %s878 = scalar_lea.vmem [#allocation0], 904
    %879 = vst [vmem:[%s878] sm:%s4] %v877
    %s880 = smul.addr 2, 112
    %s881 = scalar_lea.vmem %s0, %s880
    %v882 = vld [vmem:[%s881] sm:%s4]
    %s883 = scalar_lea.vmem [#allocation0], 896
    %884 = vst [vmem:[%s883] sm:%s4] %v882
    %s885 = smul.addr 2, 111
    %s886 = scalar_lea.vmem %s0, %s885
    %v887 = vld [vmem:[%s886] sm:%s4]
    %s888 = scalar_lea.vmem [#allocation0], 888
    %889 = vst [vmem:[%s888] sm:%s4] %v887
    %s890 = smul.addr 2, 110
    %s891 = scalar_lea.vmem %s0, %s890
    %v892 = vld [vmem:[%s891] sm:%s4]
    %s893 = scalar_lea.vmem [#allocation0], 880
    %894 = vst [vmem:[%s893] sm:%s4] %v892
    %s895 = smul.addr 2, 109
    %s896 = scalar_lea.vmem %s0, %s895
    %v897 = vld [vmem:[%s896] sm:%s4]
    %s898 = scalar_lea.vmem [#allocation0], 872
    %899 = vst [vmem:[%s898] sm:%s4] %v897
    %s900 = smul.addr 2, 108
    %s901 = scalar_lea.vmem %s0, %s900
    %v902 = vld [vmem:[%s901] sm:%s4]
    %s903 = scalar_lea.vmem [#allocation0], 864
    %904 = vst [vmem:[%s903] sm:%s4] %v902
    %s905 = smul.addr 2, 107
    %s906 = scalar_lea.vmem %s0, %s905
    %v907 = vld [vmem:[%s906] sm:%s4]
    %s908 = scalar_lea.vmem [#allocation0], 856
    %909 = vst [vmem:[%s908] sm:%s4] %v907
    %s910 = smul.addr 2, 106
    %s911 = scalar_lea.vmem %s0, %s910
    %v912 = vld [vmem:[%s911] sm:%s4]
    %s913 = scalar_lea.vmem [#allocation0], 848
    %914 = vst [vmem:[%s913] sm:%s4] %v912
    %s915 = smul.addr 2, 105
    %s916 = scalar_lea.vmem %s0, %s915
    %v917 = vld [vmem:[%s916] sm:%s4]
    %s918 = scalar_lea.vmem [#allocation0], 840
    %919 = vst [vmem:[%s918] sm:%s4] %v917
    %s920 = smul.addr 2, 104
    %s921 = scalar_lea.vmem %s0, %s920
    %v922 = vld [vmem:[%s921] sm:%s4]
    %s923 = scalar_lea.vmem [#allocation0], 832
    %924 = vst [vmem:[%s923] sm:%s4] %v922
    %s925 = smul.addr 2, 103
    %s926 = scalar_lea.vmem %s0, %s925
    %v927 = vld [vmem:[%s926] sm:%s4]
    %s928 = scalar_lea.vmem [#allocation0], 824
    %929 = vst [vmem:[%s928] sm:%s4] %v927
    %s930 = smul.addr 2, 102
    %s931 = scalar_lea.vmem %s0, %s930
    %v932 = vld [vmem:[%s931] sm:%s4]
    %s933 = scalar_lea.vmem [#allocation0], 816
    %934 = vst [vmem:[%s933] sm:%s4] %v932
    %s935 = smul.addr 2, 101
    %s936 = scalar_lea.vmem %s0, %s935
    %v937 = vld [vmem:[%s936] sm:%s4]
    %s938 = scalar_lea.vmem [#allocation0], 808
    %939 = vst [vmem:[%s938] sm:%s4] %v937
    %s940 = smul.addr 2, 100
    %s941 = scalar_lea.vmem %s0, %s940
    %v942 = vld [vmem:[%s941] sm:%s4]
    %s943 = scalar_lea.vmem [#allocation0], 800
    %944 = vst [vmem:[%s943] sm:%s4] %v942
    %s945 = smul.addr 2, 99
    %s946 = scalar_lea.vmem %s0, %s945
    %v947 = vld [vmem:[%s946] sm:%s4]
    %s948 = scalar_lea.vmem [#allocation0], 792
    %949 = vst [vmem:[%s948] sm:%s4] %v947
    %s950 = smul.addr 2, 98
    %s951 = scalar_lea.vmem %s0, %s950
    %v952 = vld [vmem:[%s951] sm:%s4]
    %s953 = scalar_lea.vmem [#allocation0], 784
    %954 = vst [vmem:[%s953] sm:%s4] %v952
    %s955 = smul.addr 2, 97
    %s956 = scalar_lea.vmem %s0, %s955
    %v957 = vld [vmem:[%s956] sm:%s4]
    %s958 = scalar_lea.vmem [#allocation0], 776
    %959 = vst [vmem:[%s958] sm:%s4] %v957
    %s960 = smul.addr 2, 96
    %s961 = scalar_lea.vmem %s0, %s960
    %v962 = vld [vmem:[%s961] sm:%s4]
    %s963 = scalar_lea.vmem [#allocation0], 768
    %964 = vst [vmem:[%s963] sm:%s4] %v962
    %s965 = smul.addr 2, 95
    %s966 = scalar_lea.vmem %s0, %s965
    %v967 = vld [vmem:[%s966] sm:%s4]
    %s968 = scalar_lea.vmem [#allocation0], 760
    %969 = vst [vmem:[%s968] sm:%s4] %v967
    %s970 = smul.addr 2, 94
    %s971 = scalar_lea.vmem %s0, %s970
    %v972 = vld [vmem:[%s971] sm:%s4]
    %s973 = scalar_lea.vmem [#allocation0], 752
    %974 = vst [vmem:[%s973] sm:%s4] %v972
    %s975 = smul.addr 2, 93
    %s976 = scalar_lea.vmem %s0, %s975
    %v977 = vld [vmem:[%s976] sm:%s4]
    %s978 = scalar_lea.vmem [#allocation0], 744
    %979 = vst [vmem:[%s978] sm:%s4] %v977
    %s980 = smul.addr 2, 92
    %s981 = scalar_lea.vmem %s0, %s980
    %v982 = vld [vmem:[%s981] sm:%s4]
    %s983 = scalar_lea.vmem [#allocation0], 736
    %984 = vst [vmem:[%s983] sm:%s4] %v982
    %s985 = smul.addr 2, 91
    %s986 = scalar_lea.vmem %s0, %s985
    %v987 = vld [vmem:[%s986] sm:%s4]
    %s988 = scalar_lea.vmem [#allocation0], 728
    %989 = vst [vmem:[%s988] sm:%s4] %v987
    %s990 = smul.addr 2, 90
    %s991 = scalar_lea.vmem %s0, %s990
    %v992 = vld [vmem:[%s991] sm:%s4]
    %s993 = scalar_lea.vmem [#allocation0], 720
    %994 = vst [vmem:[%s993] sm:%s4] %v992
    %s995 = smul.addr 2, 89
    %s996 = scalar_lea.vmem %s0, %s995
    %v997 = vld [vmem:[%s996] sm:%s4]
    %s998 = scalar_lea.vmem [#allocation0], 712
    %999 = vst [vmem:[%s998] sm:%s4] %v997
    %s1000 = smul.addr 2, 88
    %s1001 = scalar_lea.vmem %s0, %s1000
    %v1002 = vld [vmem:[%s1001] sm:%s4]
    %s1003 = scalar_lea.vmem [#allocation0], 704
    %1004 = vst [vmem:[%s1003] sm:%s4] %v1002
    %s1005 = smul.addr 2, 87
    %s1006 = scalar_lea.vmem %s0, %s1005
    %v1007 = vld [vmem:[%s1006] sm:%s4]
    %s1008 = scalar_lea.vmem [#allocation0], 696
    %1009 = vst [vmem:[%s1008] sm:%s4] %v1007
    %s1010 = smul.addr 2, 86
    %s1011 = scalar_lea.vmem %s0, %s1010
    %v1012 = vld [vmem:[%s1011] sm:%s4]
    %s1013 = scalar_lea.vmem [#allocation0], 688
    %1014 = vst [vmem:[%s1013] sm:%s4] %v1012
    %s1015 = smul.addr 2, 85
    %s1016 = scalar_lea.vmem %s0, %s1015
    %v1017 = vld [vmem:[%s1016] sm:%s4]
    %s1018 = scalar_lea.vmem [#allocation0], 680
    %1019 = vst [vmem:[%s1018] sm:%s4] %v1017
    %s1020 = smul.addr 2, 84
    %s1021 = scalar_lea.vmem %s0, %s1020
    %v1022 = vld [vmem:[%s1021] sm:%s4]
    %s1023 = scalar_lea.vmem [#allocation0], 672
    %1024 = vst [vmem:[%s1023] sm:%s4] %v1022
    %s1025 = smul.addr 2, 83
    %s1026 = scalar_lea.vmem %s0, %s1025
    %v1027 = vld [vmem:[%s1026] sm:%s4]
    %s1028 = scalar_lea.vmem [#allocation0], 664
    %1029 = vst [vmem:[%s1028] sm:%s4] %v1027
    %s1030 = smul.addr 2, 82
    %s1031 = scalar_lea.vmem %s0, %s1030
    %v1032 = vld [vmem:[%s1031] sm:%s4]
    %s1033 = scalar_lea.vmem [#allocation0], 656
    %1034 = vst [vmem:[%s1033] sm:%s4] %v1032
    %s1035 = smul.addr 2, 81
    %s1036 = scalar_lea.vmem %s0, %s1035
    %v1037 = vld [vmem:[%s1036] sm:%s4]
    %s1038 = scalar_lea.vmem [#allocation0], 648
    %1039 = vst [vmem:[%s1038] sm:%s4] %v1037
    %s1040 = smul.addr 2, 80
    %s1041 = scalar_lea.vmem %s0, %s1040
    %v1042 = vld [vmem:[%s1041] sm:%s4]
    %s1043 = scalar_lea.vmem [#allocation0], 640
    %1044 = vst [vmem:[%s1043] sm:%s4] %v1042
    %s1045 = smul.addr 2, 79
    %s1046 = scalar_lea.vmem %s0, %s1045
    %v1047 = vld [vmem:[%s1046] sm:%s4]
    %s1048 = scalar_lea.vmem [#allocation0], 632
    %1049 = vst [vmem:[%s1048] sm:%s4] %v1047
    %s1050 = smul.addr 2, 78
    %s1051 = scalar_lea.vmem %s0, %s1050
    %v1052 = vld [vmem:[%s1051] sm:%s4]
    %s1053 = scalar_lea.vmem [#allocation0], 624
    %1054 = vst [vmem:[%s1053] sm:%s4] %v1052
    %s1055 = smul.addr 2, 77
    %s1056 = scalar_lea.vmem %s0, %s1055
    %v1057 = vld [vmem:[%s1056] sm:%s4]
    %s1058 = scalar_lea.vmem [#allocation0], 616
    %1059 = vst [vmem:[%s1058] sm:%s4] %v1057
    %s1060 = smul.addr 2, 76
    %s1061 = scalar_lea.vmem %s0, %s1060
    %v1062 = vld [vmem:[%s1061] sm:%s4]
    %s1063 = scalar_lea.vmem [#allocation0], 608
    %1064 = vst [vmem:[%s1063] sm:%s4] %v1062
    %s1065 = smul.addr 2, 75
    %s1066 = scalar_lea.vmem %s0, %s1065
    %v1067 = vld [vmem:[%s1066] sm:%s4]
    %s1068 = scalar_lea.vmem [#allocation0], 600
    %1069 = vst [vmem:[%s1068] sm:%s4] %v1067
    %s1070 = smul.addr 2, 74
    %s1071 = scalar_lea.vmem %s0, %s1070
    %v1072 = vld [vmem:[%s1071] sm:%s4]
    %s1073 = scalar_lea.vmem [#allocation0], 592
    %1074 = vst [vmem:[%s1073] sm:%s4] %v1072
    %s1075 = smul.addr 2, 73
    %s1076 = scalar_lea.vmem %s0, %s1075
    %v1077 = vld [vmem:[%s1076] sm:%s4]
    %s1078 = scalar_lea.vmem [#allocation0], 584
    %1079 = vst [vmem:[%s1078] sm:%s4] %v1077
    %s1080 = smul.addr 2, 72
    %s1081 = scalar_lea.vmem %s0, %s1080
    %v1082 = vld [vmem:[%s1081] sm:%s4]
    %s1083 = scalar_lea.vmem [#allocation0], 576
    %1084 = vst [vmem:[%s1083] sm:%s4] %v1082
    %s1085 = smul.addr 2, 71
    %s1086 = scalar_lea.vmem %s0, %s1085
    %v1087 = vld [vmem:[%s1086] sm:%s4]
    %s1088 = scalar_lea.vmem [#allocation0], 568
    %1089 = vst [vmem:[%s1088] sm:%s4] %v1087
    %s1090 = smul.addr 2, 70
    %s1091 = scalar_lea.vmem %s0, %s1090
    %v1092 = vld [vmem:[%s1091] sm:%s4]
    %s1093 = scalar_lea.vmem [#allocation0], 560
    %1094 = vst [vmem:[%s1093] sm:%s4] %v1092
    %s1095 = smul.addr 2, 69
    %s1096 = scalar_lea.vmem %s0, %s1095
    %v1097 = vld [vmem:[%s1096] sm:%s4]
    %s1098 = scalar_lea.vmem [#allocation0], 552
    %1099 = vst [vmem:[%s1098] sm:%s4] %v1097
    %s1100 = smul.addr 2, 68
    %s1101 = scalar_lea.vmem %s0, %s1100
    %v1102 = vld [vmem:[%s1101] sm:%s4]
    %s1103 = scalar_lea.vmem [#allocation0], 544
    %1104 = vst [vmem:[%s1103] sm:%s4] %v1102
    %s1105 = smul.addr 2, 67
    %s1106 = scalar_lea.vmem %s0, %s1105
    %v1107 = vld [vmem:[%s1106] sm:%s4]
    %s1108 = scalar_lea.vmem [#allocation0], 536
    %1109 = vst [vmem:[%s1108] sm:%s4] %v1107
    %s1110 = smul.addr 2, 66
    %s1111 = scalar_lea.vmem %s0, %s1110
    %v1112 = vld [vmem:[%s1111] sm:%s4]
    %s1113 = scalar_lea.vmem [#allocation0], 528
    %1114 = vst [vmem:[%s1113] sm:%s4] %v1112
    %s1115 = smul.addr 2, 65
    %s1116 = scalar_lea.vmem %s0, %s1115
    %v1117 = vld [vmem:[%s1116] sm:%s4]
    %s1118 = scalar_lea.vmem [#allocation0], 520
    %1119 = vst [vmem:[%s1118] sm:%s4] %v1117
    %s1120 = smul.addr 2, 64
    %s1121 = scalar_lea.vmem %s0, %s1120
    %v1122 = vld [vmem:[%s1121] sm:%s4]
    %s1123 = scalar_lea.vmem [#allocation0], 512
    %1124 = vst [vmem:[%s1123] sm:%s4] %v1122
    %s1125 = smul.addr 2, 63
    %s1126 = scalar_lea.vmem %s0, %s1125
    %v1127 = vld [vmem:[%s1126] sm:%s4]
    %s1128 = scalar_lea.vmem [#allocation0], 504
    %1129 = vst [vmem:[%s1128] sm:%s4] %v1127
    %s1130 = smul.addr 2, 62
    %s1131 = scalar_lea.vmem %s0, %s1130
    %v1132 = vld [vmem:[%s1131] sm:%s4]
    %s1133 = scalar_lea.vmem [#allocation0], 496
    %1134 = vst [vmem:[%s1133] sm:%s4] %v1132
    %s1135 = smul.addr 2, 61
    %s1136 = scalar_lea.vmem %s0, %s1135
    %v1137 = vld [vmem:[%s1136] sm:%s4]
    %s1138 = scalar_lea.vmem [#allocation0], 488
    %1139 = vst [vmem:[%s1138] sm:%s4] %v1137
    %s1140 = smul.addr 2, 60
    %s1141 = scalar_lea.vmem %s0, %s1140
    %v1142 = vld [vmem:[%s1141] sm:%s4]
    %s1143 = scalar_lea.vmem [#allocation0], 480
    %1144 = vst [vmem:[%s1143] sm:%s4] %v1142
    %s1145 = smul.addr 2, 59
    %s1146 = scalar_lea.vmem %s0, %s1145
    %v1147 = vld [vmem:[%s1146] sm:%s4]
    %s1148 = scalar_lea.vmem [#allocation0], 472
    %1149 = vst [vmem:[%s1148] sm:%s4] %v1147
    %s1150 = smul.addr 2, 58
    %s1151 = scalar_lea.vmem %s0, %s1150
    %v1152 = vld [vmem:[%s1151] sm:%s4]
    %s1153 = scalar_lea.vmem [#allocation0], 464
    %1154 = vst [vmem:[%s1153] sm:%s4] %v1152
    %s1155 = smul.addr 2, 57
    %s1156 = scalar_lea.vmem %s0, %s1155
    %v1157 = vld [vmem:[%s1156] sm:%s4]
    %s1158 = scalar_lea.vmem [#allocation0], 456
    %1159 = vst [vmem:[%s1158] sm:%s4] %v1157
    %s1160 = smul.addr 2, 56
    %s1161 = scalar_lea.vmem %s0, %s1160
    %v1162 = vld [vmem:[%s1161] sm:%s4]
    %s1163 = scalar_lea.vmem [#allocation0], 448
    %1164 = vst [vmem:[%s1163] sm:%s4] %v1162
    %s1165 = smul.addr 2, 55
    %s1166 = scalar_lea.vmem %s0, %s1165
    %v1167 = vld [vmem:[%s1166] sm:%s4]
    %s1168 = scalar_lea.vmem [#allocation0], 440
    %1169 = vst [vmem:[%s1168] sm:%s4] %v1167
    %s1170 = smul.addr 2, 54
    %s1171 = scalar_lea.vmem %s0, %s1170
    %v1172 = vld [vmem:[%s1171] sm:%s4]
    %s1173 = scalar_lea.vmem [#allocation0], 432
    %1174 = vst [vmem:[%s1173] sm:%s4] %v1172
    %s1175 = smul.addr 2, 53
    %s1176 = scalar_lea.vmem %s0, %s1175
    %v1177 = vld [vmem:[%s1176] sm:%s4]
    %s1178 = scalar_lea.vmem [#allocation0], 424
    %1179 = vst [vmem:[%s1178] sm:%s4] %v1177
    %s1180 = smul.addr 2, 52
    %s1181 = scalar_lea.vmem %s0, %s1180
    %v1182 = vld [vmem:[%s1181] sm:%s4]
    %s1183 = scalar_lea.vmem [#allocation0], 416
    %1184 = vst [vmem:[%s1183] sm:%s4] %v1182
    %s1185 = smul.addr 2, 51
    %s1186 = scalar_lea.vmem %s0, %s1185
    %v1187 = vld [vmem:[%s1186] sm:%s4]
    %s1188 = scalar_lea.vmem [#allocation0], 408
    %1189 = vst [vmem:[%s1188] sm:%s4] %v1187
    %s1190 = smul.addr 2, 50
    %s1191 = scalar_lea.vmem %s0, %s1190
    %v1192 = vld [vmem:[%s1191] sm:%s4]
    %s1193 = scalar_lea.vmem [#allocation0], 400
    %1194 = vst [vmem:[%s1193] sm:%s4] %v1192
    %s1195 = smul.addr 2, 49
    %s1196 = scalar_lea.vmem %s0, %s1195
    %v1197 = vld [vmem:[%s1196] sm:%s4]
    %s1198 = scalar_lea.vmem [#allocation0], 392
    %1199 = vst [vmem:[%s1198] sm:%s4] %v1197
    %s1200 = smul.addr 2, 48
    %s1201 = scalar_lea.vmem %s0, %s1200
    %v1202 = vld [vmem:[%s1201] sm:%s4]
    %s1203 = scalar_lea.vmem [#allocation0], 384
    %1204 = vst [vmem:[%s1203] sm:%s4] %v1202
    %s1205 = smul.addr 2, 47
    %s1206 = scalar_lea.vmem %s0, %s1205
    %v1207 = vld [vmem:[%s1206] sm:%s4]
    %s1208 = scalar_lea.vmem [#allocation0], 376
    %1209 = vst [vmem:[%s1208] sm:%s4] %v1207
    %s1210 = smul.addr 2, 46
    %s1211 = scalar_lea.vmem %s0, %s1210
    %v1212 = vld [vmem:[%s1211] sm:%s4]
    %s1213 = scalar_lea.vmem [#allocation0], 368
    %1214 = vst [vmem:[%s1213] sm:%s4] %v1212
    %s1215 = smul.addr 2, 45
    %s1216 = scalar_lea.vmem %s0, %s1215
    %v1217 = vld [vmem:[%s1216] sm:%s4]
    %s1218 = scalar_lea.vmem [#allocation0], 360
    %1219 = vst [vmem:[%s1218] sm:%s4] %v1217
    %s1220 = smul.addr 2, 44
    %s1221 = scalar_lea.vmem %s0, %s1220
    %v1222 = vld [vmem:[%s1221] sm:%s4]
    %s1223 = scalar_lea.vmem [#allocation0], 352
    %1224 = vst [vmem:[%s1223] sm:%s4] %v1222
    %s1225 = smul.addr 2, 43
    %s1226 = scalar_lea.vmem %s0, %s1225
    %v1227 = vld [vmem:[%s1226] sm:%s4]
    %s1228 = scalar_lea.vmem [#allocation0], 344
    %1229 = vst [vmem:[%s1228] sm:%s4] %v1227
    %s1230 = smul.addr 2, 42
    %s1231 = scalar_lea.vmem %s0, %s1230
    %v1232 = vld [vmem:[%s1231] sm:%s4]
    %s1233 = scalar_lea.vmem [#allocation0], 336
    %1234 = vst [vmem:[%s1233] sm:%s4] %v1232
    %s1235 = smul.addr 2, 41
    %s1236 = scalar_lea.vmem %s0, %s1235
    %v1237 = vld [vmem:[%s1236] sm:%s4]
    %s1238 = scalar_lea.vmem [#allocation0], 328
    %1239 = vst [vmem:[%s1238] sm:%s4] %v1237
    %s1240 = smul.addr 2, 40
    %s1241 = scalar_lea.vmem %s0, %s1240
    %v1242 = vld [vmem:[%s1241] sm:%s4]
    %s1243 = scalar_lea.vmem [#allocation0], 320
    %1244 = vst [vmem:[%s1243] sm:%s4] %v1242
    %s1245 = smul.addr 2, 39
    %s1246 = scalar_lea.vmem %s0, %s1245
    %v1247 = vld [vmem:[%s1246] sm:%s4]
    %s1248 = scalar_lea.vmem [#allocation0], 312
    %1249 = vst [vmem:[%s1248] sm:%s4] %v1247
    %s1250 = smul.addr 2, 38
    %s1251 = scalar_lea.vmem %s0, %s1250
    %v1252 = vld [vmem:[%s1251] sm:%s4]
    %s1253 = scalar_lea.vmem [#allocation0], 304
    %1254 = vst [vmem:[%s1253] sm:%s4] %v1252
    %s1255 = smul.addr 2, 37
    %s1256 = scalar_lea.vmem %s0, %s1255
    %v1257 = vld [vmem:[%s1256] sm:%s4]
    %s1258 = scalar_lea.vmem [#allocation0], 296
    %1259 = vst [vmem:[%s1258] sm:%s4] %v1257
    %s1260 = smul.addr 2, 36
    %s1261 = scalar_lea.vmem %s0, %s1260
    %v1262 = vld [vmem:[%s1261] sm:%s4]
    %s1263 = scalar_lea.vmem [#allocation0], 288
    %1264 = vst [vmem:[%s1263] sm:%s4] %v1262
    %s1265 = smul.addr 2, 35
    %s1266 = scalar_lea.vmem %s0, %s1265
    %v1267 = vld [vmem:[%s1266] sm:%s4]
    %s1268 = scalar_lea.vmem [#allocation0], 280
    %1269 = vst [vmem:[%s1268] sm:%s4] %v1267
    %s1270 = smul.addr 2, 34
    %s1271 = scalar_lea.vmem %s0, %s1270
    %v1272 = vld [vmem:[%s1271] sm:%s4]
    %s1273 = scalar_lea.vmem [#allocation0], 272
    %1274 = vst [vmem:[%s1273] sm:%s4] %v1272
    %s1275 = smul.addr 2, 33
    %s1276 = scalar_lea.vmem %s0, %s1275
    %v1277 = vld [vmem:[%s1276] sm:%s4]
    %s1278 = scalar_lea.vmem [#allocation0], 264
    %1279 = vst [vmem:[%s1278] sm:%s4] %v1277
    %s1280 = smul.addr 2, 32
    %s1281 = scalar_lea.vmem %s0, %s1280
    %v1282 = vld [vmem:[%s1281] sm:%s4]
    %s1283 = scalar_lea.vmem [#allocation0], 256
    %1284 = vst [vmem:[%s1283] sm:%s4] %v1282
    %s1285 = smul.addr 2, 31
    %s1286 = scalar_lea.vmem %s0, %s1285
    %v1287 = vld [vmem:[%s1286] sm:%s4]
    %s1288 = scalar_lea.vmem [#allocation0], 248
    %1289 = vst [vmem:[%s1288] sm:%s4] %v1287
    %s1290 = smul.addr 2, 30
    %s1291 = scalar_lea.vmem %s0, %s1290
    %v1292 = vld [vmem:[%s1291] sm:%s4]
    %s1293 = scalar_lea.vmem [#allocation0], 240
    %1294 = vst [vmem:[%s1293] sm:%s4] %v1292
    %s1295 = smul.addr 2, 29
    %s1296 = scalar_lea.vmem %s0, %s1295
    %v1297 = vld [vmem:[%s1296] sm:%s4]
    %s1298 = scalar_lea.vmem [#allocation0], 232
    %1299 = vst [vmem:[%s1298] sm:%s4] %v1297
    %s1300 = smul.addr 2, 28
    %s1301 = scalar_lea.vmem %s0, %s1300
    %v1302 = vld [vmem:[%s1301] sm:%s4]
    %s1303 = scalar_lea.vmem [#allocation0], 224
    %1304 = vst [vmem:[%s1303] sm:%s4] %v1302
    %s1305 = smul.addr 2, 27
    %s1306 = scalar_lea.vmem %s0, %s1305
    %v1307 = vld [vmem:[%s1306] sm:%s4]
    %s1308 = scalar_lea.vmem [#allocation0], 216
    %1309 = vst [vmem:[%s1308] sm:%s4] %v1307
    %s1310 = smul.addr 2, 26
    %s1311 = scalar_lea.vmem %s0, %s1310
    %v1312 = vld [vmem:[%s1311] sm:%s4]
    %s1313 = scalar_lea.vmem [#allocation0], 208
    %1314 = vst [vmem:[%s1313] sm:%s4] %v1312
    %s1315 = smul.addr 2, 25
    %s1316 = scalar_lea.vmem %s0, %s1315
    %v1317 = vld [vmem:[%s1316] sm:%s4]
    %s1318 = scalar_lea.vmem [#allocation0], 200
    %1319 = vst [vmem:[%s1318] sm:%s4] %v1317
    %s1320 = smul.addr 2, 24
    %s1321 = scalar_lea.vmem %s0, %s1320
    %v1322 = vld [vmem:[%s1321] sm:%s4]
    %s1323 = scalar_lea.vmem [#allocation0], 192
    %1324 = vst [vmem:[%s1323] sm:%s4] %v1322
    %s1325 = smul.addr 2, 23
    %s1326 = scalar_lea.vmem %s0, %s1325
    %v1327 = vld [vmem:[%s1326] sm:%s4]
    %s1328 = scalar_lea.vmem [#allocation0], 184
    %1329 = vst [vmem:[%s1328] sm:%s4] %v1327
    %s1330 = smul.addr 2, 22
    %s1331 = scalar_lea.vmem %s0, %s1330
    %v1332 = vld [vmem:[%s1331] sm:%s4]
    %s1333 = scalar_lea.vmem [#allocation0], 176
    %1334 = vst [vmem:[%s1333] sm:%s4] %v1332
    %s1335 = smul.addr 2, 21
    %s1336 = scalar_lea.vmem %s0, %s1335
    %v1337 = vld [vmem:[%s1336] sm:%s4]
    %s1338 = scalar_lea.vmem [#allocation0], 168
    %1339 = vst [vmem:[%s1338] sm:%s4] %v1337
    %s1340 = smul.addr 2, 20
    %s1341 = scalar_lea.vmem %s0, %s1340
    %v1342 = vld [vmem:[%s1341] sm:%s4]
    %s1343 = scalar_lea.vmem [#allocation0], 160
    %1344 = vst [vmem:[%s1343] sm:%s4] %v1342
    %s1345 = smul.addr 2, 19
    %s1346 = scalar_lea.vmem %s0, %s1345
    %v1347 = vld [vmem:[%s1346] sm:%s4]
    %s1348 = scalar_lea.vmem [#allocation0], 152
    %1349 = vst [vmem:[%s1348] sm:%s4] %v1347
    %s1350 = smul.addr 2, 18
    %s1351 = scalar_lea.vmem %s0, %s1350
    %v1352 = vld [vmem:[%s1351] sm:%s4]
    %s1353 = scalar_lea.vmem [#allocation0], 144
    %1354 = vst [vmem:[%s1353] sm:%s4] %v1352
    %s1355 = smul.addr 2, 17
    %s1356 = scalar_lea.vmem %s0, %s1355
    %v1357 = vld [vmem:[%s1356] sm:%s4]
    %s1358 = scalar_lea.vmem [#allocation0], 136
    %1359 = vst [vmem:[%s1358] sm:%s4] %v1357
    %s1360 = smul.addr 2, 16
    %s1361 = scalar_lea.vmem %s0, %s1360
    %v1362 = vld [vmem:[%s1361] sm:%s4]
    %s1363 = scalar_lea.vmem [#allocation0], 128
    %1364 = vst [vmem:[%s1363] sm:%s4] %v1362
    %s1365 = smul.addr 2, 15
    %s1366 = scalar_lea.vmem %s0, %s1365
    %v1367 = vld [vmem:[%s1366] sm:%s4]
    %s1368 = scalar_lea.vmem [#allocation0], 120
    %1369 = vst [vmem:[%s1368] sm:%s4] %v1367
    %s1370 = smul.addr 2, 14
    %s1371 = scalar_lea.vmem %s0, %s1370
    %v1372 = vld [vmem:[%s1371] sm:%s4]
    %s1373 = scalar_lea.vmem [#allocation0], 112
    %1374 = vst [vmem:[%s1373] sm:%s4] %v1372
    %s1375 = smul.addr 2, 13
    %s1376 = scalar_lea.vmem %s0, %s1375
    %v1377 = vld [vmem:[%s1376] sm:%s4]
    %s1378 = scalar_lea.vmem [#allocation0], 104
    %1379 = vst [vmem:[%s1378] sm:%s4] %v1377
    %s1380 = smul.addr 2, 12
    %s1381 = scalar_lea.vmem %s0, %s1380
    %v1382 = vld [vmem:[%s1381] sm:%s4]
    %s1383 = scalar_lea.vmem [#allocation0], 96
    %1384 = vst [vmem:[%s1383] sm:%s4] %v1382
    %s1385 = smul.addr 2, 11
    %s1386 = scalar_lea.vmem %s0, %s1385
    %v1387 = vld [vmem:[%s1386] sm:%s4]
    %s1388 = scalar_lea.vmem [#allocation0], 88
    %1389 = vst [vmem:[%s1388] sm:%s4] %v1387
    %s1390 = smul.addr 2, 10
    %s1391 = scalar_lea.vmem %s0, %s1390
    %v1392 = vld [vmem:[%s1391] sm:%s4]
    %s1393 = scalar_lea.vmem [#allocation0], 80
    %1394 = vst [vmem:[%s1393] sm:%s4] %v1392
    %s1395 = smul.addr 2, 9
    %s1396 = scalar_lea.vmem %s0, %s1395
    %v1397 = vld [vmem:[%s1396] sm:%s4]
    %s1398 = scalar_lea.vmem [#allocation0], 72
    %1399 = vst [vmem:[%s1398] sm:%s4] %v1397
    %s1400 = smul.addr 2, 8
    %s1401 = scalar_lea.vmem %s0, %s1400
    %v1402 = vld [vmem:[%s1401] sm:%s4]
    %s1403 = scalar_lea.vmem [#allocation0], 64
    %1404 = vst [vmem:[%s1403] sm:%s4] %v1402
    %s1405 = smul.addr 2, 7
    %s1406 = scalar_lea.vmem %s0, %s1405
    %v1407 = vld [vmem:[%s1406] sm:%s4]
    %s1408 = scalar_lea.vmem [#allocation0], 56
    %1409 = vst [vmem:[%s1408] sm:%s4] %v1407
    %s1410 = smul.addr 2, 6
    %s1411 = scalar_lea.vmem %s0, %s1410
    %v1412 = vld [vmem:[%s1411] sm:%s4]
    %s1413 = scalar_lea.vmem [#allocation0], 48
    %1414 = vst [vmem:[%s1413] sm:%s4] %v1412
    %s1415 = smul.addr 2, 5
    %s1416 = scalar_lea.vmem %s0, %s1415
    %v1417 = vld [vmem:[%s1416] sm:%s4]
    %s1418 = scalar_lea.vmem [#allocation0], 40
    %1419 = vst [vmem:[%s1418] sm:%s4] %v1417
    %s1420 = smul.addr 2, 4
    %s1421 = scalar_lea.vmem %s0, %s1420
    %v1422 = vld [vmem:[%s1421] sm:%s4]
    %s1423 = scalar_lea.vmem [#allocation0], 32
    %1424 = vst [vmem:[%s1423] sm:%s4] %v1422
    %s1425 = smul.addr 2, 3
    %s1426 = scalar_lea.vmem %s0, %s1425
    %v1427 = vld [vmem:[%s1426] sm:%s4]
    %s1428 = scalar_lea.vmem [#allocation0], 24
    %1429 = vst [vmem:[%s1428] sm:%s4] %v1427
    %s1430 = smul.addr 2, 2
    %s1431 = scalar_lea.vmem %s0, %s1430
    %v1432 = vld [vmem:[%s1431] sm:%s4]
    %s1433 = scalar_lea.vmem [#allocation0], 16
    %1434 = vst [vmem:[%s1433] sm:%s4] %v1432
    %s1435 = scalar_lea.vmem %s0, 2
    %v1436 = vld [vmem:[%s1435] sm:%s4]
    %s1437 = scalar_lea.vmem [#allocation0], 8
    %1438 = vst [vmem:[%s1437] sm:%s4] %v1436
    %v1439 = vld [vmem:[%s0] sm:%s4]
    %1440 = vst [vmem:[#allocation0] sm:%s4] %v1439
    %v1441 = vld [vmem:[#allocation0] sm:$0x3]
    %1442 = vst [vmem:[%s1] ss:$16 sm:$0x3] %v1441
    %s1443 = scalar_lea.vmem [#allocation0], 8
    %v1444 = vld [vmem:[%s1443] sm:$0x3]
    %s1445 = scalar_lea.vmem %s1, 8
    %1446 = vst [vmem:[%s1445] ss:$16 sm:$0x3] %v1444
    %s1447 = scalar_lea.vmem [#allocation0], 16
    %v1448 = vld [vmem:[%s1447] sm:$0x3]
    %s1449 = scalar_lea.vmem %s1, 1
    %1450 = vst [vmem:[%s1449] ss:$16 sm:$0x3] %v1448
    %s1451 = scalar_lea.vmem [#allocation0], 24
    %v1452 = vld [vmem:[%s1451] sm:$0x3]
    %s1453 = scalar_lea.vmem %s1, 9
    %1454 = vst [vmem:[%s1453] ss:$16 sm:$0x3] %v1452
    %s1455 = scalar_lea.vmem [#allocation0], 32
    %v1456 = vld [vmem:[%s1455] sm:$0x3]
    %s1457 = scalar_lea.vmem %s1, 2
    %1458 = vst [vmem:[%s1457] ss:$16 sm:$0x3] %v1456
    %s1459 = scalar_lea.vmem [#allocation0], 40
    %v1460 = vld [vmem:[%s1459] sm:$0x3]
    %s1461 = scalar_lea.vmem %s1, 10
    %1462 = vst [vmem:[%s1461] ss:$16 sm:$0x3] %v1460
    %s1463 = scalar_lea.vmem [#allocation0], 48
    %v1464 = vld [vmem:[%s1463] sm:$0x3]
    %s1465 = scalar_lea.vmem %s1, 3
    %1466 = vst [vmem:[%s1465] ss:$16 sm:$0x3] %v1464
    %s1467 = scalar_lea.vmem [#allocation0], 56
    %v1468 = vld [vmem:[%s1467] sm:$0x3]
    %s1469 = scalar_lea.vmem %s1, 11
    %1470 = vst [vmem:[%s1469] ss:$16 sm:$0x3] %v1468
    %s1471 = scalar_lea.vmem [#allocation0], 64
    %v1472 = vld [vmem:[%s1471] sm:$0x3]
    %s1473 = scalar_lea.vmem %s1, 4
    %1474 = vst [vmem:[%s1473] ss:$16 sm:$0x3] %v1472
    %s1475 = scalar_lea.vmem [#allocation0], 72
    %v1476 = vld [vmem:[%s1475] sm:$0x3]
    %s1477 = scalar_lea.vmem %s1, 12
    %1478 = vst [vmem:[%s1477] ss:$16 sm:$0x3] %v1476
    %s1479 = scalar_lea.vmem [#allocation0], 80
    %v1480 = vld [vmem:[%s1479] sm:$0x3]
    %s1481 = scalar_lea.vmem %s1, 5
    %1482 = vst [vmem:[%s1481] ss:$16 sm:$0x3] %v1480
    %s1483 = scalar_lea.vmem [#allocation0], 88
    %v1484 = vld [vmem:[%s1483] sm:$0x3]
    %s1485 = scalar_lea.vmem %s1, 13
    %1486 = vst [vmem:[%s1485] ss:$16 sm:$0x3] %v1484
    %s1487 = scalar_lea.vmem [#allocation0], 96
    %v1488 = vld [vmem:[%s1487] sm:$0x3]
    %s1489 = scalar_lea.vmem %s1, 6
    %1490 = vst [vmem:[%s1489] ss:$16 sm:$0x3] %v1488
    %s1491 = scalar_lea.vmem [#allocation0], 104
    %v1492 = vld [vmem:[%s1491] sm:$0x3]
    %s1493 = scalar_lea.vmem %s1, 14
    %1494 = vst [vmem:[%s1493] ss:$16 sm:$0x3] %v1492
    %s1495 = scalar_lea.vmem [#allocation0], 112
    %v1496 = vld [vmem:[%s1495] sm:$0x3]
    %s1497 = scalar_lea.vmem %s1, 7
    %1498 = vst [vmem:[%s1497] ss:$16 sm:$0x3] %v1496
    %s1499 = scalar_lea.vmem [#allocation0], 120
    %v1500 = vld [vmem:[%s1499] sm:$0x3]
    %s1501 = scalar_lea.vmem %s1, 15
    %1502 = vst [vmem:[%s1501] ss:$16 sm:$0x3] %v1500
    %s1503 = scalar_lea.vmem [#allocation0], 128
    %v1504 = vld [vmem:[%s1503] sm:$0x3]
    %s1505 = scalar_lea.vmem %s1, 32
    %1506 = vst [vmem:[%s1505] ss:$16 sm:$0x3] %v1504
    %s1507 = scalar_lea.vmem [#allocation0], 136
    %v1508 = vld [vmem:[%s1507] sm:$0x3]
    %s1509 = scalar_lea.vmem %s1, 40
    %1510 = vst [vmem:[%s1509] ss:$16 sm:$0x3] %v1508
    %s1511 = scalar_lea.vmem [#allocation0], 144
    %v1512 = vld [vmem:[%s1511] sm:$0x3]
    %s1513 = scalar_lea.vmem %s1, 33
    %1514 = vst [vmem:[%s1513] ss:$16 sm:$0x3] %v1512
    %s1515 = scalar_lea.vmem [#allocation0], 152
    %v1516 = vld [vmem:[%s1515] sm:$0x3]
    %s1517 = scalar_lea.vmem %s1, 41
    %1518 = vst [vmem:[%s1517] ss:$16 sm:$0x3] %v1516
    %s1519 = scalar_lea.vmem [#allocation0], 160
    %v1520 = vld [vmem:[%s1519] sm:$0x3]
    %s1521 = scalar_lea.vmem %s1, 34
    %1522 = vst [vmem:[%s1521] ss:$16 sm:$0x3] %v1520
    %s1523 = scalar_lea.vmem [#allocation0], 168
    %v1524 = vld [vmem:[%s1523] sm:$0x3]
    %s1525 = scalar_lea.vmem %s1, 42
    %1526 = vst [vmem:[%s1525] ss:$16 sm:$0x3] %v1524
    %s1527 = scalar_lea.vmem [#allocation0], 176
    %v1528 = vld [vmem:[%s1527] sm:$0x3]
    %s1529 = scalar_lea.vmem %s1, 35
    %1530 = vst [vmem:[%s1529] ss:$16 sm:$0x3] %v1528
    %s1531 = scalar_lea.vmem [#allocation0], 184
    %v1532 = vld [vmem:[%s1531] sm:$0x3]
    %s1533 = scalar_lea.vmem %s1, 43
    %1534 = vst [vmem:[%s1533] ss:$16 sm:$0x3] %v1532
    %s1535 = scalar_lea.vmem [#allocation0], 192
    %v1536 = vld [vmem:[%s1535] sm:$0x3]
    %s1537 = scalar_lea.vmem %s1, 36
    %1538 = vst [vmem:[%s1537] ss:$16 sm:$0x3] %v1536
    %s1539 = scalar_lea.vmem [#allocation0], 200
    %v1540 = vld [vmem:[%s1539] sm:$0x3]
    %s1541 = scalar_lea.vmem %s1, 44
    %1542 = vst [vmem:[%s1541] ss:$16 sm:$0x3] %v1540
    %s1543 = scalar_lea.vmem [#allocation0], 208
    %v1544 = vld [vmem:[%s1543] sm:$0x3]
    %s1545 = scalar_lea.vmem %s1, 37
    %1546 = vst [vmem:[%s1545] ss:$16 sm:$0x3] %v1544
    %s1547 = scalar_lea.vmem [#allocation0], 216
    %v1548 = vld [vmem:[%s1547] sm:$0x3]
    %s1549 = scalar_lea.vmem %s1, 45
    %1550 = vst [vmem:[%s1549] ss:$16 sm:$0x3] %v1548
    %s1551 = scalar_lea.vmem [#allocation0], 224
    %v1552 = vld [vmem:[%s1551] sm:$0x3]
    %s1553 = scalar_lea.vmem %s1, 38
    %1554 = vst [vmem:[%s1553] ss:$16 sm:$0x3] %v1552
    %s1555 = scalar_lea.vmem [#allocation0], 232
    %v1556 = vld [vmem:[%s1555] sm:$0x3]
    %s1557 = scalar_lea.vmem %s1, 46
    %1558 = vst [vmem:[%s1557] ss:$16 sm:$0x3] %v1556
    %s1559 = scalar_lea.vmem [#allocation0], 240
    %v1560 = vld [vmem:[%s1559] sm:$0x3]
    %s1561 = scalar_lea.vmem %s1, 39
    %1562 = vst [vmem:[%s1561] ss:$16 sm:$0x3] %v1560
    %s1563 = scalar_lea.vmem [#allocation0], 248
    %v1564 = vld [vmem:[%s1563] sm:$0x3]
    %s1565 = scalar_lea.vmem %s1, 47
    %1566 = vst [vmem:[%s1565] ss:$16 sm:$0x3] %v1564
    %s1567 = scalar_lea.vmem [#allocation0], 256
    %v1568 = vld [vmem:[%s1567] sm:$0x3]
    %s1569 = scalar_lea.vmem %s1, 64
    %1570 = vst [vmem:[%s1569] ss:$16 sm:$0x3] %v1568
    %s1571 = scalar_lea.vmem [#allocation0], 264
    %v1572 = vld [vmem:[%s1571] sm:$0x3]
    %s1573 = scalar_lea.vmem %s1, 72
    %1574 = vst [vmem:[%s1573] ss:$16 sm:$0x3] %v1572
    %s1575 = scalar_lea.vmem [#allocation0], 272
    %v1576 = vld [vmem:[%s1575] sm:$0x3]
    %s1577 = scalar_lea.vmem %s1, 65
    %1578 = vst [vmem:[%s1577] ss:$16 sm:$0x3] %v1576
    %s1579 = scalar_lea.vmem [#allocation0], 280
    %v1580 = vld [vmem:[%s1579] sm:$0x3]
    %s1581 = scalar_lea.vmem %s1, 73
    %1582 = vst [vmem:[%s1581] ss:$16 sm:$0x3] %v1580
    %s1583 = scalar_lea.vmem [#allocation0], 288
    %v1584 = vld [vmem:[%s1583] sm:$0x3]
    %s1585 = scalar_lea.vmem %s1, 66
    %1586 = vst [vmem:[%s1585] ss:$16 sm:$0x3] %v1584
    %s1587 = scalar_lea.vmem [#allocation0], 296
    %v1588 = vld [vmem:[%s1587] sm:$0x3]
    %s1589 = scalar_lea.vmem %s1, 74
    %1590 = vst [vmem:[%s1589] ss:$16 sm:$0x3] %v1588
    %s1591 = scalar_lea.vmem [#allocation0], 304
    %v1592 = vld [vmem:[%s1591] sm:$0x3]
    %s1593 = scalar_lea.vmem %s1, 67
    %1594 = vst [vmem:[%s1593] ss:$16 sm:$0x3] %v1592
    %s1595 = scalar_lea.vmem [#allocation0], 312
    %v1596 = vld [vmem:[%s1595] sm:$0x3]
    %s1597 = scalar_lea.vmem %s1, 75
    %1598 = vst [vmem:[%s1597] ss:$16 sm:$0x3] %v1596
    %s1599 = scalar_lea.vmem [#allocation0], 320
    %v1600 = vld [vmem:[%s1599] sm:$0x3]
    %s1601 = scalar_lea.vmem %s1, 68
    %1602 = vst [vmem:[%s1601] ss:$16 sm:$0x3] %v1600
    %s1603 = scalar_lea.vmem [#allocation0], 328
    %v1604 = vld [vmem:[%s1603] sm:$0x3]
    %s1605 = scalar_lea.vmem %s1, 76
    %1606 = vst [vmem:[%s1605] ss:$16 sm:$0x3] %v1604
    %s1607 = scalar_lea.vmem [#allocation0], 336
    %v1608 = vld [vmem:[%s1607] sm:$0x3]
    %s1609 = scalar_lea.vmem %s1, 69
    %1610 = vst [vmem:[%s1609] ss:$16 sm:$0x3] %v1608
    %s1611 = scalar_lea.vmem [#allocation0], 344
    %v1612 = vld [vmem:[%s1611] sm:$0x3]
    %s1613 = scalar_lea.vmem %s1, 77
    %1614 = vst [vmem:[%s1613] ss:$16 sm:$0x3] %v1612
    %s1615 = scalar_lea.vmem [#allocation0], 352
    %v1616 = vld [vmem:[%s1615] sm:$0x3]
    %s1617 = scalar_lea.vmem %s1, 70
    %1618 = vst [vmem:[%s1617] ss:$16 sm:$0x3] %v1616
    %s1619 = scalar_lea.vmem [#allocation0], 360
    %v1620 = vld [vmem:[%s1619] sm:$0x3]
    %s1621 = scalar_lea.vmem %s1, 78
    %1622 = vst [vmem:[%s1621] ss:$16 sm:$0x3] %v1620
    %s1623 = scalar_lea.vmem [#allocation0], 368
    %v1624 = vld [vmem:[%s1623] sm:$0x3]
    %s1625 = scalar_lea.vmem %s1, 71
    %1626 = vst [vmem:[%s1625] ss:$16 sm:$0x3] %v1624
    %s1627 = scalar_lea.vmem [#allocation0], 376
    %v1628 = vld [vmem:[%s1627] sm:$0x3]
    %s1629 = scalar_lea.vmem %s1, 79
    %1630 = vst [vmem:[%s1629] ss:$16 sm:$0x3] %v1628
    %s1631 = scalar_lea.vmem [#allocation0], 384
    %v1632 = vld [vmem:[%s1631] sm:$0x3]
    %s1633 = scalar_lea.vmem %s1, 96
    %1634 = vst [vmem:[%s1633] ss:$16 sm:$0x3] %v1632
    %s1635 = scalar_lea.vmem [#allocation0], 392
    %v1636 = vld [vmem:[%s1635] sm:$0x3]
    %s1637 = scalar_lea.vmem %s1, 104
    %1638 = vst [vmem:[%s1637] ss:$16 sm:$0x3] %v1636
    %s1639 = scalar_lea.vmem [#allocation0], 400
    %v1640 = vld [vmem:[%s1639] sm:$0x3]
    %s1641 = scalar_lea.vmem %s1, 97
    %1642 = vst [vmem:[%s1641] ss:$16 sm:$0x3] %v1640
    %s1643 = scalar_lea.vmem [#allocation0], 408
    %v1644 = vld [vmem:[%s1643] sm:$0x3]
    %s1645 = scalar_lea.vmem %s1, 105
    %1646 = vst [vmem:[%s1645] ss:$16 sm:$0x3] %v1644
    %s1647 = scalar_lea.vmem [#allocation0], 416
    %v1648 = vld [vmem:[%s1647] sm:$0x3]
    %s1649 = scalar_lea.vmem %s1, 98
    %1650 = vst [vmem:[%s1649] ss:$16 sm:$0x3] %v1648
    %s1651 = scalar_lea.vmem [#allocation0], 424
    %v1652 = vld [vmem:[%s1651] sm:$0x3]
    %s1653 = scalar_lea.vmem %s1, 106
    %1654 = vst [vmem:[%s1653] ss:$16 sm:$0x3] %v1652
    %s1655 = scalar_lea.vmem [#allocation0], 432
    %v1656 = vld [vmem:[%s1655] sm:$0x3]
    %s1657 = scalar_lea.vmem %s1, 99
    %1658 = vst [vmem:[%s1657] ss:$16 sm:$0x3] %v1656
    %s1659 = scalar_lea.vmem [#allocation0], 440
    %v1660 = vld [vmem:[%s1659] sm:$0x3]
    %s1661 = scalar_lea.vmem %s1, 107
    %1662 = vst [vmem:[%s1661] ss:$16 sm:$0x3] %v1660
    %s1663 = scalar_lea.vmem [#allocation0], 448
    %v1664 = vld [vmem:[%s1663] sm:$0x3]
    %s1665 = scalar_lea.vmem %s1, 100
    %1666 = vst [vmem:[%s1665] ss:$16 sm:$0x3] %v1664
    %s1667 = scalar_lea.vmem [#allocation0], 456
    %v1668 = vld [vmem:[%s1667] sm:$0x3]
    %s1669 = scalar_lea.vmem %s1, 108
    %1670 = vst [vmem:[%s1669] ss:$16 sm:$0x3] %v1668
    %s1671 = scalar_lea.vmem [#allocation0], 464
    %v1672 = vld [vmem:[%s1671] sm:$0x3]
    %s1673 = scalar_lea.vmem %s1, 101
    %1674 = vst [vmem:[%s1673] ss:$16 sm:$0x3] %v1672
    %s1675 = scalar_lea.vmem [#allocation0], 472
    %v1676 = vld [vmem:[%s1675] sm:$0x3]
    %s1677 = scalar_lea.vmem %s1, 109
    %1678 = vst [vmem:[%s1677] ss:$16 sm:$0x3] %v1676
    %s1679 = scalar_lea.vmem [#allocation0], 480
    %v1680 = vld [vmem:[%s1679] sm:$0x3]
    %s1681 = scalar_lea.vmem %s1, 102
    %1682 = vst [vmem:[%s1681] ss:$16 sm:$0x3] %v1680
    %s1683 = scalar_lea.vmem [#allocation0], 488
    %v1684 = vld [vmem:[%s1683] sm:$0x3]
    %s1685 = scalar_lea.vmem %s1, 110
    %1686 = vst [vmem:[%s1685] ss:$16 sm:$0x3] %v1684
    %s1687 = scalar_lea.vmem [#allocation0], 496
    %v1688 = vld [vmem:[%s1687] sm:$0x3]
    %s1689 = scalar_lea.vmem %s1, 103
    %1690 = vst [vmem:[%s1689] ss:$16 sm:$0x3] %v1688
    %s1691 = scalar_lea.vmem [#allocation0], 504
    %v1692 = vld [vmem:[%s1691] sm:$0x3]
    %s1693 = scalar_lea.vmem %s1, 111
    %1694 = vst [vmem:[%s1693] ss:$16 sm:$0x3] %v1692
    %s1695 = scalar_lea.vmem [#allocation0], 512
    %v1696 = vld [vmem:[%s1695] sm:$0x3]
    %s1697 = scalar_lea.vmem %s1, 128
    %1698 = vst [vmem:[%s1697] ss:$16 sm:$0x3] %v1696
    %s1699 = scalar_lea.vmem [#allocation0], 520
    %v1700 = vld [vmem:[%s1699] sm:$0x3]
    %s1701 = scalar_lea.vmem %s1, 136
    %1702 = vst [vmem:[%s1701] ss:$16 sm:$0x3] %v1700
    %s1703 = scalar_lea.vmem [#allocation0], 528
    %v1704 = vld [vmem:[%s1703] sm:$0x3]
    %s1705 = scalar_lea.vmem %s1, 129
    %1706 = vst [vmem:[%s1705] ss:$16 sm:$0x3] %v1704
    %s1707 = scalar_lea.vmem [#allocation0], 536
    %v1708 = vld [vmem:[%s1707] sm:$0x3]
    %s1709 = scalar_lea.vmem %s1, 137
    %1710 = vst [vmem:[%s1709] ss:$16 sm:$0x3] %v1708
    %s1711 = scalar_lea.vmem [#allocation0], 544
    %v1712 = vld [vmem:[%s1711] sm:$0x3]
    %s1713 = scalar_lea.vmem %s1, 130
    %1714 = vst [vmem:[%s1713] ss:$16 sm:$0x3] %v1712
    %s1715 = scalar_lea.vmem [#allocation0], 552
    %v1716 = vld [vmem:[%s1715] sm:$0x3]
    %s1717 = scalar_lea.vmem %s1, 138
    %1718 = vst [vmem:[%s1717] ss:$16 sm:$0x3] %v1716
    %s1719 = scalar_lea.vmem [#allocation0], 560
    %v1720 = vld [vmem:[%s1719] sm:$0x3]
    %s1721 = scalar_lea.vmem %s1, 131
    %1722 = vst [vmem:[%s1721] ss:$16 sm:$0x3] %v1720
    %s1723 = scalar_lea.vmem [#allocation0], 568
    %v1724 = vld [vmem:[%s1723] sm:$0x3]
    %s1725 = scalar_lea.vmem %s1, 139
    %1726 = vst [vmem:[%s1725] ss:$16 sm:$0x3] %v1724
    %s1727 = scalar_lea.vmem [#allocation0], 576
    %v1728 = vld [vmem:[%s1727] sm:$0x3]
    %s1729 = scalar_lea.vmem %s1, 132
    %1730 = vst [vmem:[%s1729] ss:$16 sm:$0x3] %v1728
    %s1731 = scalar_lea.vmem [#allocation0], 584
    %v1732 = vld [vmem:[%s1731] sm:$0x3]
    %s1733 = scalar_lea.vmem %s1, 140
    %1734 = vst [vmem:[%s1733] ss:$16 sm:$0x3] %v1732
    %s1735 = scalar_lea.vmem [#allocation0], 592
    %v1736 = vld [vmem:[%s1735] sm:$0x3]
    %s1737 = scalar_lea.vmem %s1, 133
    %1738 = vst [vmem:[%s1737] ss:$16 sm:$0x3] %v1736
    %s1739 = scalar_lea.vmem [#allocation0], 600
    %v1740 = vld [vmem:[%s1739] sm:$0x3]
    %s1741 = scalar_lea.vmem %s1, 141
    %1742 = vst [vmem:[%s1741] ss:$16 sm:$0x3] %v1740
    %s1743 = scalar_lea.vmem [#allocation0], 608
    %v1744 = vld [vmem:[%s1743] sm:$0x3]
    %s1745 = scalar_lea.vmem %s1, 134
    %1746 = vst [vmem:[%s1745] ss:$16 sm:$0x3] %v1744
    %s1747 = scalar_lea.vmem [#allocation0], 616
    %v1748 = vld [vmem:[%s1747] sm:$0x3]
    %s1749 = scalar_lea.vmem %s1, 142
    %1750 = vst [vmem:[%s1749] ss:$16 sm:$0x3] %v1748
    %s1751 = scalar_lea.vmem [#allocation0], 624
    %v1752 = vld [vmem:[%s1751] sm:$0x3]
    %s1753 = scalar_lea.vmem %s1, 135
    %1754 = vst [vmem:[%s1753] ss:$16 sm:$0x3] %v1752
    %s1755 = scalar_lea.vmem [#allocation0], 632
    %v1756 = vld [vmem:[%s1755] sm:$0x3]
    %s1757 = scalar_lea.vmem %s1, 143
    %1758 = vst [vmem:[%s1757] ss:$16 sm:$0x3] %v1756
    %s1759 = scalar_lea.vmem [#allocation0], 640
    %v1760 = vld [vmem:[%s1759] sm:$0x3]
    %s1761 = scalar_lea.vmem %s1, 160
    %1762 = vst [vmem:[%s1761] ss:$16 sm:$0x3] %v1760
    %s1763 = scalar_lea.vmem [#allocation0], 648
    %v1764 = vld [vmem:[%s1763] sm:$0x3]
    %s1765 = scalar_lea.vmem %s1, 168
    %1766 = vst [vmem:[%s1765] ss:$16 sm:$0x3] %v1764
    %s1767 = scalar_lea.vmem [#allocation0], 656
    %v1768 = vld [vmem:[%s1767] sm:$0x3]
    %s1769 = scalar_lea.vmem %s1, 161
    %1770 = vst [vmem:[%s1769] ss:$16 sm:$0x3] %v1768
    %s1771 = scalar_lea.vmem [#allocation0], 664
    %v1772 = vld [vmem:[%s1771] sm:$0x3]
    %s1773 = scalar_lea.vmem %s1, 169
    %1774 = vst [vmem:[%s1773] ss:$16 sm:$0x3] %v1772
    %s1775 = scalar_lea.vmem [#allocation0], 672
    %v1776 = vld [vmem:[%s1775] sm:$0x3]
    %s1777 = scalar_lea.vmem %s1, 162
    %1778 = vst [vmem:[%s1777] ss:$16 sm:$0x3] %v1776
    %s1779 = scalar_lea.vmem [#allocation0], 680
    %v1780 = vld [vmem:[%s1779] sm:$0x3]
    %s1781 = scalar_lea.vmem %s1, 170
    %1782 = vst [vmem:[%s1781] ss:$16 sm:$0x3] %v1780
    %s1783 = scalar_lea.vmem [#allocation0], 688
    %v1784 = vld [vmem:[%s1783] sm:$0x3]
    %s1785 = scalar_lea.vmem %s1, 163
    %1786 = vst [vmem:[%s1785] ss:$16 sm:$0x3] %v1784
    %s1787 = scalar_lea.vmem [#allocation0], 696
    %v1788 = vld [vmem:[%s1787] sm:$0x3]
    %s1789 = scalar_lea.vmem %s1, 171
    %1790 = vst [vmem:[%s1789] ss:$16 sm:$0x3] %v1788
    %s1791 = scalar_lea.vmem [#allocation0], 704
    %v1792 = vld [vmem:[%s1791] sm:$0x3]
    %s1793 = scalar_lea.vmem %s1, 164
    %1794 = vst [vmem:[%s1793] ss:$16 sm:$0x3] %v1792
    %s1795 = scalar_lea.vmem [#allocation0], 712
    %v1796 = vld [vmem:[%s1795] sm:$0x3]
    %s1797 = scalar_lea.vmem %s1, 172
    %1798 = vst [vmem:[%s1797] ss:$16 sm:$0x3] %v1796
    %s1799 = scalar_lea.vmem [#allocation0], 720
    %v1800 = vld [vmem:[%s1799] sm:$0x3]
    %s1801 = scalar_lea.vmem %s1, 165
    %1802 = vst [vmem:[%s1801] ss:$16 sm:$0x3] %v1800
    %s1803 = scalar_lea.vmem [#allocation0], 728
    %v1804 = vld [vmem:[%s1803] sm:$0x3]
    %s1805 = scalar_lea.vmem %s1, 173
    %1806 = vst [vmem:[%s1805] ss:$16 sm:$0x3] %v1804
    %s1807 = scalar_lea.vmem [#allocation0], 736
    %v1808 = vld [vmem:[%s1807] sm:$0x3]
    %s1809 = scalar_lea.vmem %s1, 166
    %1810 = vst [vmem:[%s1809] ss:$16 sm:$0x3] %v1808
    %s1811 = scalar_lea.vmem [#allocation0], 744
    %v1812 = vld [vmem:[%s1811] sm:$0x3]
    %s1813 = scalar_lea.vmem %s1, 174
    %1814 = vst [vmem:[%s1813] ss:$16 sm:$0x3] %v1812
    %s1815 = scalar_lea.vmem [#allocation0], 752
    %v1816 = vld [vmem:[%s1815] sm:$0x3]
    %s1817 = scalar_lea.vmem %s1, 167
    %1818 = vst [vmem:[%s1817] ss:$16 sm:$0x3] %v1816
    %s1819 = scalar_lea.vmem [#allocation0], 760
    %v1820 = vld [vmem:[%s1819] sm:$0x3]
    %s1821 = scalar_lea.vmem %s1, 175
    %1822 = vst [vmem:[%s1821] ss:$16 sm:$0x3] %v1820
    %s1823 = scalar_lea.vmem [#allocation0], 768
    %v1824 = vld [vmem:[%s1823] sm:$0x3]
    %s1825 = scalar_lea.vmem %s1, 192
    %1826 = vst [vmem:[%s1825] ss:$16 sm:$0x3] %v1824
    %s1827 = scalar_lea.vmem [#allocation0], 776
    %v1828 = vld [vmem:[%s1827] sm:$0x3]
    %s1829 = scalar_lea.vmem %s1, 200
    %1830 = vst [vmem:[%s1829] ss:$16 sm:$0x3] %v1828
    %s1831 = scalar_lea.vmem [#allocation0], 784
    %v1832 = vld [vmem:[%s1831] sm:$0x3]
    %s1833 = scalar_lea.vmem %s1, 193
    %1834 = vst [vmem:[%s1833] ss:$16 sm:$0x3] %v1832
    %s1835 = scalar_lea.vmem [#allocation0], 792
    %v1836 = vld [vmem:[%s1835] sm:$0x3]
    %s1837 = scalar_lea.vmem %s1, 201
    %1838 = vst [vmem:[%s1837] ss:$16 sm:$0x3] %v1836
    %s1839 = scalar_lea.vmem [#allocation0], 800
    %v1840 = vld [vmem:[%s1839] sm:$0x3]
    %s1841 = scalar_lea.vmem %s1, 194
    %1842 = vst [vmem:[%s1841] ss:$16 sm:$0x3] %v1840
    %s1843 = scalar_lea.vmem [#allocation0], 808
    %v1844 = vld [vmem:[%s1843] sm:$0x3]
    %s1845 = scalar_lea.vmem %s1, 202
    %1846 = vst [vmem:[%s1845] ss:$16 sm:$0x3] %v1844
    %s1847 = scalar_lea.vmem [#allocation0], 816
    %v1848 = vld [vmem:[%s1847] sm:$0x3]
    %s1849 = scalar_lea.vmem %s1, 195
    %1850 = vst [vmem:[%s1849] ss:$16 sm:$0x3] %v1848
    %s1851 = scalar_lea.vmem [#allocation0], 824
    %v1852 = vld [vmem:[%s1851] sm:$0x3]
    %s1853 = scalar_lea.vmem %s1, 203
    %1854 = vst [vmem:[%s1853] ss:$16 sm:$0x3] %v1852
    %s1855 = scalar_lea.vmem [#allocation0], 832
    %v1856 = vld [vmem:[%s1855] sm:$0x3]
    %s1857 = scalar_lea.vmem %s1, 196
    %1858 = vst [vmem:[%s1857] ss:$16 sm:$0x3] %v1856
    %s1859 = scalar_lea.vmem [#allocation0], 840
    %v1860 = vld [vmem:[%s1859] sm:$0x3]
    %s1861 = scalar_lea.vmem %s1, 204
    %1862 = vst [vmem:[%s1861] ss:$16 sm:$0x3] %v1860
    %s1863 = scalar_lea.vmem [#allocation0], 848
    %v1864 = vld [vmem:[%s1863] sm:$0x3]
    %s1865 = scalar_lea.vmem %s1, 197
    %1866 = vst [vmem:[%s1865] ss:$16 sm:$0x3] %v1864
    %s1867 = scalar_lea.vmem [#allocation0], 856
    %v1868 = vld [vmem:[%s1867] sm:$0x3]
    %s1869 = scalar_lea.vmem %s1, 205
    %1870 = vst [vmem:[%s1869] ss:$16 sm:$0x3] %v1868
    %s1871 = scalar_lea.vmem [#allocation0], 864
    %v1872 = vld [vmem:[%s1871] sm:$0x3]
    %s1873 = scalar_lea.vmem %s1, 198
    %1874 = vst [vmem:[%s1873] ss:$16 sm:$0x3] %v1872
    %s1875 = scalar_lea.vmem [#allocation0], 872
    %v1876 = vld [vmem:[%s1875] sm:$0x3]
    %s1877 = scalar_lea.vmem %s1, 206
    %1878 = vst [vmem:[%s1877] ss:$16 sm:$0x3] %v1876
    %s1879 = scalar_lea.vmem [#allocation0], 880
    %v1880 = vld [vmem:[%s1879] sm:$0x3]
    %s1881 = scalar_lea.vmem %s1, 199
    %1882 = vst [vmem:[%s1881] ss:$16 sm:$0x3] %v1880
    %s1883 = scalar_lea.vmem [#allocation0], 888
    %v1884 = vld [vmem:[%s1883] sm:$0x3]
    %s1885 = scalar_lea.vmem %s1, 207
    %1886 = vst [vmem:[%s1885] ss:$16 sm:$0x3] %v1884
    %s1887 = scalar_lea.vmem [#allocation0], 896
    %v1888 = vld [vmem:[%s1887] sm:$0x3]
    %s1889 = scalar_lea.vmem %s1, 224
    %1890 = vst [vmem:[%s1889] ss:$16 sm:$0x3] %v1888
    %s1891 = scalar_lea.vmem [#allocation0], 904
    %v1892 = vld [vmem:[%s1891] sm:$0x3]
    %s1893 = scalar_lea.vmem %s1, 232
    %1894 = vst [vmem:[%s1893] ss:$16 sm:$0x3] %v1892
    %s1895 = scalar_lea.vmem [#allocation0], 912
    %v1896 = vld [vmem:[%s1895] sm:$0x3]
    %s1897 = scalar_lea.vmem %s1, 225
    %1898 = vst [vmem:[%s1897] ss:$16 sm:$0x3] %v1896
    %s1899 = scalar_lea.vmem [#allocation0], 920
    %v1900 = vld [vmem:[%s1899] sm:$0x3]
    %s1901 = scalar_lea.vmem %s1, 233
    %1902 = vst [vmem:[%s1901] ss:$16 sm:$0x3] %v1900
    %s1903 = scalar_lea.vmem [#allocation0], 928
    %v1904 = vld [vmem:[%s1903] sm:$0x3]
    %s1905 = scalar_lea.vmem %s1, 226
    %1906 = vst [vmem:[%s1905] ss:$16 sm:$0x3] %v1904
    %s1907 = scalar_lea.vmem [#allocation0], 936
    %v1908 = vld [vmem:[%s1907] sm:$0x3]
    %s1909 = scalar_lea.vmem %s1, 234
    %1910 = vst [vmem:[%s1909] ss:$16 sm:$0x3] %v1908
    %s1911 = scalar_lea.vmem [#allocation0], 944
    %v1912 = vld [vmem:[%s1911] sm:$0x3]
    %s1913 = scalar_lea.vmem %s1, 227
    %1914 = vst [vmem:[%s1913] ss:$16 sm:$0x3] %v1912
    %s1915 = scalar_lea.vmem [#allocation0], 952
    %v1916 = vld [vmem:[%s1915] sm:$0x3]
    %s1917 = scalar_lea.vmem %s1, 235
    %1918 = vst [vmem:[%s1917] ss:$16 sm:$0x3] %v1916
    %s1919 = scalar_lea.vmem [#allocation0], 960
    %v1920 = vld [vmem:[%s1919] sm:$0x3]
    %s1921 = scalar_lea.vmem %s1, 228
    %1922 = vst [vmem:[%s1921] ss:$16 sm:$0x3] %v1920
    %s1923 = scalar_lea.vmem [#allocation0], 968
    %v1924 = vld [vmem:[%s1923] sm:$0x3]
    %s1925 = scalar_lea.vmem %s1, 236
    %1926 = vst [vmem:[%s1925] ss:$16 sm:$0x3] %v1924
    %s1927 = scalar_lea.vmem [#allocation0], 976
    %v1928 = vld [vmem:[%s1927] sm:$0x3]
    %s1929 = scalar_lea.vmem %s1, 229
    %1930 = vst [vmem:[%s1929] ss:$16 sm:$0x3] %v1928
    %s1931 = scalar_lea.vmem [#allocation0], 984
    %v1932 = vld [vmem:[%s1931] sm:$0x3]
    %s1933 = scalar_lea.vmem %s1, 237
    %1934 = vst [vmem:[%s1933] ss:$16 sm:$0x3] %v1932
    %s1935 = scalar_lea.vmem [#allocation0], 992
    %v1936 = vld [vmem:[%s1935] sm:$0x3]
    %s1937 = scalar_lea.vmem %s1, 230
    %1938 = vst [vmem:[%s1937] ss:$16 sm:$0x3] %v1936
    %s1939 = scalar_lea.vmem [#allocation0], 1000
    %v1940 = vld [vmem:[%s1939] sm:$0x3]
    %s1941 = scalar_lea.vmem %s1, 238
    %1942 = vst [vmem:[%s1941] ss:$16 sm:$0x3] %v1940
    %s1943 = scalar_lea.vmem [#allocation0], 1008
    %v1944 = vld [vmem:[%s1943] sm:$0x3]
    %s1945 = scalar_lea.vmem %s1, 231
    %1946 = vst [vmem:[%s1945] ss:$16 sm:$0x3] %v1944
    %s1947 = scalar_lea.vmem [#allocation0], 1016
    %v1948 = vld [vmem:[%s1947] sm:$0x3]
    %s1949 = scalar_lea.vmem %s1, 239
    %1950 = vst [vmem:[%s1949] ss:$16 sm:$0x3] %v1948
    %s1951 = scalar_lea.vmem [#allocation0], 1024
    %v1952 = vld [vmem:[%s1951] sm:$0x3]
    %s1953 = scalar_lea.vmem %s1, 256
    %1954 = vst [vmem:[%s1953] ss:$16 sm:$0x3] %v1952
    %s1955 = scalar_lea.vmem [#allocation0], 1032
    %v1956 = vld [vmem:[%s1955] sm:$0x3]
    %s1957 = scalar_lea.vmem %s1, 264
    %1958 = vst [vmem:[%s1957] ss:$16 sm:$0x3] %v1956
    %s1959 = scalar_lea.vmem [#allocation0], 1040
    %v1960 = vld [vmem:[%s1959] sm:$0x3]
    %s1961 = scalar_lea.vmem %s1, 257
    %1962 = vst [vmem:[%s1961] ss:$16 sm:$0x3] %v1960
    %s1963 = scalar_lea.vmem [#allocation0], 1048
    %v1964 = vld [vmem:[%s1963] sm:$0x3]
    %s1965 = scalar_lea.vmem %s1, 265
    %1966 = vst [vmem:[%s1965] ss:$16 sm:$0x3] %v1964
    %s1967 = scalar_lea.vmem [#allocation0], 1056
    %v1968 = vld [vmem:[%s1967] sm:$0x3]
    %s1969 = scalar_lea.vmem %s1, 258
    %1970 = vst [vmem:[%s1969] ss:$16 sm:$0x3] %v1968
    %s1971 = scalar_lea.vmem [#allocation0], 1064
    %v1972 = vld [vmem:[%s1971] sm:$0x3]
    %s1973 = scalar_lea.vmem %s1, 266
    %1974 = vst [vmem:[%s1973] ss:$16 sm:$0x3] %v1972
    %s1975 = scalar_lea.vmem [#allocation0], 1072
    %v1976 = vld [vmem:[%s1975] sm:$0x3]
    %s1977 = scalar_lea.vmem %s1, 259
    %1978 = vst [vmem:[%s1977] ss:$16 sm:$0x3] %v1976
    %s1979 = scalar_lea.vmem [#allocation0], 1080
    %v1980 = vld [vmem:[%s1979] sm:$0x3]
    %s1981 = scalar_lea.vmem %s1, 267
    %1982 = vst [vmem:[%s1981] ss:$16 sm:$0x3] %v1980
    %s1983 = scalar_lea.vmem [#allocation0], 1088
    %v1984 = vld [vmem:[%s1983] sm:$0x3]
    %s1985 = scalar_lea.vmem %s1, 260
    %1986 = vst [vmem:[%s1985] ss:$16 sm:$0x3] %v1984
    %s1987 = scalar_lea.vmem [#allocation0], 1096
    %v1988 = vld [vmem:[%s1987] sm:$0x3]
    %s1989 = scalar_lea.vmem %s1, 268
    %1990 = vst [vmem:[%s1989] ss:$16 sm:$0x3] %v1988
    %s1991 = scalar_lea.vmem [#allocation0], 1104
    %v1992 = vld [vmem:[%s1991] sm:$0x3]
    %s1993 = scalar_lea.vmem %s1, 261
    %1994 = vst [vmem:[%s1993] ss:$16 sm:$0x3] %v1992
    %s1995 = scalar_lea.vmem [#allocation0], 1112
    %v1996 = vld [vmem:[%s1995] sm:$0x3]
    %s1997 = scalar_lea.vmem %s1, 269
    %1998 = vst [vmem:[%s1997] ss:$16 sm:$0x3] %v1996
    %s1999 = scalar_lea.vmem [#allocation0], 1120
    %v2000 = vld [vmem:[%s1999] sm:$0x3]
    %s2001 = scalar_lea.vmem %s1, 262
    %2002 = vst [vmem:[%s2001] ss:$16 sm:$0x3] %v2000
    %s2003 = scalar_lea.vmem [#allocation0], 1128
    %v2004 = vld [vmem:[%s2003] sm:$0x3]
    %s2005 = scalar_lea.vmem %s1, 270
    %2006 = vst [vmem:[%s2005] ss:$16 sm:$0x3] %v2004
    %s2007 = scalar_lea.vmem [#allocation0], 1136
    %v2008 = vld [vmem:[%s2007] sm:$0x3]
    %s2009 = scalar_lea.vmem %s1, 263
    %2010 = vst [vmem:[%s2009] ss:$16 sm:$0x3] %v2008
    %s2011 = scalar_lea.vmem [#allocation0], 1144
    %v2012 = vld [vmem:[%s2011] sm:$0x3]
    %s2013 = scalar_lea.vmem %s1, 271
    %2014 = vst [vmem:[%s2013] ss:$16 sm:$0x3] %v2012
    %s2015 = scalar_lea.vmem [#allocation0], 1152
    %v2016 = vld [vmem:[%s2015] sm:$0x3]
    %s2017 = scalar_lea.vmem %s1, 288
    %2018 = vst [vmem:[%s2017] ss:$16 sm:$0x3] %v2016
    %s2019 = scalar_lea.vmem [#allocation0], 1160
    %v2020 = vld [vmem:[%s2019] sm:$0x3]
    %s2021 = scalar_lea.vmem %s1, 296
    %2022 = vst [vmem:[%s2021] ss:$16 sm:$0x3] %v2020
    %s2023 = scalar_lea.vmem [#allocation0], 1168
    %v2024 = vld [vmem:[%s2023] sm:$0x3]
    %s2025 = scalar_lea.vmem %s1, 289
    %2026 = vst [vmem:[%s2025] ss:$16 sm:$0x3] %v2024
    %s2027 = scalar_lea.vmem [#allocation0], 1176
    %v2028 = vld [vmem:[%s2027] sm:$0x3]
    %s2029 = scalar_lea.vmem %s1, 297
    %2030 = vst [vmem:[%s2029] ss:$16 sm:$0x3] %v2028
    %s2031 = scalar_lea.vmem [#allocation0], 1184
    %v2032 = vld [vmem:[%s2031] sm:$0x3]
    %s2033 = scalar_lea.vmem %s1, 290
    %2034 = vst [vmem:[%s2033] ss:$16 sm:$0x3] %v2032
    %s2035 = scalar_lea.vmem [#allocation0], 1192
    %v2036 = vld [vmem:[%s2035] sm:$0x3]
    %s2037 = scalar_lea.vmem %s1, 298
    %2038 = vst [vmem:[%s2037] ss:$16 sm:$0x3] %v2036
    %s2039 = scalar_lea.vmem [#allocation0], 1200
    %v2040 = vld [vmem:[%s2039] sm:$0x3]
    %s2041 = scalar_lea.vmem %s1, 291
    %2042 = vst [vmem:[%s2041] ss:$16 sm:$0x3] %v2040
    %s2043 = scalar_lea.vmem [#allocation0], 1208
    %v2044 = vld [vmem:[%s2043] sm:$0x3]
    %s2045 = scalar_lea.vmem %s1, 299
    %2046 = vst [vmem:[%s2045] ss:$16 sm:$0x3] %v2044
    %s2047 = scalar_lea.vmem [#allocation0], 1216
    %v2048 = vld [vmem:[%s2047] sm:$0x3]
    %s2049 = scalar_lea.vmem %s1, 292
    %2050 = vst [vmem:[%s2049] ss:$16 sm:$0x3] %v2048
    %s2051 = scalar_lea.vmem [#allocation0], 1224
    %v2052 = vld [vmem:[%s2051] sm:$0x3]
    %s2053 = scalar_lea.vmem %s1, 300
    %2054 = vst [vmem:[%s2053] ss:$16 sm:$0x3] %v2052
    %s2055 = scalar_lea.vmem [#allocation0], 1232
    %v2056 = vld [vmem:[%s2055] sm:$0x3]
    %s2057 = scalar_lea.vmem %s1, 293
    %2058 = vst [vmem:[%s2057] ss:$16 sm:$0x3] %v2056
    %s2059 = scalar_lea.vmem [#allocation0], 1240
    %v2060 = vld [vmem:[%s2059] sm:$0x3]
    %s2061 = scalar_lea.vmem %s1, 301
    %2062 = vst [vmem:[%s2061] ss:$16 sm:$0x3] %v2060
    %s2063 = scalar_lea.vmem [#allocation0], 1248
    %v2064 = vld [vmem:[%s2063] sm:$0x3]
    %s2065 = scalar_lea.vmem %s1, 294
    %2066 = vst [vmem:[%s2065] ss:$16 sm:$0x3] %v2064
    %s2067 = scalar_lea.vmem [#allocation0], 1256
    %v2068 = vld [vmem:[%s2067] sm:$0x3]
    %s2069 = scalar_lea.vmem %s1, 302
    %2070 = vst [vmem:[%s2069] ss:$16 sm:$0x3] %v2068
    %s2071 = scalar_lea.vmem [#allocation0], 1264
    %v2072 = vld [vmem:[%s2071] sm:$0x3]
    %s2073 = scalar_lea.vmem %s1, 295
    %2074 = vst [vmem:[%s2073] ss:$16 sm:$0x3] %v2072
    %s2075 = scalar_lea.vmem [#allocation0], 1272
    %v2076 = vld [vmem:[%s2075] sm:$0x3]
    %s2077 = scalar_lea.vmem %s1, 303
    %2078 = vst [vmem:[%s2077] ss:$16 sm:$0x3] %v2076
    %s2079 = scalar_lea.vmem [#allocation0], 1280
    %v2080 = vld [vmem:[%s2079] sm:$0x3]
    %s2081 = scalar_lea.vmem %s1, 320
    %2082 = vst [vmem:[%s2081] ss:$16 sm:$0x3] %v2080
    %s2083 = scalar_lea.vmem [#allocation0], 1288
    %v2084 = vld [vmem:[%s2083] sm:$0x3]
    %s2085 = scalar_lea.vmem %s1, 328
    %2086 = vst [vmem:[%s2085] ss:$16 sm:$0x3] %v2084
    %s2087 = scalar_lea.vmem [#allocation0], 1296
    %v2088 = vld [vmem:[%s2087] sm:$0x3]
    %s2089 = scalar_lea.vmem %s1, 321
    %2090 = vst [vmem:[%s2089] ss:$16 sm:$0x3] %v2088
    %s2091 = scalar_lea.vmem [#allocation0], 1304
    %v2092 = vld [vmem:[%s2091] sm:$0x3]
    %s2093 = scalar_lea.vmem %s1, 329
    %2094 = vst [vmem:[%s2093] ss:$16 sm:$0x3] %v2092
    %s2095 = scalar_lea.vmem [#allocation0], 1312
    %v2096 = vld [vmem:[%s2095] sm:$0x3]
    %s2097 = scalar_lea.vmem %s1, 322
    %2098 = vst [vmem:[%s2097] ss:$16 sm:$0x3] %v2096
    %s2099 = scalar_lea.vmem [#allocation0], 1320
    %v2100 = vld [vmem:[%s2099] sm:$0x3]
    %s2101 = scalar_lea.vmem %s1, 330
    %2102 = vst [vmem:[%s2101] ss:$16 sm:$0x3] %v2100
    %s2103 = scalar_lea.vmem [#allocation0], 1328
    %v2104 = vld [vmem:[%s2103] sm:$0x3]
    %s2105 = scalar_lea.vmem %s1, 323
    %2106 = vst [vmem:[%s2105] ss:$16 sm:$0x3] %v2104
    %s2107 = scalar_lea.vmem [#allocation0], 1336
    %v2108 = vld [vmem:[%s2107] sm:$0x3]
    %s2109 = scalar_lea.vmem %s1, 331
    %2110 = vst [vmem:[%s2109] ss:$16 sm:$0x3] %v2108
    %s2111 = scalar_lea.vmem [#allocation0], 1344
    %v2112 = vld [vmem:[%s2111] sm:$0x3]
    %s2113 = scalar_lea.vmem %s1, 324
    %2114 = vst [vmem:[%s2113] ss:$16 sm:$0x3] %v2112
    %s2115 = scalar_lea.vmem [#allocation0], 1352
    %v2116 = vld [vmem:[%s2115] sm:$0x3]
    %s2117 = scalar_lea.vmem %s1, 332
    %2118 = vst [vmem:[%s2117] ss:$16 sm:$0x3] %v2116
    %s2119 = scalar_lea.vmem [#allocation0], 1360
    %v2120 = vld [vmem:[%s2119] sm:$0x3]
    %s2121 = scalar_lea.vmem %s1, 325
    %2122 = vst [vmem:[%s2121] ss:$16 sm:$0x3] %v2120
    %s2123 = scalar_lea.vmem [#allocation0], 1368
    %v2124 = vld [vmem:[%s2123] sm:$0x3]
    %s2125 = scalar_lea.vmem %s1, 333
    %2126 = vst [vmem:[%s2125] ss:$16 sm:$0x3] %v2124
    %s2127 = scalar_lea.vmem [#allocation0], 1376
    %v2128 = vld [vmem:[%s2127] sm:$0x3]
    %s2129 = scalar_lea.vmem %s1, 326
    %2130 = vst [vmem:[%s2129] ss:$16 sm:$0x3] %v2128
    %s2131 = scalar_lea.vmem [#allocation0], 1384
    %v2132 = vld [vmem:[%s2131] sm:$0x3]
    %s2133 = scalar_lea.vmem %s1, 334
    %2134 = vst [vmem:[%s2133] ss:$16 sm:$0x3] %v2132
    %s2135 = scalar_lea.vmem [#allocation0], 1392
    %v2136 = vld [vmem:[%s2135] sm:$0x3]
    %s2137 = scalar_lea.vmem %s1, 327
    %2138 = vst [vmem:[%s2137] ss:$16 sm:$0x3] %v2136
    %s2139 = scalar_lea.vmem [#allocation0], 1400
    %v2140 = vld [vmem:[%s2139] sm:$0x3]
    %s2141 = scalar_lea.vmem %s1, 335
    %2142 = vst [vmem:[%s2141] ss:$16 sm:$0x3] %v2140
    %s2143 = scalar_lea.vmem [#allocation0], 1408
    %v2144 = vld [vmem:[%s2143] sm:$0x3]
    %s2145 = scalar_lea.vmem %s1, 352
    %2146 = vst [vmem:[%s2145] ss:$16 sm:$0x3] %v2144
    %s2147 = scalar_lea.vmem [#allocation0], 1416
    %v2148 = vld [vmem:[%s2147] sm:$0x3]
    %s2149 = scalar_lea.vmem %s1, 360
    %2150 = vst [vmem:[%s2149] ss:$16 sm:$0x3] %v2148
    %s2151 = scalar_lea.vmem [#allocation0], 1424
    %v2152 = vld [vmem:[%s2151] sm:$0x3]
    %s2153 = scalar_lea.vmem %s1, 353
    %2154 = vst [vmem:[%s2153] ss:$16 sm:$0x3] %v2152
    %s2155 = scalar_lea.vmem [#allocation0], 1432
    %v2156 = vld [vmem:[%s2155] sm:$0x3]
    %s2157 = scalar_lea.vmem %s1, 361
    %2158 = vst [vmem:[%s2157] ss:$16 sm:$0x3] %v2156
    %s2159 = scalar_lea.vmem [#allocation0], 1440
    %v2160 = vld [vmem:[%s2159] sm:$0x3]
    %s2161 = scalar_lea.vmem %s1, 354
    %2162 = vst [vmem:[%s2161] ss:$16 sm:$0x3] %v2160
    %s2163 = scalar_lea.vmem [#allocation0], 1448
    %v2164 = vld [vmem:[%s2163] sm:$0x3]
    %s2165 = scalar_lea.vmem %s1, 362
    %2166 = vst [vmem:[%s2165] ss:$16 sm:$0x3] %v2164
    %s2167 = scalar_lea.vmem [#allocation0], 1456
    %v2168 = vld [vmem:[%s2167] sm:$0x3]
    %s2169 = scalar_lea.vmem %s1, 355
    %2170 = vst [vmem:[%s2169] ss:$16 sm:$0x3] %v2168
    %s2171 = scalar_lea.vmem [#allocation0], 1464
    %v2172 = vld [vmem:[%s2171] sm:$0x3]
    %s2173 = scalar_lea.vmem %s1, 363
    %2174 = vst [vmem:[%s2173] ss:$16 sm:$0x3] %v2172
    %s2175 = scalar_lea.vmem [#allocation0], 1472
    %v2176 = vld [vmem:[%s2175] sm:$0x3]
    %s2177 = scalar_lea.vmem %s1, 356
    %2178 = vst [vmem:[%s2177] ss:$16 sm:$0x3] %v2176
    %s2179 = scalar_lea.vmem [#allocation0], 1480
    %v2180 = vld [vmem:[%s2179] sm:$0x3]
    %s2181 = scalar_lea.vmem %s1, 364
    %2182 = vst [vmem:[%s2181] ss:$16 sm:$0x3] %v2180
    %s2183 = scalar_lea.vmem [#allocation0], 1488
    %v2184 = vld [vmem:[%s2183] sm:$0x3]
    %s2185 = scalar_lea.vmem %s1, 357
    %2186 = vst [vmem:[%s2185] ss:$16 sm:$0x3] %v2184
    %s2187 = scalar_lea.vmem [#allocation0], 1496
    %v2188 = vld [vmem:[%s2187] sm:$0x3]
    %s2189 = scalar_lea.vmem %s1, 365
    %2190 = vst [vmem:[%s2189] ss:$16 sm:$0x3] %v2188
    %s2191 = scalar_lea.vmem [#allocation0], 1504
    %v2192 = vld [vmem:[%s2191] sm:$0x3]
    %s2193 = scalar_lea.vmem %s1, 358
    %2194 = vst [vmem:[%s2193] ss:$16 sm:$0x3] %v2192
    %s2195 = scalar_lea.vmem [#allocation0], 1512
    %v2196 = vld [vmem:[%s2195] sm:$0x3]
    %s2197 = scalar_lea.vmem %s1, 366
    %2198 = vst [vmem:[%s2197] ss:$16 sm:$0x3] %v2196
    %s2199 = scalar_lea.vmem [#allocation0], 1520
    %v2200 = vld [vmem:[%s2199] sm:$0x3]
    %s2201 = scalar_lea.vmem %s1, 359
    %2202 = vst [vmem:[%s2201] ss:$16 sm:$0x3] %v2200
    %s2203 = scalar_lea.vmem [#allocation0], 1528
    %v2204 = vld [vmem:[%s2203] sm:$0x3]
    %s2205 = scalar_lea.vmem %s1, 367
    %2206 = vst [vmem:[%s2205] ss:$16 sm:$0x3] %v2204
    %s2207 = scalar_lea.vmem [#allocation0], 1536
    %v2208 = vld [vmem:[%s2207] sm:$0x3]
    %s2209 = scalar_lea.vmem %s1, 384
    %2210 = vst [vmem:[%s2209] ss:$16 sm:$0x3] %v2208
    %s2211 = scalar_lea.vmem [#allocation0], 1544
    %v2212 = vld [vmem:[%s2211] sm:$0x3]
    %s2213 = scalar_lea.vmem %s1, 392
    %2214 = vst [vmem:[%s2213] ss:$16 sm:$0x3] %v2212
    %s2215 = scalar_lea.vmem [#allocation0], 1552
    %v2216 = vld [vmem:[%s2215] sm:$0x3]
    %s2217 = scalar_lea.vmem %s1, 385
    %2218 = vst [vmem:[%s2217] ss:$16 sm:$0x3] %v2216
    %s2219 = scalar_lea.vmem [#allocation0], 1560
    %v2220 = vld [vmem:[%s2219] sm:$0x3]
    %s2221 = scalar_lea.vmem %s1, 393
    %2222 = vst [vmem:[%s2221] ss:$16 sm:$0x3] %v2220
    %s2223 = scalar_lea.vmem [#allocation0], 1568
    %v2224 = vld [vmem:[%s2223] sm:$0x3]
    %s2225 = scalar_lea.vmem %s1, 386
    %2226 = vst [vmem:[%s2225] ss:$16 sm:$0x3] %v2224
    %s2227 = scalar_lea.vmem [#allocation0], 1576
    %v2228 = vld [vmem:[%s2227] sm:$0x3]
    %s2229 = scalar_lea.vmem %s1, 394
    %2230 = vst [vmem:[%s2229] ss:$16 sm:$0x3] %v2228
    %s2231 = scalar_lea.vmem [#allocation0], 1584
    %v2232 = vld [vmem:[%s2231] sm:$0x3]
    %s2233 = scalar_lea.vmem %s1, 387
    %2234 = vst [vmem:[%s2233] ss:$16 sm:$0x3] %v2232
    %s2235 = scalar_lea.vmem [#allocation0], 1592
    %v2236 = vld [vmem:[%s2235] sm:$0x3]
    %s2237 = scalar_lea.vmem %s1, 395
    %2238 = vst [vmem:[%s2237] ss:$16 sm:$0x3] %v2236
    %s2239 = scalar_lea.vmem [#allocation0], 1600
    %v2240 = vld [vmem:[%s2239] sm:$0x3]
    %s2241 = scalar_lea.vmem %s1, 388
    %2242 = vst [vmem:[%s2241] ss:$16 sm:$0x3] %v2240
    %s2243 = scalar_lea.vmem [#allocation0], 1608
    %v2244 = vld [vmem:[%s2243] sm:$0x3]
    %s2245 = scalar_lea.vmem %s1, 396
    %2246 = vst [vmem:[%s2245] ss:$16 sm:$0x3] %v2244
    %s2247 = scalar_lea.vmem [#allocation0], 1616
    %v2248 = vld [vmem:[%s2247] sm:$0x3]
    %s2249 = scalar_lea.vmem %s1, 389
    %2250 = vst [vmem:[%s2249] ss:$16 sm:$0x3] %v2248
    %s2251 = scalar_lea.vmem [#allocation0], 1624
    %v2252 = vld [vmem:[%s2251] sm:$0x3]
    %s2253 = scalar_lea.vmem %s1, 397
    %2254 = vst [vmem:[%s2253] ss:$16 sm:$0x3] %v2252
    %s2255 = scalar_lea.vmem [#allocation0], 1632
    %v2256 = vld [vmem:[%s2255] sm:$0x3]
    %s2257 = scalar_lea.vmem %s1, 390
    %2258 = vst [vmem:[%s2257] ss:$16 sm:$0x3] %v2256
    %s2259 = scalar_lea.vmem [#allocation0], 1640
    %v2260 = vld [vmem:[%s2259] sm:$0x3]
    %s2261 = scalar_lea.vmem %s1, 398
    %2262 = vst [vmem:[%s2261] ss:$16 sm:$0x3] %v2260
    %s2263 = scalar_lea.vmem [#allocation0], 1648
    %v2264 = vld [vmem:[%s2263] sm:$0x3]
    %s2265 = scalar_lea.vmem %s1, 391
    %2266 = vst [vmem:[%s2265] ss:$16 sm:$0x3] %v2264
    %s2267 = scalar_lea.vmem [#allocation0], 1656
    %v2268 = vld [vmem:[%s2267] sm:$0x3]
    %s2269 = scalar_lea.vmem %s1, 399
    %2270 = vst [vmem:[%s2269] ss:$16 sm:$0x3] %v2268
    %s2271 = scalar_lea.vmem [#allocation0], 1664
    %v2272 = vld [vmem:[%s2271] sm:$0x3]
    %s2273 = scalar_lea.vmem %s1, 416
    %2274 = vst [vmem:[%s2273] ss:$16 sm:$0x3] %v2272
    %s2275 = scalar_lea.vmem [#allocation0], 1672
    %v2276 = vld [vmem:[%s2275] sm:$0x3]
    %s2277 = scalar_lea.vmem %s1, 424
    %2278 = vst [vmem:[%s2277] ss:$16 sm:$0x3] %v2276
    %s2279 = scalar_lea.vmem [#allocation0], 1680
    %v2280 = vld [vmem:[%s2279] sm:$0x3]
    %s2281 = scalar_lea.vmem %s1, 417
    %2282 = vst [vmem:[%s2281] ss:$16 sm:$0x3] %v2280
    %s2283 = scalar_lea.vmem [#allocation0], 1688
    %v2284 = vld [vmem:[%s2283] sm:$0x3]
    %s2285 = scalar_lea.vmem %s1, 425
    %2286 = vst [vmem:[%s2285] ss:$16 sm:$0x3] %v2284
    %s2287 = scalar_lea.vmem [#allocation0], 1696
    %v2288 = vld [vmem:[%s2287] sm:$0x3]
    %s2289 = scalar_lea.vmem %s1, 418
    %2290 = vst [vmem:[%s2289] ss:$16 sm:$0x3] %v2288
    %s2291 = scalar_lea.vmem [#allocation0], 1704
    %v2292 = vld [vmem:[%s2291] sm:$0x3]
    %s2293 = scalar_lea.vmem %s1, 426
    %2294 = vst [vmem:[%s2293] ss:$16 sm:$0x3] %v2292
    %s2295 = scalar_lea.vmem [#allocation0], 1712
    %v2296 = vld [vmem:[%s2295] sm:$0x3]
    %s2297 = scalar_lea.vmem %s1, 419
    %2298 = vst [vmem:[%s2297] ss:$16 sm:$0x3] %v2296
    %s2299 = scalar_lea.vmem [#allocation0], 1720
    %v2300 = vld [vmem:[%s2299] sm:$0x3]
    %s2301 = scalar_lea.vmem %s1, 427
    %2302 = vst [vmem:[%s2301] ss:$16 sm:$0x3] %v2300
    %s2303 = scalar_lea.vmem [#allocation0], 1728
    %v2304 = vld [vmem:[%s2303] sm:$0x3]
    %s2305 = scalar_lea.vmem %s1, 420
    %2306 = vst [vmem:[%s2305] ss:$16 sm:$0x3] %v2304
    %s2307 = scalar_lea.vmem [#allocation0], 1736
    %v2308 = vld [vmem:[%s2307] sm:$0x3]
    %s2309 = scalar_lea.vmem %s1, 428
    %2310 = vst [vmem:[%s2309] ss:$16 sm:$0x3] %v2308
    %s2311 = scalar_lea.vmem [#allocation0], 1744
    %v2312 = vld [vmem:[%s2311] sm:$0x3]
    %s2313 = scalar_lea.vmem %s1, 421
    %2314 = vst [vmem:[%s2313] ss:$16 sm:$0x3] %v2312
    %s2315 = scalar_lea.vmem [#allocation0], 1752
    %v2316 = vld [vmem:[%s2315] sm:$0x3]
    %s2317 = scalar_lea.vmem %s1, 429
    %2318 = vst [vmem:[%s2317] ss:$16 sm:$0x3] %v2316
    %s2319 = scalar_lea.vmem [#allocation0], 1760
    %v2320 = vld [vmem:[%s2319] sm:$0x3]
    %s2321 = scalar_lea.vmem %s1, 422
    %2322 = vst [vmem:[%s2321] ss:$16 sm:$0x3] %v2320
    %s2323 = scalar_lea.vmem [#allocation0], 1768
    %v2324 = vld [vmem:[%s2323] sm:$0x3]
    %s2325 = scalar_lea.vmem %s1, 430
    %2326 = vst [vmem:[%s2325] ss:$16 sm:$0x3] %v2324
    %s2327 = scalar_lea.vmem [#allocation0], 1776
    %v2328 = vld [vmem:[%s2327] sm:$0x3]
    %s2329 = scalar_lea.vmem %s1, 423
    %2330 = vst [vmem:[%s2329] ss:$16 sm:$0x3] %v2328
    %s2331 = scalar_lea.vmem [#allocation0], 1784
    %v2332 = vld [vmem:[%s2331] sm:$0x3]
    %s2333 = scalar_lea.vmem %s1, 431
    %2334 = vst [vmem:[%s2333] ss:$16 sm:$0x3] %v2332
    %s2335 = scalar_lea.vmem [#allocation0], 1792
    %v2336 = vld [vmem:[%s2335] sm:$0x3]
    %s2337 = scalar_lea.vmem %s1, 448
    %2338 = vst [vmem:[%s2337] ss:$16 sm:$0x3] %v2336
    %s2339 = scalar_lea.vmem [#allocation0], 1800
    %v2340 = vld [vmem:[%s2339] sm:$0x3]
    %s2341 = scalar_lea.vmem %s1, 456
    %2342 = vst [vmem:[%s2341] ss:$16 sm:$0x3] %v2340
    %s2343 = scalar_lea.vmem [#allocation0], 1808
    %v2344 = vld [vmem:[%s2343] sm:$0x3]
    %s2345 = scalar_lea.vmem %s1, 449
    %2346 = vst [vmem:[%s2345] ss:$16 sm:$0x3] %v2344
    %s2347 = scalar_lea.vmem [#allocation0], 1816
    %v2348 = vld [vmem:[%s2347] sm:$0x3]
    %s2349 = scalar_lea.vmem %s1, 457
    %2350 = vst [vmem:[%s2349] ss:$16 sm:$0x3] %v2348
    %s2351 = scalar_lea.vmem [#allocation0], 1824
    %v2352 = vld [vmem:[%s2351] sm:$0x3]
    %s2353 = scalar_lea.vmem %s1, 450
    %2354 = vst [vmem:[%s2353] ss:$16 sm:$0x3] %v2352
    %s2355 = scalar_lea.vmem [#allocation0], 1832
    %v2356 = vld [vmem:[%s2355] sm:$0x3]
    %s2357 = scalar_lea.vmem %s1, 458
    %2358 = vst [vmem:[%s2357] ss:$16 sm:$0x3] %v2356
    %s2359 = scalar_lea.vmem [#allocation0], 1840
    %v2360 = vld [vmem:[%s2359] sm:$0x3]
    %s2361 = scalar_lea.vmem %s1, 451
    %2362 = vst [vmem:[%s2361] ss:$16 sm:$0x3] %v2360
    %s2363 = scalar_lea.vmem [#allocation0], 1848
    %v2364 = vld [vmem:[%s2363] sm:$0x3]
    %s2365 = scalar_lea.vmem %s1, 459
    %2366 = vst [vmem:[%s2365] ss:$16 sm:$0x3] %v2364
    %s2367 = scalar_lea.vmem [#allocation0], 1856
    %v2368 = vld [vmem:[%s2367] sm:$0x3]
    %s2369 = scalar_lea.vmem %s1, 452
    %2370 = vst [vmem:[%s2369] ss:$16 sm:$0x3] %v2368
    %s2371 = scalar_lea.vmem [#allocation0], 1864
    %v2372 = vld [vmem:[%s2371] sm:$0x3]
    %s2373 = scalar_lea.vmem %s1, 460
    %2374 = vst [vmem:[%s2373] ss:$16 sm:$0x3] %v2372
    %s2375 = scalar_lea.vmem [#allocation0], 1872
    %v2376 = vld [vmem:[%s2375] sm:$0x3]
    %s2377 = scalar_lea.vmem %s1, 453
    %2378 = vst [vmem:[%s2377] ss:$16 sm:$0x3] %v2376
    %s2379 = scalar_lea.vmem [#allocation0], 1880
    %v2380 = vld [vmem:[%s2379] sm:$0x3]
    %s2381 = scalar_lea.vmem %s1, 461
    %2382 = vst [vmem:[%s2381] ss:$16 sm:$0x3] %v2380
    %s2383 = scalar_lea.vmem [#allocation0], 1888
    %v2384 = vld [vmem:[%s2383] sm:$0x3]
    %s2385 = scalar_lea.vmem %s1, 454
    %2386 = vst [vmem:[%s2385] ss:$16 sm:$0x3] %v2384
    %s2387 = scalar_lea.vmem [#allocation0], 1896
    %v2388 = vld [vmem:[%s2387] sm:$0x3]
    %s2389 = scalar_lea.vmem %s1, 462
    %2390 = vst [vmem:[%s2389] ss:$16 sm:$0x3] %v2388
    %s2391 = scalar_lea.vmem [#allocation0], 1904
    %v2392 = vld [vmem:[%s2391] sm:$0x3]
    %s2393 = scalar_lea.vmem %s1, 455
    %2394 = vst [vmem:[%s2393] ss:$16 sm:$0x3] %v2392
    %s2395 = scalar_lea.vmem [#allocation0], 1912
    %v2396 = vld [vmem:[%s2395] sm:$0x3]
    %s2397 = scalar_lea.vmem %s1, 463
    %2398 = vst [vmem:[%s2397] ss:$16 sm:$0x3] %v2396
    %s2399 = scalar_lea.vmem [#allocation0], 1920
    %v2400 = vld [vmem:[%s2399] sm:$0x3]
    %s2401 = scalar_lea.vmem %s1, 480
    %2402 = vst [vmem:[%s2401] ss:$16 sm:$0x3] %v2400
    %s2403 = scalar_lea.vmem [#allocation0], 1928
    %v2404 = vld [vmem:[%s2403] sm:$0x3]
    %s2405 = scalar_lea.vmem %s1, 488
    %2406 = vst [vmem:[%s2405] ss:$16 sm:$0x3] %v2404
    %s2407 = scalar_lea.vmem [#allocation0], 1936
    %v2408 = vld [vmem:[%s2407] sm:$0x3]
    %s2409 = scalar_lea.vmem %s1, 481
    %2410 = vst [vmem:[%s2409] ss:$16 sm:$0x3] %v2408
    %s2411 = scalar_lea.vmem [#allocation0], 1944
    %v2412 = vld [vmem:[%s2411] sm:$0x3]
    %s2413 = scalar_lea.vmem %s1, 489
    %2414 = vst [vmem:[%s2413] ss:$16 sm:$0x3] %v2412
    %s2415 = scalar_lea.vmem [#allocation0], 1952
    %v2416 = vld [vmem:[%s2415] sm:$0x3]
    %s2417 = scalar_lea.vmem %s1, 482
    %2418 = vst [vmem:[%s2417] ss:$16 sm:$0x3] %v2416
    %s2419 = scalar_lea.vmem [#allocation0], 1960
    %v2420 = vld [vmem:[%s2419] sm:$0x3]
    %s2421 = scalar_lea.vmem %s1, 490
    %2422 = vst [vmem:[%s2421] ss:$16 sm:$0x3] %v2420
    %s2423 = scalar_lea.vmem [#allocation0], 1968
    %v2424 = vld [vmem:[%s2423] sm:$0x3]
    %s2425 = scalar_lea.vmem %s1, 483
    %2426 = vst [vmem:[%s2425] ss:$16 sm:$0x3] %v2424
    %s2427 = scalar_lea.vmem [#allocation0], 1976
    %v2428 = vld [vmem:[%s2427] sm:$0x3]
    %s2429 = scalar_lea.vmem %s1, 491
    %2430 = vst [vmem:[%s2429] ss:$16 sm:$0x3] %v2428
    %s2431 = scalar_lea.vmem [#allocation0], 1984
    %v2432 = vld [vmem:[%s2431] sm:$0x3]
    %s2433 = scalar_lea.vmem %s1, 484
    %2434 = vst [vmem:[%s2433] ss:$16 sm:$0x3] %v2432
    %s2435 = scalar_lea.vmem [#allocation0], 1992
    %v2436 = vld [vmem:[%s2435] sm:$0x3]
    %s2437 = scalar_lea.vmem %s1, 492
    %2438 = vst [vmem:[%s2437] ss:$16 sm:$0x3] %v2436
    %s2439 = scalar_lea.vmem [#allocation0], 2000
    %v2440 = vld [vmem:[%s2439] sm:$0x3]
    %s2441 = scalar_lea.vmem %s1, 485
    %2442 = vst [vmem:[%s2441] ss:$16 sm:$0x3] %v2440
    %s2443 = scalar_lea.vmem [#allocation0], 2008
    %v2444 = vld [vmem:[%s2443] sm:$0x3]
    %s2445 = scalar_lea.vmem %s1, 493
    %2446 = vst [vmem:[%s2445] ss:$16 sm:$0x3] %v2444
    %s2447 = scalar_lea.vmem [#allocation0], 2016
    %v2448 = vld [vmem:[%s2447] sm:$0x3]
    %s2449 = scalar_lea.vmem %s1, 486
    %2450 = vst [vmem:[%s2449] ss:$16 sm:$0x3] %v2448
    %s2451 = scalar_lea.vmem [#allocation0], 2024
    %v2452 = vld [vmem:[%s2451] sm:$0x3]
    %s2453 = scalar_lea.vmem %s1, 494
    %2454 = vst [vmem:[%s2453] ss:$16 sm:$0x3] %v2452
    %s2455 = scalar_lea.vmem [#allocation0], 2032
    %v2456 = vld [vmem:[%s2455] sm:$0x3]
    %s2457 = scalar_lea.vmem %s1, 487
    %2458 = vst [vmem:[%s2457] ss:$16 sm:$0x3] %v2456
    %s2459 = scalar_lea.vmem [#allocation0], 2040
    %v2460 = vld [vmem:[%s2459] sm:$0x3]
    %s2461 = scalar_lea.vmem %s1, 495
    %2462 = vst [vmem:[%s2461] ss:$16 sm:$0x3] %v2460
    %s2463 = scalar_lea.vmem [#allocation0], 2048
    %v2464 = vld [vmem:[%s2463] sm:$0x3]
    %s2465 = scalar_lea.vmem %s1, 512
    %2466 = vst [vmem:[%s2465] ss:$16 sm:$0x3] %v2464
    %s2467 = scalar_lea.vmem [#allocation0], 2056
    %v2468 = vld [vmem:[%s2467] sm:$0x3]
    %s2469 = scalar_lea.vmem %s1, 520
    %2470 = vst [vmem:[%s2469] ss:$16 sm:$0x3] %v2468
    %s2471 = scalar_lea.vmem [#allocation0], 2064
    %v2472 = vld [vmem:[%s2471] sm:$0x3]
    %s2473 = scalar_lea.vmem %s1, 513
    %2474 = vst [vmem:[%s2473] ss:$16 sm:$0x3] %v2472
    %s2475 = scalar_lea.vmem [#allocation0], 2072
    %v2476 = vld [vmem:[%s2475] sm:$0x3]
    %s2477 = scalar_lea.vmem %s1, 521
    %2478 = vst [vmem:[%s2477] ss:$16 sm:$0x3] %v2476
    %s2479 = scalar_lea.vmem [#allocation0], 2080
    %v2480 = vld [vmem:[%s2479] sm:$0x3]
    %s2481 = scalar_lea.vmem %s1, 514
    %2482 = vst [vmem:[%s2481] ss:$16 sm:$0x3] %v2480
    %s2483 = scalar_lea.vmem [#allocation0], 2088
    %v2484 = vld [vmem:[%s2483] sm:$0x3]
    %s2485 = scalar_lea.vmem %s1, 522
    %2486 = vst [vmem:[%s2485] ss:$16 sm:$0x3] %v2484
    %s2487 = scalar_lea.vmem [#allocation0], 2096
    %v2488 = vld [vmem:[%s2487] sm:$0x3]
    %s2489 = scalar_lea.vmem %s1, 515
    %2490 = vst [vmem:[%s2489] ss:$16 sm:$0x3] %v2488
    %s2491 = scalar_lea.vmem [#allocation0], 2104
    %v2492 = vld [vmem:[%s2491] sm:$0x3]
    %s2493 = scalar_lea.vmem %s1, 523
    %2494 = vst [vmem:[%s2493] ss:$16 sm:$0x3] %v2492
    %s2495 = scalar_lea.vmem [#allocation0], 2112
    %v2496 = vld [vmem:[%s2495] sm:$0x3]
    %s2497 = scalar_lea.vmem %s1, 516
    %2498 = vst [vmem:[%s2497] ss:$16 sm:$0x3] %v2496
    %s2499 = scalar_lea.vmem [#allocation0], 2120
    %v2500 = vld [vmem:[%s2499] sm:$0x3]
    %s2501 = scalar_lea.vmem %s1, 524
    %2502 = vst [vmem:[%s2501] ss:$16 sm:$0x3] %v2500
    %s2503 = scalar_lea.vmem [#allocation0], 2128
    %v2504 = vld [vmem:[%s2503] sm:$0x3]
    %s2505 = scalar_lea.vmem %s1, 517
    %2506 = vst [vmem:[%s2505] ss:$16 sm:$0x3] %v2504
    %s2507 = scalar_lea.vmem [#allocation0], 2136
    %v2508 = vld [vmem:[%s2507] sm:$0x3]
    %s2509 = scalar_lea.vmem %s1, 525
    %2510 = vst [vmem:[%s2509] ss:$16 sm:$0x3] %v2508
    %s2511 = scalar_lea.vmem [#allocation0], 2144
    %v2512 = vld [vmem:[%s2511] sm:$0x3]
    %s2513 = scalar_lea.vmem %s1, 518
    %2514 = vst [vmem:[%s2513] ss:$16 sm:$0x3] %v2512
    %s2515 = scalar_lea.vmem [#allocation0], 2152
    %v2516 = vld [vmem:[%s2515] sm:$0x3]
    %s2517 = scalar_lea.vmem %s1, 526
    %2518 = vst [vmem:[%s2517] ss:$16 sm:$0x3] %v2516
    %s2519 = scalar_lea.vmem [#allocation0], 2160
    %v2520 = vld [vmem:[%s2519] sm:$0x3]
    %s2521 = scalar_lea.vmem %s1, 519
    %2522 = vst [vmem:[%s2521] ss:$16 sm:$0x3] %v2520
    %s2523 = scalar_lea.vmem [#allocation0], 2168
    %v2524 = vld [vmem:[%s2523] sm:$0x3]
    %s2525 = scalar_lea.vmem %s1, 527
    %2526 = vst [vmem:[%s2525] ss:$16 sm:$0x3] %v2524
    %s2527 = scalar_lea.vmem [#allocation0], 2176
    %v2528 = vld [vmem:[%s2527] sm:$0x3]
    %s2529 = scalar_lea.vmem %s1, 544
    %2530 = vst [vmem:[%s2529] ss:$16 sm:$0x3] %v2528
    %s2531 = scalar_lea.vmem [#allocation0], 2184
    %v2532 = vld [vmem:[%s2531] sm:$0x3]
    %s2533 = scalar_lea.vmem %s1, 552
    %2534 = vst [vmem:[%s2533] ss:$16 sm:$0x3] %v2532
    %s2535 = scalar_lea.vmem [#allocation0], 2192
    %v2536 = vld [vmem:[%s2535] sm:$0x3]
    %s2537 = scalar_lea.vmem %s1, 545
    %2538 = vst [vmem:[%s2537] ss:$16 sm:$0x3] %v2536
    %s2539 = scalar_lea.vmem [#allocation0], 2200
    %v2540 = vld [vmem:[%s2539] sm:$0x3]
    %s2541 = scalar_lea.vmem %s1, 553
    %2542 = vst [vmem:[%s2541] ss:$16 sm:$0x3] %v2540
    %s2543 = scalar_lea.vmem [#allocation0], 2208
    %v2544 = vld [vmem:[%s2543] sm:$0x3]
    %s2545 = scalar_lea.vmem %s1, 546
    %2546 = vst [vmem:[%s2545] ss:$16 sm:$0x3] %v2544
    %s2547 = scalar_lea.vmem [#allocation0], 2216
    %v2548 = vld [vmem:[%s2547] sm:$0x3]
    %s2549 = scalar_lea.vmem %s1, 554
    %2550 = vst [vmem:[%s2549] ss:$16 sm:$0x3] %v2548
    %s2551 = scalar_lea.vmem [#allocation0], 2224
    %v2552 = vld [vmem:[%s2551] sm:$0x3]
    %s2553 = scalar_lea.vmem %s1, 547
    %2554 = vst [vmem:[%s2553] ss:$16 sm:$0x3] %v2552
    %s2555 = scalar_lea.vmem [#allocation0], 2232
    %v2556 = vld [vmem:[%s2555] sm:$0x3]
    %s2557 = scalar_lea.vmem %s1, 555
    %2558 = vst [vmem:[%s2557] ss:$16 sm:$0x3] %v2556
    %s2559 = scalar_lea.vmem [#allocation0], 2240
    %v2560 = vld [vmem:[%s2559] sm:$0x3]
    %s2561 = scalar_lea.vmem %s1, 548
    %2562 = vst [vmem:[%s2561] ss:$16 sm:$0x3] %v2560
    %s2563 = scalar_lea.vmem [#allocation0], 2248
    %v2564 = vld [vmem:[%s2563] sm:$0x3]
    %s2565 = scalar_lea.vmem %s1, 556
    %2566 = vst [vmem:[%s2565] ss:$16 sm:$0x3] %v2564
    %s2567 = scalar_lea.vmem [#allocation0], 2256
    %v2568 = vld [vmem:[%s2567] sm:$0x3]
    %s2569 = scalar_lea.vmem %s1, 549
    %2570 = vst [vmem:[%s2569] ss:$16 sm:$0x3] %v2568
    %s2571 = scalar_lea.vmem [#allocation0], 2264
    %v2572 = vld [vmem:[%s2571] sm:$0x3]
    %s2573 = scalar_lea.vmem %s1, 557
    %2574 = vst [vmem:[%s2573] ss:$16 sm:$0x3] %v2572
    %s2575 = scalar_lea.vmem [#allocation0], 2272
    %v2576 = vld [vmem:[%s2575] sm:$0x3]
    %s2577 = scalar_lea.vmem %s1, 550
    %2578 = vst [vmem:[%s2577] ss:$16 sm:$0x3] %v2576
    %s2579 = scalar_lea.vmem [#allocation0], 2280
    %v2580 = vld [vmem:[%s2579] sm:$0x3]
    %s2581 = scalar_lea.vmem %s1, 558
    %2582 = vst [vmem:[%s2581] ss:$16 sm:$0x3] %v2580
    %s2583 = scalar_lea.vmem [#allocation0], 2288
    %v2584 = vld [vmem:[%s2583] sm:$0x3]
    %s2585 = scalar_lea.vmem %s1, 551
    %2586 = vst [vmem:[%s2585] ss:$16 sm:$0x3] %v2584
    %s2587 = scalar_lea.vmem [#allocation0], 2296
    %v2588 = vld [vmem:[%s2587] sm:$0x3]
    %s2589 = scalar_lea.vmem %s1, 559
    %2590 = vst [vmem:[%s2589] ss:$16 sm:$0x3] %v2588

// kernel: mv2block_forward.1
$region0: #{mv2block_forward.1}
  #allocation0 [shape = 'u32[]', space=smem, size = 0x4, offset = 0x4, fixed_abs, tag = 'smem constant byte address 0x4 - core index']
  #allocation1 [shape = 'u32[144,128]{1,0:T(1,128)}', space=vmem, size = 0x12000, scoped, tag = 'internal scratch']
  %s0 = inlined_call_operand.vmem [shape: f32[2,4,512], index: 0, kind: input, shape index: {}]
  %s1 = inlined_call_operand.vmem [shape: f32[16,4], index: 1, kind: input, shape index: {}]
  %s2 = inlined_call_operand.vmem [shape: f32[16,1], index: 2, kind: input, shape index: {}]
  %s3 = inlined_call_operand.vmem [shape: f32[9,16,512], index: 3, kind: input, shape index: {}]
  %s4 = inlined_call_operand.vmem [shape: f32[16,1], index: 4, kind: input, shape index: {}]
  %s5 = inlined_call_operand.vmem [shape: f32[4,16], index: 5, kind: input, shape index: {}]
  %s6 = inlined_call_operand.vmem [shape: f32[4,1], index: 6, kind: input, shape index: {}]
  %s7 = inlined_call_operand.vmem [shape: f32[2,4,512], index: 7, kind: output, shape index: {}]
  %s8 = sld [smem:[#allocation0]]
  $region61: #{mv2block_forward.1} parent=0
    _
  %s10 = ssub.s32 1, %s8
  %s11 = scalar_select 0, %s10, %s8
  loop: start=0, step=1, limit=4
  $region2: #{mv2block_forward.1} parent=0 // loop_pre_header
    _
  $region3: #{mv2block_forward.1} parent=0 // loop_header
    %s13 = sphi 0, %s17
    %p14 = scmp.ge.s32.totalorder %s13, 4
    %s23 = sphi 0, %s25
    %s26 = sphi 0, %s23
    %s27 = sphi 0, %s26
    %s43 = sphi 0, %s27
    %s47 = sphi 0, %s47
    %s49 = sphi 0, %s47
    %s50 = sphi 0, %s49
    %s64 = sphi 0, %s50
    %s68 = sphi 0, %s68
    %s70 = sphi 0, %s68
    %s71 = sphi 0, %s70
    %s85 = sphi 0, %s71
    %s89 = sphi 0, %s89
    %s91 = sphi 0, %s89
    %s92 = sphi 0, %s91
    %s106 = sphi 0, %s92
    %s110 = sphi 0, %s110
    %s112 = sphi 0, %s110
    %s113 = sphi 0, %s112
    %s127 = sphi 0, %s113
    %s131 = sphi 0, %s131
    %s133 = sphi 0, %s131
    %s134 = sphi 0, %s133
    %s148 = sphi 0, %s134
    %s152 = sphi 0, %s152
    %s154 = sphi 0, %s152
    %s155 = sphi 0, %s154
    %s169 = sphi 0, %s155
    %s175 = sphi 0, %s177
    %s178 = sphi 0, %s175
    %s179 = sphi 0, %s178
    %s195 = sphi 0, %s179
  $region4: #{mv2block_forward.1} parent=0 // loop_header_branch
    %16 = sbr.rel (%p14) target = $region8
  $region5: #{mv2block_forward.1} parent=0 // loop_body
    %s18 = ssub.s32 %s13, 1
    %s19 = ssub.s32 %s13, 2
    %s20 = sadd.s32 %s13, 1
    %s21 = ssub.s32 %s13, %s20
    %p22 = scmp.eq.s32.totalorder %s21, 0
    %s24 = sadd.s32 %s23, 1
    %s25 = scalar_select %p22, %s23, %s24
    %p28 = pneg %p22
    %p29 = scmp.eq.s32.totalorder %s13, 1
    %p30 = por %p28, %p29
    %p31 = scmp.ne.s32.totalorder %s23, %s26
    %p32 = scmp.eq.s32.totalorder %s13, 0
    %p33 = por %p31, %p32
    %p34 = scmp.ne.s32.totalorder %s23, %s26
    %p35 = scmp.eq.s32.totalorder %s18, 1
    %p36 = por %p34, %p35
    %p37 = scmp.ne.s32.totalorder %s26, %s27
    %p38 = scmp.eq.s32.totalorder %s18, 0
    %p39 = por %p37, %p38
    %p40 = scmp.ne.s32.totalorder %s26, %s27
    %p41 = scmp.eq.s32.totalorder %s19, 1
    %p42 = por %p40, %p41
    %p44 = scmp.ne.s32.totalorder %s27, %s43
    %p45 = scmp.eq.s32.totalorder %s19, 0
    %p46 = por %p44, %p45
    %s48 = sadd.s32 %s47, 1
    %p51 = scmp.eq.s32.totalorder %s13, 1
    %p52 = scmp.ne.s32.totalorder %s47, %s49
    %p53 = scmp.eq.s32.totalorder %s13, 0
    %p54 = por %p52, %p53
    %p55 = scmp.ne.s32.totalorder %s47, %s49
    %p56 = scmp.eq.s32.totalorder %s18, 1
    %p57 = por %p55, %p56
    %p58 = scmp.ne.s32.totalorder %s49, %s50
    %p59 = scmp.eq.s32.totalorder %s18, 0
    %p60 = por %p58, %p59
    %p61 = scmp.ne.s32.totalorder %s49, %s50
    %p62 = scmp.eq.s32.totalorder %s19, 1
    %p63 = por %p61, %p62
    %p65 = scmp.ne.s32.totalorder %s50, %s64
    %p66 = scmp.eq.s32.totalorder %s19, 0
    %p67 = por %p65, %p66
    %s69 = sadd.s32 %s68, 1
    %p72 = scmp.eq.s32.totalorder %s13, 1
    %p73 = scmp.ne.s32.totalorder %s68, %s70
    %p74 = scmp.eq.s32.totalorder %s13, 0
    %p75 = por %p73, %p74
    %p76 = scmp.ne.s32.totalorder %s68, %s70
    %p77 = scmp.eq.s32.totalorder %s18, 1
    %p78 = por %p76, %p77
    %p79 = scmp.ne.s32.totalorder %s70, %s71
    %p80 = scmp.eq.s32.totalorder %s18, 0
    %p81 = por %p79, %p80
    %p82 = scmp.ne.s32.totalorder %s70, %s71
    %p83 = scmp.eq.s32.totalorder %s19, 1
    %p84 = por %p82, %p83
    %p86 = scmp.ne.s32.totalorder %s71, %s85
    %p87 = scmp.eq.s32.totalorder %s19, 0
    %p88 = por %p86, %p87
    %s90 = sadd.s32 %s89, 1
    %p93 = scmp.eq.s32.totalorder %s13, 1
    %p94 = scmp.ne.s32.totalorder %s89, %s91
    %p95 = scmp.eq.s32.totalorder %s13, 0
    %p96 = por %p94, %p95
    %p97 = scmp.ne.s32.totalorder %s89, %s91
    %p98 = scmp.eq.s32.totalorder %s18, 1
    %p99 = por %p97, %p98
    %p100 = scmp.ne.s32.totalorder %s91, %s92
    %p101 = scmp.eq.s32.totalorder %s18, 0
    %p102 = por %p100, %p101
    %p103 = scmp.ne.s32.totalorder %s91, %s92
    %p104 = scmp.eq.s32.totalorder %s19, 1
    %p105 = por %p103, %p104
    %p107 = scmp.ne.s32.totalorder %s92, %s106
    %p108 = scmp.eq.s32.totalorder %s19, 0
    %p109 = por %p107, %p108
    %s111 = sadd.s32 %s110, 1
    %p114 = scmp.eq.s32.totalorder %s13, 1
    %p115 = scmp.ne.s32.totalorder %s110, %s112
    %p116 = scmp.eq.s32.totalorder %s13, 0
    %p117 = por %p115, %p116
    %p118 = scmp.ne.s32.totalorder %s110, %s112
    %p119 = scmp.eq.s32.totalorder %s18, 1
    %p120 = por %p118, %p119
    %p121 = scmp.ne.s32.totalorder %s112, %s113
    %p122 = scmp.eq.s32.totalorder %s18, 0
    %p123 = por %p121, %p122
    %p124 = scmp.ne.s32.totalorder %s112, %s113
    %p125 = scmp.eq.s32.totalorder %s19, 1
    %p126 = por %p124, %p125
    %p128 = scmp.ne.s32.totalorder %s113, %s127
    %p129 = scmp.eq.s32.totalorder %s19, 0
    %p130 = por %p128, %p129
    %s132 = sadd.s32 %s131, 1
    %p135 = scmp.eq.s32.totalorder %s13, 1
    %p136 = scmp.ne.s32.totalorder %s131, %s133
    %p137 = scmp.eq.s32.totalorder %s13, 0
    %p138 = por %p136, %p137
    %p139 = scmp.ne.s32.totalorder %s131, %s133
    %p140 = scmp.eq.s32.totalorder %s18, 1
    %p141 = por %p139, %p140
    %p142 = scmp.ne.s32.totalorder %s133, %s134
    %p143 = scmp.eq.s32.totalorder %s18, 0
    %p144 = por %p142, %p143
    %p145 = scmp.ne.s32.totalorder %s133, %s134
    %p146 = scmp.eq.s32.totalorder %s19, 1
    %p147 = por %p145, %p146
    %p149 = scmp.ne.s32.totalorder %s134, %s148
    %p150 = scmp.eq.s32.totalorder %s19, 0
    %p151 = por %p149, %p150
    %s153 = sadd.s32 %s152, 1
    %p156 = scmp.eq.s32.totalorder %s13, 1
    %p157 = scmp.ne.s32.totalorder %s152, %s154
    %p158 = scmp.eq.s32.totalorder %s13, 0
    %p159 = por %p157, %p158
    %p160 = scmp.ne.s32.totalorder %s152, %s154
    %p161 = scmp.eq.s32.totalorder %s18, 1
    %p162 = por %p160, %p161
    %p163 = scmp.ne.s32.totalorder %s154, %s155
    %p164 = scmp.eq.s32.totalorder %s18, 0
    %p165 = por %p163, %p164
    %p166 = scmp.ne.s32.totalorder %s154, %s155
    %p167 = scmp.eq.s32.totalorder %s19, 1
    %p168 = por %p166, %p167
    %p170 = scmp.ne.s32.totalorder %s155, %s169
    %p171 = scmp.eq.s32.totalorder %s19, 0
    %p172 = por %p170, %p171
    %s173 = ssub.s32 %s13, %s20
    %p174 = scmp.eq.s32.totalorder %s173, 0
    %s176 = sadd.s32 %s175, 1
    %s177 = scalar_select %p174, %s175, %s176
    %p180 = pneg %p174
    %p181 = scmp.eq.s32.totalorder %s13, 1
    %p182 = por %p180, %p181
    %p183 = scmp.ne.s32.totalorder %s175, %s178
    %p184 = scmp.eq.s32.totalorder %s13, 0
    %p185 = por %p183, %p184
    %p186 = scmp.ne.s32.totalorder %s175, %s178
    %p187 = scmp.eq.s32.totalorder %s18, 1
    %p188 = por %p186, %p187
    %p189 = scmp.ne.s32.totalorder %s178, %s179
    %p190 = scmp.eq.s32.totalorder %s18, 0
    %p191 = por %p189, %p190
    %p192 = scmp.ne.s32.totalorder %s178, %s179
    %p193 = scmp.eq.s32.totalorder %s19, 1
    %p194 = por %p192, %p193
    %p196 = scmp.ne.s32.totalorder %s179, %s195
    %p197 = scmp.eq.s32.totalorder %s19, 0
    %p198 = por %p196, %p197
    %p199 = scmp.le.s32.totalorder 1, %s13
    %p200 = scmp.lt.s32.totalorder %s13, 3
    %p201 = pnand %p199, %p200
    %p202 = pneg %p201
    // Predicated region
    $region9: #{mv2block_forward.1} parent=5 // pred_check
      _
    $region10: #{mv2block_forward.1} parent=5 // pred_check_branch
      %204 = sbr.rel (%p201) target = $region12
    $region11: #{mv2block_forward.1} parent=5 // pred_region
      %s205 = ssub.s32 %s13, 1
      // Predicated region
      $region13: #{mv2block_forward.1} parent=11 // pred_check
        %p206 = pneg %p60
      $region14: #{mv2block_forward.1} parent=11 // pred_check_branch
        %208 = sbr.rel (%p206) target = $region16
      $region15: #{mv2block_forward.1} parent=11 // pred_region
        _
      $region16: #{mv2block_forward.1} parent=11 // pred_fallthru
        _
      // Predicated region
      $region17: #{mv2block_forward.1} parent=11 // pred_check
        %p209 = pneg %p81
      $region18: #{mv2block_forward.1} parent=11 // pred_check_branch
        %211 = sbr.rel (%p209) target = $region20
      $region19: #{mv2block_forward.1} parent=11 // pred_region
        _
      $region20: #{mv2block_forward.1} parent=11 // pred_fallthru
        _
      // Predicated region
      $region21: #{mv2block_forward.1} parent=11 // pred_check
        %p212 = pneg %p102
      $region22: #{mv2block_forward.1} parent=11 // pred_check_branch
        %214 = sbr.rel (%p212) target = $region24
      $region23: #{mv2block_forward.1} parent=11 // pred_region
        _
      $region24: #{mv2block_forward.1} parent=11 // pred_fallthru
        _
      // Predicated region
      $region25: #{mv2block_forward.1} parent=11 // pred_check
        %p215 = pneg %p123
      $region26: #{mv2block_forward.1} parent=11 // pred_check_branch
        %217 = sbr.rel (%p215) target = $region28
      $region27: #{mv2block_forward.1} parent=11 // pred_region
        _
      $region28: #{mv2block_forward.1} parent=11 // pred_fallthru
        _
      // Predicated region
      $region29: #{mv2block_forward.1} parent=11 // pred_check
        %p218 = pneg %p144
      $region30: #{mv2block_forward.1} parent=11 // pred_check_branch
        %220 = sbr.rel (%p218) target = $region32
      $region31: #{mv2block_forward.1} parent=11 // pred_region
        _
      $region32: #{mv2block_forward.1} parent=11 // pred_fallthru
        _
      // Predicated region
      $region33: #{mv2block_forward.1} parent=11 // pred_check
        %p221 = pneg %p165
      $region34: #{mv2block_forward.1} parent=11 // pred_check_branch
        %223 = sbr.rel (%p221) target = $region36
      $region35: #{mv2block_forward.1} parent=11 // pred_region
        _
      $region36: #{mv2block_forward.1} parent=11 // pred_fallthru
        _
    $region12: #{mv2block_forward.1} parent=5 // pred_fallthru
      _
    %p224 = scmp.lt.s32.totalorder %s13, 2
    // Predicated region
    $region37: #{mv2block_forward.1} parent=5 // pred_check
      %p225 = pneg %p224
    $region38: #{mv2block_forward.1} parent=5 // pred_check_branch
      %227 = sbr.rel (%p225) target = $region40
    $region39: #{mv2block_forward.1} parent=5 // pred_region
      // Predicated region
      $region41: #{mv2block_forward.1} parent=39 // pred_check
        %p228 = pneg %p33
      $region42: #{mv2block_forward.1} parent=39 // pred_check_branch
        %230 = sbr.rel (%p228) target = $region44
      $region43: #{mv2block_forward.1} parent=39 // pred_region
        %p231 = scmp.lt.s32.totalorder %s13, 1
        %s232 = scalar_select %p231, %s13, 1
        %s233 = smul.addr %s232, 4
        %s234 = smul.addr %s233, 4
        %s235 = scalar_lea.vmem %s0, %s234
      $region44: #{mv2block_forward.1} parent=39 // pred_fallthru
        _
    $region40: #{mv2block_forward.1} parent=5 // pred_fallthru
      _
    %p236 = scmp.le.s32.totalorder 1, %s13
    %p237 = scmp.lt.s32.totalorder %s13, 3
    %p238 = pnand %p236, %p237
    %p239 = pneg %p238
    // Predicated region
    $region45: #{mv2block_forward.1} parent=5 // pred_check
      _
    $region46: #{mv2block_forward.1} parent=5 // pred_check_branch
      %241 = sbr.rel (%p238) target = $region48
    $region47: #{mv2block_forward.1} parent=5 // pred_region
      %s242 = ssub.s32 %s13, 1
      %p243 = scmp.lt.s32.totalorder %s18, 1
      %s244 = scalar_select %p243, %s18, 1
      %s245 = smul.addr %s244, 4
      %s246 = smul.addr %s245, 4
      %s247 = scalar_lea.vmem %s0, %s246
      %p248 = pneg %p39
      %p249 = pneg %p36
      %p250 = pneg %p60
      %p251 = pneg %p57
      %p252 = pneg %p81
      %p253 = pneg %p78
      %p254 = pneg %p102
      %p255 = pneg %p99
      %p256 = pneg %p123
      %p257 = pneg %p120
      %p258 = pneg %p144
      %p259 = pneg %p141
      %p260 = pneg %p165
      %p261 = pneg %p162
      %p262 = pneg %p191
      %p263 = pneg %p188
      %p264 = scmp.lt.s32.totalorder %s18, 1
      %s265 = scalar_select %p264, %s18, 1
      %s266 = smul.addr %s265, 4
      %s267 = smul.addr %s266, 4
      %s268 = scalar_lea.vmem %s7, %s267
      %p269 = scmp.lt.s32.totalorder %s18, 1
      %s270 = scalar_select %p269, %s18, 1
      %s271 = smul.addr %s270, 4
      %s272 = smul.addr %s271, 4
      %s273 = scalar_lea.vmem %s0, %s272
      %p274 = scmp.lt.s32.totalorder %s18, 1
      %s275 = scalar_select %p274, %s18, 1
      %s276 = smul.addr %s275, 4
      %s277 = smul.addr %s276, 4
      %s278 = scalar_lea.vmem %s7, %s277
      %v279 = vld [vmem:[%s273] sm:$0xff]
      %v280 = vld [vmem:[%s273 + $0x8] sm:$0xff]
      %v281 = vld [vmem:[%s1] sm:$0xff]
      %v282 = vld [vmem:[%s1 + $0x8] sm:$0xff]
      %v283 = vld [vmem:[%s2] sm:$0xff]
      %v284 = vld [vmem:[%s2 + $0x8] sm:$0xff]
      %286 = vset.pattern.permute.xlu0 0
      %287 = vperm.xlu0 %286, %v283
      %v288 = vpop.permute.xlu0 %287
      %291 = vset.pattern.permute.xlu0 0
      %292 = vperm.xlu0 %291, %v284
      %v293 = vpop.permute.xlu0 %292
      %v297 = vcombine.high %v279, %v279
      %v298 = vcombine.high %v280, %v280
      %vm299 = vcmask 31744
      %v301 = vsel %vm299, %v281, 0
      %v304 = vsel %vm299, %v282, 0
      %vm306 = vcmask 1043456
      %v307 = vsel %vm306, %v279, 0
      %v309 = vsel %vm306, %v297, 0
      %v311 = vsel %vm306, %v280, 0
      %v313 = vsel %vm306, %v298, 0
      %315 = vmatprep.subr.mxu0 0.0
      %316 = vmatpush1.msra.mxu0 0.0
      %317 = vmatprep.subr.mxu0 0.0
      %318 = vmatpush1.msra.mxu0 0.0
      %319 = vmatprep.subr.mxu0 0.0
      %320 = vmatpush1.msra.mxu0 0.0
      %321 = vmatprep.subr.mxu0 0.0
      %322 = vmatpush1.msra.mxu0 0.0
      %323 = vmatprep.subr.mxu0 0.0
      %324 = vmatpush1.msra.mxu0 0.0
      %325 = vmatprep.subr.mxu0 0.0
      %326 = vmatpush1.msra.mxu0 0.0
      %327 = vmatprep.subr.mxu0 0.0
      %328 = vmatpush1.msra.mxu0 0.0
      %329 = vmatprep.subr.mxu0 0.0
      %330 = vmatpush1.msra.mxu0 0.0
      %331 = vmatprep.subr.mxu0 0.0
      %332 = vmatpush1.msra.mxu0 0.0
      %333 = vmatprep.subr.mxu0 0.0
      %334 = vmatpush1.msra.mxu0 0.0
      %335 = vmatprep.subr.mxu0 0.0
      %336 = vmatpush1.msra.mxu0 0.0
      %337 = vmatprep.subr.mxu0 0.0
      %338 = vmatpush1.msra.mxu0 0.0
      %339 = vmatprep.subr.mxu0 0.0
      %340 = vmatpush1.msra.mxu0 0.0
      %341 = vmatprep.subr.mxu0 0.0
      %342 = vmatpush1.msra.mxu0 0.0
      %343 = vmatprep.subr.mxu0 0.0
      %344 = vmatpush1.msra.mxu0 0.0
      %345 = vmatprep.subr.mxu0 %v309
      %346 = vmatpush1.msra.mxu0 %v307
      %347 = vmatprep.subr.mxu0 0.0
      %348 = vmatpush2.msra.mxu0 0.0
      %349 = vmatprep.subr.mxu0 0.0
      %350 = vmatpush2.msra.mxu0 0.0
      %351 = vmatprep.subr.mxu0 0.0
      %352 = vmatpush2.msra.mxu0 0.0
      %353 = vmatprep.subr.mxu0 0.0
      %354 = vmatpush2.msra.mxu0 0.0
      %355 = vmatprep.subr.mxu0 0.0
      %356 = vmatpush2.msra.mxu0 0.0
      %357 = vmatprep.subr.mxu0 0.0
      %358 = vmatpush2.msra.mxu0 0.0
      %359 = vmatprep.subr.mxu0 0.0
      %360 = vmatpush2.msra.mxu0 0.0
      %361 = vmatprep.subr.mxu0 0.0
      %362 = vmatpush2.msra.mxu0 0.0
      %363 = vmatprep.subr.mxu0 0.0
      %364 = vmatpush2.msra.mxu0 0.0
      %365 = vmatprep.subr.mxu0 0.0
      %366 = vmatpush2.msra.mxu0 0.0
      %367 = vmatprep.subr.mxu0 0.0
      %368 = vmatpush2.msra.mxu0 0.0
      %369 = vmatprep.subr.mxu0 0.0
      %370 = vmatpush2.msra.mxu0 0.0
      %371 = vmatprep.subr.mxu0 0.0
      %372 = vmatpush2.msra.mxu0 0.0
      %373 = vmatprep.subr.mxu0 0.0
      %374 = vmatpush2.msra.mxu0 0.0
      %375 = vmatprep.subr.mxu0 0.0
      %376 = vmatpush2.msra.mxu0 0.0
      %377 = vmatprep.subr.mxu0 0.0
      %378 = vmatpush2.msra.mxu0 0.0
      %379 = vmatprep.mubr.f32.mxu0 0.0
      %380 = vmatmul.mubr.f32.gmra.mxu0 %v301
      %v381 = vpop.f32.mrf.mxu0
      %v382 = vadd.f32 %v288, %v381
      %v383 = vpop.f32.mrf.mxu0
      %v384 = vadd.f32 %v288, %v383
      %385 = vmatprep.mubr.f32.mxu0 0.0
      %386 = vmatmul.mubr.f32.gmra.mxu0 %v304
      %v387 = vpop.f32.mrf.mxu0
      %v388 = vadd.f32 %v293, %v387
      %v389 = vpop.f32.mrf.mxu0
      %v390 = vadd.f32 %v293, %v389
      %391 = vdwg.mxu0
      %392 = vmatprep.subr.mxu0 0.0
      %393 = vmatpush1.msra.mxu0 0.0
      %394 = vmatprep.subr.mxu0 0.0
      %395 = vmatpush1.msra.mxu0 0.0
      %396 = vmatprep.subr.mxu0 0.0
      %397 = vmatpush1.msra.mxu0 0.0
      %398 = vmatprep.subr.mxu0 0.0
      %399 = vmatpush1.msra.mxu0 0.0
      %400 = vmatprep.subr.mxu0 0.0
      %401 = vmatpush1.msra.mxu0 0.0
      %402 = vmatprep.subr.mxu0 0.0
      %403 = vmatpush1.msra.mxu0 0.0
      %404 = vmatprep.subr.mxu0 0.0
      %405 = vmatpush1.msra.mxu0 0.0
      %406 = vmatprep.subr.mxu0 0.0
      %407 = vmatpush1.msra.mxu0 0.0
      %408 = vmatprep.subr.mxu0 0.0
      %409 = vmatpush1.msra.mxu0 0.0
      %410 = vmatprep.subr.mxu0 0.0
      %411 = vmatpush1.msra.mxu0 0.0
      %412 = vmatprep.subr.mxu0 0.0
      %413 = vmatpush1.msra.mxu0 0.0
      %414 = vmatprep.subr.mxu0 0.0
      %415 = vmatpush1.msra.mxu0 0.0
      %416 = vmatprep.subr.mxu0 0.0
      %417 = vmatpush1.msra.mxu0 0.0
      %418 = vmatprep.subr.mxu0 0.0
      %419 = vmatpush1.msra.mxu0 0.0
      %420 = vmatprep.subr.mxu0 0.0
      %421 = vmatpush1.msra.mxu0 0.0
      %422 = vmatprep.subr.mxu0 %v313
      %423 = vmatpush1.msra.mxu0 %v311
      %424 = vmatprep.subr.mxu0 0.0
      %425 = vmatpush2.msra.mxu0 0.0
      %426 = vmatprep.subr.mxu0 0.0
      %427 = vmatpush2.msra.mxu0 0.0
      %428 = vmatprep.subr.mxu0 0.0
      %429 = vmatpush2.msra.mxu0 0.0
      %430 = vmatprep.subr.mxu0 0.0
      %431 = vmatpush2.msra.mxu0 0.0
      %432 = vmatprep.subr.mxu0 0.0
      %433 = vmatpush2.msra.mxu0 0.0
      %434 = vmatprep.subr.mxu0 0.0
      %435 = vmatpush2.msra.mxu0 0.0
      %436 = vmatprep.subr.mxu0 0.0
      %437 = vmatpush2.msra.mxu0 0.0
      %438 = vmatprep.subr.mxu0 0.0
      %439 = vmatpush2.msra.mxu0 0.0
      %440 = vmatprep.subr.mxu0 0.0
      %441 = vmatpush2.msra.mxu0 0.0
      %442 = vmatprep.subr.mxu0 0.0
      %443 = vmatpush2.msra.mxu0 0.0
      %444 = vmatprep.subr.mxu0 0.0
      %445 = vmatpush2.msra.mxu0 0.0
      %446 = vmatprep.subr.mxu0 0.0
      %447 = vmatpush2.msra.mxu0 0.0
      %448 = vmatprep.subr.mxu0 0.0
      %449 = vmatpush2.msra.mxu0 0.0
      %450 = vmatprep.subr.mxu0 0.0
      %451 = vmatpush2.msra.mxu0 0.0
      %452 = vmatprep.subr.mxu0 0.0
      %453 = vmatpush2.msra.mxu0 0.0
      %454 = vmatprep.subr.mxu0 0.0
      %455 = vmatpush2.msra.mxu0 0.0
      %456 = vmatprep.mubr.f32.mxu0 0.0
      %457 = vmatmul.mubr.f32.gmra.mxu0 %v301
      %v458 = vpop.f32.mrf.mxu0
      %v459 = vadd.f32 %v288, %v458
      %v460 = vpop.f32.mrf.mxu0
      %v461 = vadd.f32 %v288, %v460
      %462 = vmatprep.mubr.f32.mxu0 0.0
      %463 = vmatmul.mubr.f32.gmra.mxu0 %v304
      %v464 = vpop.f32.mrf.mxu0
      %v465 = vadd.f32 %v293, %v464
      %v466 = vpop.f32.mrf.mxu0
      %v467 = vadd.f32 %v293, %v466
      %468 = vdwg.mxu0
      %v469 = vsub.f32 0.0, %v382
      %v470 = vsub.f32 0.0, %v384
      %v471 = vsub.f32 0.0, %v459
      %v472 = vsub.f32 0.0, %v461
      %v473 = vsub.f32 0.0, %v388
      %v474 = vsub.f32 0.0, %v390
      %v475 = vsub.f32 0.0, %v465
      %v476 = vsub.f32 0.0, %v467
      %v477 = vmul.f32 %v469, 1.442695
      %v478 = vpow.pop %v477
      %v479 = vmul.f32 %v470, 1.442695
      %v480 = vpow.pop %v479
      %v481 = vmul.f32 %v471, 1.442695
      %v482 = vpow.pop %v481
      %v483 = vmul.f32 %v472, 1.442695
      %v484 = vpow.pop %v483
      %v485 = vmul.f32 %v473, 1.442695
      %v486 = vpow.pop %v485
      %v487 = vmul.f32 %v474, 1.442695
      %v488 = vpow.pop %v487
      %v489 = vmul.f32 %v475, 1.442695
      %v490 = vpow.pop %v489
      %v491 = vmul.f32 %v476, 1.442695
      %v492 = vpow.pop %v491
      %v493 = vadd.f32 %v478, 1.0
      %v494 = vadd.f32 %v480, 1.0
      %v495 = vadd.f32 %v482, 1.0
      %v496 = vadd.f32 %v484, 1.0
      %v497 = vadd.f32 %v486, 1.0
      %v498 = vadd.f32 %v488, 1.0
      %v499 = vadd.f32 %v490, 1.0
      %v500 = vadd.f32 %v492, 1.0
      %v501 = vrcp.pop %v493
      %v502 = vrcp.pop %v494
      %v503 = vrcp.pop %v495
      %v504 = vrcp.pop %v496
      %v505 = vrcp.pop %v497
      %v506 = vrcp.pop %v498
      %v507 = vrcp.pop %v499
      %v508 = vrcp.pop %v500
      %v509 = vmul.f32 %v382, %v501
      %v510 = vmul.f32 %v384, %v502
      %v511 = vmul.f32 %v459, %v503
      %v512 = vmul.f32 %v461, %v504
      %v513 = vmul.f32 %v388, %v505
      %v514 = vmul.f32 %v390, %v506
      %v515 = vmul.f32 %v465, %v507
      %v516 = vmul.f32 %v467, %v508
      %s517 = scalar_lea.vmem %s3, 256
      %v518 = vld [vmem:[%s517] sm:$0xff]
      %v519 = vld [vmem:[%s517 + $0x8] sm:$0xff]
      %v520 = vld [vmem:[%s517 + $0x10] sm:$0xff]
      %v521 = vld [vmem:[%s517 + $0x18] sm:$0xff]
      %v522 = vld [vmem:[%s517 + $0x20] sm:$0xff]
      %v523 = vld [vmem:[%s517 + $0x28] sm:$0xff]
      %v524 = vld [vmem:[%s517 + $0x30] sm:$0xff]
      %v525 = vld [vmem:[%s517 + $0x38] sm:$0xff]
      %v526 = vmul.f32 %v509, %v518
      %v527 = vmul.f32 %v510, %v519
      %v528 = vmul.f32 %v511, %v520
      %v529 = vmul.f32 %v512, %v521
      %v530 = vmul.f32 %v513, %v522
      %v531 = vmul.f32 %v514, %v523
      %v532 = vmul.f32 %v515, %v524
      %v533 = vmul.f32 %v516, %v525
      %534 = vrot.lane.b32.xlu0 %v509, 17
      %v535 = vpop.permute.xlu0 %534
      %536 = vrot.lane.b32.xlu0 %v513, 17
      %v537 = vpop.permute.xlu0 %536
      %538 = vrot.lane.b32.xlu0 %v510, 17
      %v539 = vpop.permute.xlu0 %538
      %540 = vrot.lane.b32.xlu0 %v514, 17
      %v541 = vpop.permute.xlu0 %540
      %542 = vrot.lane.b32.xlu0 %v511, 17
      %v543 = vpop.permute.xlu0 %542
      %544 = vrot.lane.b32.xlu0 %v515, 17
      %v545 = vpop.permute.xlu0 %544
      %546 = vrot.lane.b32.xlu0 %v512, 17
      %v547 = vpop.permute.xlu0 %546
      %548 = vrot.lane.b32.xlu0 %v516, 17
      %v549 = vpop.permute.xlu0 %548
      %v550 = vlaneseq
      %v551 = vand.u32 %v550, 127
      %vm552 = vcmp.lt.s32.totalorder %v551, 17
      %v553 = vsel %vm552, %v543, %v547
      %v554 = vsel %vm552, %v545, %v549
      %v555 = vsel %vm552, %v539, %v543
      %v556 = vsel %vm552, %v541, %v545
      %v557 = vsel %vm552, %v535, %v539
      %v558 = vsel %vm552, %v537, %v541
      %v559 = vsel %vm552, %v547, %v535
      %v560 = vsel %vm552, %v549, %v537
      %v561 = vld [vmem:[%s3] sm:$0xff]
      %v562 = vld [vmem:[%s3 + $0x8] sm:$0xff]
      %v563 = vld [vmem:[%s3 + $0x10] sm:$0xff]
      %v564 = vld [vmem:[%s3 + $0x18] sm:$0xff]
      %v565 = vld [vmem:[%s3 + $0x20] sm:$0xff]
      %v566 = vld [vmem:[%s3 + $0x28] sm:$0xff]
      %v567 = vld [vmem:[%s3 + $0x30] sm:$0xff]
      %v568 = vld [vmem:[%s3 + $0x38] sm:$0xff]
      %v569 = vmul.f32 %v559, %v561
      %v570 = vmul.f32 %v557, %v562
      %v571 = vmul.f32 %v555, %v563
      %v572 = vmul.f32 %v553, %v564
      %v573 = vmul.f32 %v560, %v565
      %v574 = vmul.f32 %v558, %v566
      %v575 = vmul.f32 %v556, %v567
      %v576 = vmul.f32 %v554, %v568
      %v577 = vadd.f32 %v526, %v569
      %v578 = vadd.f32 %v527, %v570
      %v579 = vadd.f32 %v528, %v571
      %v580 = vadd.f32 %v529, %v572
      %v581 = vadd.f32 %v530, %v573
      %v582 = vadd.f32 %v531, %v574
      %v583 = vadd.f32 %v532, %v575
      %v584 = vadd.f32 %v533, %v576
      %585 = vrot.lane.b32.xlu0 %v509, 16
      %v586 = vpop.permute.xlu0 %585
      %587 = vrot.lane.b32.xlu0 %v513, 16
      %v588 = vpop.permute.xlu0 %587
      %589 = vrot.lane.b32.xlu0 %v510, 16
      %v590 = vpop.permute.xlu0 %589
      %591 = vrot.lane.b32.xlu0 %v514, 16
      %v592 = vpop.permute.xlu0 %591
      %593 = vrot.lane.b32.xlu0 %v511, 16
      %v594 = vpop.permute.xlu0 %593
      %595 = vrot.lane.b32.xlu0 %v515, 16
      %v596 = vpop.permute.xlu0 %595
      %597 = vrot.lane.b32.xlu0 %v512, 16
      %v598 = vpop.permute.xlu0 %597
      %599 = vrot.lane.b32.xlu0 %v516, 16
      %v600 = vpop.permute.xlu0 %599
      %vm601 = vcmp.lt.s32.totalorder %v551, 16
      %v602 = vsel %vm601, %v594, %v598
      %v603 = vsel %vm601, %v596, %v600
      %v604 = vsel %vm601, %v590, %v594
      %v605 = vsel %vm601, %v592, %v596
      %v606 = vsel %vm601, %v586, %v590
      %v607 = vsel %vm601, %v588, %v592
      %v608 = vsel %vm601, %v598, %v586
      %v609 = vsel %vm601, %v600, %v588
      %s610 = scalar_lea.vmem %s3, 64
      %v611 = vld [vmem:[%s610] sm:$0xff]
      %v612 = vld [vmem:[%s610 + $0x8] sm:$0xff]
      %v613 = vld [vmem:[%s610 + $0x10] sm:$0xff]
      %v614 = vld [vmem:[%s610 + $0x18] sm:$0xff]
      %v615 = vld [vmem:[%s610 + $0x20] sm:$0xff]
      %v616 = vld [vmem:[%s610 + $0x28] sm:$0xff]
      %v617 = vld [vmem:[%s610 + $0x30] sm:$0xff]
      %v618 = vld [vmem:[%s610 + $0x38] sm:$0xff]
      %v619 = vmul.f32 %v608, %v611
      %v620 = vmul.f32 %v606, %v612
      %v621 = vmul.f32 %v604, %v613
      %v622 = vmul.f32 %v602, %v614
      %v623 = vmul.f32 %v609, %v615
      %v624 = vmul.f32 %v607, %v616
      %v625 = vmul.f32 %v605, %v617
      %v626 = vmul.f32 %v603, %v618
      %v627 = vadd.f32 %v577, %v619
      %v628 = vadd.f32 %v578, %v620
      %v629 = vadd.f32 %v579, %v621
      %v630 = vadd.f32 %v580, %v622
      %v631 = vadd.f32 %v581, %v623
      %v632 = vadd.f32 %v582, %v624
      %v633 = vadd.f32 %v583, %v625
      %v634 = vadd.f32 %v584, %v626
      %635 = vrot.lane.b32.xlu0 %v509, 15
      %v636 = vpop.permute.xlu0 %635
      %637 = vrot.lane.b32.xlu0 %v513, 15
      %v638 = vpop.permute.xlu0 %637
      %639 = vrot.lane.b32.xlu0 %v510, 15
      %v640 = vpop.permute.xlu0 %639
      %641 = vrot.lane.b32.xlu0 %v514, 15
      %v642 = vpop.permute.xlu0 %641
      %643 = vrot.lane.b32.xlu0 %v511, 15
      %v644 = vpop.permute.xlu0 %643
      %645 = vrot.lane.b32.xlu0 %v515, 15
      %v646 = vpop.permute.xlu0 %645
      %647 = vrot.lane.b32.xlu0 %v512, 15
      %v648 = vpop.permute.xlu0 %647
      %649 = vrot.lane.b32.xlu0 %v516, 15
      %v650 = vpop.permute.xlu0 %649
      %vm651 = vcmp.lt.s32.totalorder %v551, 15
      %v652 = vsel %vm651, %v644, %v648
      %v653 = vsel %vm651, %v646, %v650
      %v654 = vsel %vm651, %v640, %v644
      %v655 = vsel %vm651, %v642, %v646
      %v656 = vsel %vm651, %v636, %v640
      %v657 = vsel %vm651, %v638, %v642
      %v658 = vsel %vm651, %v648, %v636
      %v659 = vsel %vm651, %v650, %v638
      %s660 = scalar_lea.vmem %s3, 128
      %v661 = vld [vmem:[%s660] sm:$0xff]
      %v662 = vld [vmem:[%s660 + $0x8] sm:$0xff]
      %v663 = vld [vmem:[%s660 + $0x10] sm:$0xff]
      %v664 = vld [vmem:[%s660 + $0x18] sm:$0xff]
      %v665 = vld [vmem:[%s660 + $0x20] sm:$0xff]
      %v666 = vld [vmem:[%s660 + $0x28] sm:$0xff]
      %v667 = vld [vmem:[%s660 + $0x30] sm:$0xff]
      %v668 = vld [vmem:[%s660 + $0x38] sm:$0xff]
      %v669 = vmul.f32 %v658, %v661
      %v670 = vmul.f32 %v656, %v662
      %v671 = vmul.f32 %v654, %v663
      %v672 = vmul.f32 %v652, %v664
      %v673 = vmul.f32 %v659, %v665
      %v674 = vmul.f32 %v657, %v666
      %v675 = vmul.f32 %v655, %v667
      %v676 = vmul.f32 %v653, %v668
      %v677 = vadd.f32 %v627, %v669
      %v678 = vadd.f32 %v628, %v670
      %v679 = vadd.f32 %v629, %v671
      %v680 = vadd.f32 %v630, %v672
      %v681 = vadd.f32 %v631, %v673
      %v682 = vadd.f32 %v632, %v674
      %v683 = vadd.f32 %v633, %v675
      %v684 = vadd.f32 %v634, %v676
      %685 = vrot.lane.b32.xlu0 %v509, 1
      %v686 = vpop.permute.xlu0 %685
      %687 = vrot.lane.b32.xlu0 %v513, 1
      %v688 = vpop.permute.xlu0 %687
      %689 = vrot.lane.b32.xlu0 %v510, 1
      %v690 = vpop.permute.xlu0 %689
      %691 = vrot.lane.b32.xlu0 %v514, 1
      %v692 = vpop.permute.xlu0 %691
      %693 = vrot.lane.b32.xlu0 %v511, 1
      %v694 = vpop.permute.xlu0 %693
      %695 = vrot.lane.b32.xlu0 %v515, 1
      %v696 = vpop.permute.xlu0 %695
      %697 = vrot.lane.b32.xlu0 %v512, 1
      %v698 = vpop.permute.xlu0 %697
      %699 = vrot.lane.b32.xlu0 %v516, 1
      %v700 = vpop.permute.xlu0 %699
      %vm701 = vcmp.lt.s32.totalorder %v551, 1
      %v702 = vsel %vm701, %v694, %v698
      %v703 = vsel %vm701, %v696, %v700
      %v704 = vsel %vm701, %v690, %v694
      %v705 = vsel %vm701, %v692, %v696
      %v706 = vsel %vm701, %v686, %v690
      %v707 = vsel %vm701, %v688, %v692
      %v708 = vsel %vm701, %v698, %v686
      %v709 = vsel %vm701, %v700, %v688
      %s710 = scalar_lea.vmem %s3, 192
      %v711 = vld [vmem:[%s710] sm:$0xff]
      %v712 = vld [vmem:[%s710 + $0x8] sm:$0xff]
      %v713 = vld [vmem:[%s710 + $0x10] sm:$0xff]
      %v714 = vld [vmem:[%s710 + $0x18] sm:$0xff]
      %v715 = vld [vmem:[%s710 + $0x20] sm:$0xff]
      %v716 = vld [vmem:[%s710 + $0x28] sm:$0xff]
      %v717 = vld [vmem:[%s710 + $0x30] sm:$0xff]
      %v718 = vld [vmem:[%s710 + $0x38] sm:$0xff]
      %v719 = vmul.f32 %v708, %v711
      %v720 = vmul.f32 %v706, %v712
      %v721 = vmul.f32 %v704, %v713
      %v722 = vmul.f32 %v702, %v714
      %v723 = vmul.f32 %v709, %v715
      %v724 = vmul.f32 %v707, %v716
      %v725 = vmul.f32 %v705, %v717
      %v726 = vmul.f32 %v703, %v718
      %v727 = vadd.f32 %v677, %v719
      %v728 = vadd.f32 %v678, %v720
      %v729 = vadd.f32 %v679, %v721
      %v730 = vadd.f32 %v680, %v722
      %v731 = vadd.f32 %v681, %v723
      %v732 = vadd.f32 %v682, %v724
      %v733 = vadd.f32 %v683, %v725
      %v734 = vadd.f32 %v684, %v726
      %735 = vrot.lane.b32.xlu0 %v509, 127
      %v736 = vpop.permute.xlu0 %735
      %737 = vrot.lane.b32.xlu0 %v513, 127
      %v738 = vpop.permute.xlu0 %737
      %739 = vrot.lane.b32.xlu0 %v510, 127
      %v740 = vpop.permute.xlu0 %739
      %741 = vrot.lane.b32.xlu0 %v514, 127
      %v742 = vpop.permute.xlu0 %741
      %743 = vrot.lane.b32.xlu0 %v511, 127
      %v744 = vpop.permute.xlu0 %743
      %745 = vrot.lane.b32.xlu0 %v515, 127
      %v746 = vpop.permute.xlu0 %745
      %747 = vrot.lane.b32.xlu0 %v512, 127
      %v748 = vpop.permute.xlu0 %747
      %749 = vrot.lane.b32.xlu0 %v516, 127
      %v750 = vpop.permute.xlu0 %749
      %vm751 = vcmp.lt.s32.totalorder %v551, 127
      %v752 = vsel %vm751, %v744, %v748
      %v753 = vsel %vm751, %v746, %v750
      %v754 = vsel %vm751, %v740, %v744
      %v755 = vsel %vm751, %v742, %v746
      %v756 = vsel %vm751, %v736, %v740
      %v757 = vsel %vm751, %v738, %v742
      %v758 = vsel %vm751, %v748, %v736
      %v759 = vsel %vm751, %v750, %v738
      %s760 = scalar_lea.vmem %s3, 320
      %v761 = vld [vmem:[%s760] sm:$0xff]
      %v762 = vld [vmem:[%s760 + $0x8] sm:$0xff]
      %v763 = vld [vmem:[%s760 + $0x10] sm:$0xff]
      %v764 = vld [vmem:[%s760 + $0x18] sm:$0xff]
      %v765 = vld [vmem:[%s760 + $0x20] sm:$0xff]
      %v766 = vld [vmem:[%s760 + $0x28] sm:$0xff]
      %v767 = vld [vmem:[%s760 + $0x30] sm:$0xff]
      %v768 = vld [vmem:[%s760 + $0x38] sm:$0xff]
      %v769 = vmul.f32 %v756, %v761
      %v770 = vmul.f32 %v754, %v762
      %v771 = vmul.f32 %v752, %v763
      %v772 = vmul.f32 %v758, %v764
      %v773 = vmul.f32 %v757, %v765
      %v774 = vmul.f32 %v755, %v766
      %v775 = vmul.f32 %v753, %v767
      %v776 = vmul.f32 %v759, %v768
      %v777 = vadd.f32 %v727, %v769
      %v778 = vadd.f32 %v728, %v770
      %v779 = vadd.f32 %v729, %v771
      %v780 = vadd.f32 %v730, %v772
      %v781 = vadd.f32 %v731, %v773
      %v782 = vadd.f32 %v732, %v774
      %v783 = vadd.f32 %v733, %v775
      %v784 = vadd.f32 %v734, %v776
      %785 = vrot.lane.b32.xlu0 %v509, 113
      %v786 = vpop.permute.xlu0 %785
      %787 = vrot.lane.b32.xlu0 %v513, 113
      %v788 = vpop.permute.xlu0 %787
      %789 = vrot.lane.b32.xlu0 %v510, 113
      %v790 = vpop.permute.xlu0 %789
      %791 = vrot.lane.b32.xlu0 %v514, 113
      %v792 = vpop.permute.xlu0 %791
      %793 = vrot.lane.b32.xlu0 %v511, 113
      %v794 = vpop.permute.xlu0 %793
      %795 = vrot.lane.b32.xlu0 %v515, 113
      %v796 = vpop.permute.xlu0 %795
      %797 = vrot.lane.b32.xlu0 %v512, 113
      %v798 = vpop.permute.xlu0 %797
      %799 = vrot.lane.b32.xlu0 %v516, 113
      %v800 = vpop.permute.xlu0 %799
      %vm801 = vcmp.lt.s32.totalorder %v551, 113
      %v802 = vsel %vm801, %v794, %v798
      %v803 = vsel %vm801, %v796, %v800
      %v804 = vsel %vm801, %v790, %v794
      %v805 = vsel %vm801, %v792, %v796
      %v806 = vsel %vm801, %v786, %v790
      %v807 = vsel %vm801, %v788, %v792
      %v808 = vsel %vm801, %v798, %v786
      %v809 = vsel %vm801, %v800, %v788
      %s810 = scalar_lea.vmem %s3, 384
      %v811 = vld [vmem:[%s810] sm:$0xff]
      %v812 = vld [vmem:[%s810 + $0x8] sm:$0xff]
      %v813 = vld [vmem:[%s810 + $0x10] sm:$0xff]
      %v814 = vld [vmem:[%s810 + $0x18] sm:$0xff]
      %v815 = vld [vmem:[%s810 + $0x20] sm:$0xff]
      %v816 = vld [vmem:[%s810 + $0x28] sm:$0xff]
      %v817 = vld [vmem:[%s810 + $0x30] sm:$0xff]
      %v818 = vld [vmem:[%s810 + $0x38] sm:$0xff]
      %v819 = vmul.f32 %v806, %v811
      %v820 = vmul.f32 %v804, %v812
      %v821 = vmul.f32 %v802, %v813
      %v822 = vmul.f32 %v808, %v814
      %v823 = vmul.f32 %v807, %v815
      %v824 = vmul.f32 %v805, %v816
      %v825 = vmul.f32 %v803, %v817
      %v826 = vmul.f32 %v809, %v818
      %v827 = vadd.f32 %v777, %v819
      %v828 = vadd.f32 %v778, %v820
      %v829 = vadd.f32 %v779, %v821
      %v830 = vadd.f32 %v780, %v822
      %v831 = vadd.f32 %v781, %v823
      %v832 = vadd.f32 %v782, %v824
      %v833 = vadd.f32 %v783, %v825
      %v834 = vadd.f32 %v784, %v826
      %835 = vrot.lane.b32.xlu0 %v509, 112
      %v836 = vpop.permute.xlu0 %835
      %837 = vrot.lane.b32.xlu0 %v513, 112
      %v838 = vpop.permute.xlu0 %837
      %839 = vrot.lane.b32.xlu0 %v510, 112
      %v840 = vpop.permute.xlu0 %839
      %841 = vrot.lane.b32.xlu0 %v514, 112
      %v842 = vpop.permute.xlu0 %841
      %843 = vrot.lane.b32.xlu0 %v511, 112
      %v844 = vpop.permute.xlu0 %843
      %845 = vrot.lane.b32.xlu0 %v515, 112
      %v846 = vpop.permute.xlu0 %845
      %847 = vrot.lane.b32.xlu0 %v512, 112
      %v848 = vpop.permute.xlu0 %847
      %849 = vrot.lane.b32.xlu0 %v516, 112
      %v850 = vpop.permute.xlu0 %849
      %vm851 = vcmp.lt.s32.totalorder %v551, 112
      %v852 = vsel %vm851, %v844, %v848
      %v853 = vsel %vm851, %v846, %v850
      %v854 = vsel %vm851, %v840, %v844
      %v855 = vsel %vm851, %v842, %v846
      %v856 = vsel %vm851, %v836, %v840
      %v857 = vsel %vm851, %v838, %v842
      %v858 = vsel %vm851, %v848, %v836
      %v859 = vsel %vm851, %v850, %v838
      %s860 = scalar_lea.vmem %s3, 448
      %v861 = vld [vmem:[%s860] sm:$0xff]
      %v862 = vld [vmem:[%s860 + $0x8] sm:$0xff]
      %v863 = vld [vmem:[%s860 + $0x10] sm:$0xff]
      %v864 = vld [vmem:[%s860 + $0x18] sm:$0xff]
      %v865 = vld [vmem:[%s860 + $0x20] sm:$0xff]
      %v866 = vld [vmem:[%s860 + $0x28] sm:$0xff]
      %v867 = vld [vmem:[%s860 + $0x30] sm:$0xff]
      %v868 = vld [vmem:[%s860 + $0x38] sm:$0xff]
      %v869 = vmul.f32 %v856, %v861
      %v870 = vmul.f32 %v854, %v862
      %v871 = vmul.f32 %v852, %v863
      %v872 = vmul.f32 %v858, %v864
      %v873 = vmul.f32 %v857, %v865
      %v874 = vmul.f32 %v855, %v866
      %v875 = vmul.f32 %v853, %v867
      %v876 = vmul.f32 %v859, %v868
      %v877 = vadd.f32 %v827, %v869
      %v878 = vadd.f32 %v828, %v870
      %v879 = vadd.f32 %v829, %v871
      %v880 = vadd.f32 %v830, %v872
      %v881 = vadd.f32 %v831, %v873
      %v882 = vadd.f32 %v832, %v874
      %v883 = vadd.f32 %v833, %v875
      %v884 = vadd.f32 %v834, %v876
      %885 = vrot.lane.b32.xlu0 %v509, 111
      %v886 = vpop.permute.xlu0 %885
      %887 = vrot.lane.b32.xlu0 %v513, 111
      %v888 = vpop.permute.xlu0 %887
      %889 = vrot.lane.b32.xlu0 %v510, 111
      %v890 = vpop.permute.xlu0 %889
      %891 = vrot.lane.b32.xlu0 %v514, 111
      %v892 = vpop.permute.xlu0 %891
      %893 = vrot.lane.b32.xlu0 %v511, 111
      %v894 = vpop.permute.xlu0 %893
      %895 = vrot.lane.b32.xlu0 %v515, 111
      %v896 = vpop.permute.xlu0 %895
      %897 = vrot.lane.b32.xlu0 %v512, 111
      %v898 = vpop.permute.xlu0 %897
      %899 = vrot.lane.b32.xlu0 %v516, 111
      %v900 = vpop.permute.xlu0 %899
      %vm901 = vcmp.lt.s32.totalorder %v551, 111
      %v902 = vsel %vm901, %v894, %v898
      %v903 = vsel %vm901, %v896, %v900
      %v904 = vsel %vm901, %v890, %v894
      %v905 = vsel %vm901, %v892, %v896
      %v906 = vsel %vm901, %v886, %v890
      %v907 = vsel %vm901, %v888, %v892
      %v908 = vsel %vm901, %v898, %v886
      %v909 = vsel %vm901, %v900, %v888
      %s910 = scalar_lea.vmem %s3, 512
      %v911 = vld [vmem:[%s910] sm:$0xff]
      %v912 = vld [vmem:[%s910 + $0x8] sm:$0xff]
      %v913 = vld [vmem:[%s910 + $0x10] sm:$0xff]
      %v914 = vld [vmem:[%s910 + $0x18] sm:$0xff]
      %v915 = vld [vmem:[%s910 + $0x20] sm:$0xff]
      %v916 = vld [vmem:[%s910 + $0x28] sm:$0xff]
      %v917 = vld [vmem:[%s910 + $0x30] sm:$0xff]
      %v918 = vld [vmem:[%s910 + $0x38] sm:$0xff]
      %v919 = vmul.f32 %v906, %v911
      %v920 = vmul.f32 %v904, %v912
      %v921 = vmul.f32 %v902, %v913
      %v922 = vmul.f32 %v908, %v914
      %v923 = vmul.f32 %v907, %v915
      %v924 = vmul.f32 %v905, %v916
      %v925 = vmul.f32 %v903, %v917
      %v926 = vmul.f32 %v909, %v918
      %v927 = vadd.f32 %v877, %v919
      %v928 = vadd.f32 %v878, %v920
      %v929 = vadd.f32 %v879, %v921
      %v930 = vadd.f32 %v880, %v922
      %v931 = vadd.f32 %v881, %v923
      %v932 = vadd.f32 %v882, %v924
      %v933 = vadd.f32 %v883, %v925
      %v934 = vadd.f32 %v884, %v926
      %v935 = vld [vmem:[%s4] sm:$0xff]
      %v936 = vld [vmem:[%s4 + $0x8] sm:$0xff]
      %938 = vset.pattern.permute.xlu0 0
      %939 = vperm.xlu0 %938, %v935
      %v940 = vpop.permute.xlu0 %939
      %943 = vset.pattern.permute.xlu0 0
      %944 = vperm.xlu0 %943, %v936
      %v945 = vpop.permute.xlu0 %944
      %v947 = vadd.f32 %v927, %v940
      %v948 = vadd.f32 %v928, %v940
      %v949 = vadd.f32 %v929, %v940
      %v950 = vadd.f32 %v930, %v940
      %v951 = vadd.f32 %v931, %v945
      %v952 = vadd.f32 %v932, %v945
      %v953 = vadd.f32 %v933, %v945
      %v954 = vadd.f32 %v934, %v945
      %v955 = vsub.f32 0.0, %v947
      %v956 = vsub.f32 0.0, %v948
      %v957 = vsub.f32 0.0, %v949
      %v958 = vsub.f32 0.0, %v950
      %v959 = vsub.f32 0.0, %v951
      %v960 = vsub.f32 0.0, %v952
      %v961 = vsub.f32 0.0, %v953
      %v962 = vsub.f32 0.0, %v954
      %v963 = vmul.f32 %v955, 1.442695
      %v964 = vpow.pop %v963
      %v965 = vmul.f32 %v956, 1.442695
      %v966 = vpow.pop %v965
      %v967 = vmul.f32 %v957, 1.442695
      %v968 = vpow.pop %v967
      %v969 = vmul.f32 %v958, 1.442695
      %v970 = vpow.pop %v969
      %v971 = vmul.f32 %v959, 1.442695
      %v972 = vpow.pop %v971
      %v973 = vmul.f32 %v960, 1.442695
      %v974 = vpow.pop %v973
      %v975 = vmul.f32 %v961, 1.442695
      %v976 = vpow.pop %v975
      %v977 = vmul.f32 %v962, 1.442695
      %v978 = vpow.pop %v977
      %v979 = vadd.f32 %v964, 1.0
      %v980 = vadd.f32 %v966, 1.0
      %v981 = vadd.f32 %v968, 1.0
      %v982 = vadd.f32 %v970, 1.0
      %v983 = vadd.f32 %v972, 1.0
      %v984 = vadd.f32 %v974, 1.0
      %v985 = vadd.f32 %v976, 1.0
      %v986 = vadd.f32 %v978, 1.0
      %v987 = vrcp.pop %v979
      %v988 = vrcp.pop %v980
      %v989 = vrcp.pop %v981
      %v990 = vrcp.pop %v982
      %v991 = vrcp.pop %v983
      %v992 = vrcp.pop %v984
      %v993 = vrcp.pop %v985
      %v994 = vrcp.pop %v986
      %v995 = vmul.f32 %v947, %v987
      %v996 = vmul.f32 %v948, %v988
      %v997 = vmul.f32 %v949, %v989
      %v998 = vmul.f32 %v950, %v990
      %v999 = vmul.f32 %v951, %v991
      %v1000 = vmul.f32 %v952, %v992
      %v1001 = vmul.f32 %v953, %v993
      %v1002 = vmul.f32 %v954, %v994
      %v1003 = vld [vmem:[%s5] sm:$0xf]
      %v1004 = vld [vmem:[%s6] sm:$0xf]
      %1006 = vset.pattern.permute.xlu0 0
      %1007 = vperm.xlu0 %1006, %v1004
      %v1008 = vpop.permute.xlu0 %1007
      %vm1010 = vcmask 130048
      %v1012 = vsel %vm1010, %v1003, 0
      %1014 = vmatprep.subr.mxu0 0.0
      %1015 = vmatpush1.msra.mxu0 0.0
      %1016 = vmatprep.subr.mxu0 0.0
      %1017 = vmatpush1.msra.mxu0 0.0
      %1018 = vmatprep.subr.mxu0 0.0
      %1019 = vmatpush1.msra.mxu0 0.0
      %1020 = vmatprep.subr.mxu0 0.0
      %1021 = vmatpush1.msra.mxu0 0.0
      %1022 = vmatprep.subr.mxu0 0.0
      %1023 = vmatpush1.msra.mxu0 0.0
      %1024 = vmatprep.subr.mxu0 0.0
      %1025 = vmatpush1.msra.mxu0 0.0
      %1026 = vmatprep.subr.mxu0 0.0
      %1027 = vmatpush1.msra.mxu0 0.0
      %1028 = vmatprep.subr.mxu0 0.0
      %1029 = vmatpush1.msra.mxu0 0.0
      %1030 = vmatprep.subr.mxu0 0.0
      %1031 = vmatpush1.msra.mxu0 0.0
      %1032 = vmatprep.subr.mxu0 0.0
      %1033 = vmatpush1.msra.mxu0 0.0
      %1034 = vmatprep.subr.mxu0 0.0
      %1035 = vmatpush1.msra.mxu0 0.0
      %1036 = vmatprep.subr.mxu0 0.0
      %1037 = vmatpush1.msra.mxu0 0.0
      %1038 = vmatprep.subr.mxu0 0.0
      %1039 = vmatpush1.msra.mxu0 0.0
      %1040 = vmatprep.subr.mxu0 0.0
      %1041 = vmatpush1.msra.mxu0 0.0
      %1042 = vmatprep.subr.mxu0 %v1000
      %1043 = vmatpush1.msra.mxu0 %v999
      %1044 = vmatprep.subr.mxu0 %v996
      %1045 = vmatpush1.msra.mxu0 %v995
      %1046 = vmatprep.subr.mxu0 0.0
      %1047 = vmatpush2.msra.mxu0 0.0
      %1048 = vmatprep.subr.mxu0 0.0
      %1049 = vmatpush2.msra.mxu0 0.0
      %1050 = vmatprep.subr.mxu0 0.0
      %1051 = vmatpush2.msra.mxu0 0.0
      %1052 = vmatprep.subr.mxu0 0.0
      %1053 = vmatpush2.msra.mxu0 0.0
      %1054 = vmatprep.subr.mxu0 0.0
      %1055 = vmatpush2.msra.mxu0 0.0
      %1056 = vmatprep.subr.mxu0 0.0
      %1057 = vmatpush2.msra.mxu0 0.0
      %1058 = vmatprep.subr.mxu0 0.0
      %1059 = vmatpush2.msra.mxu0 0.0
      %1060 = vmatprep.subr.mxu0 0.0
      %1061 = vmatpush2.msra.mxu0 0.0
      %1062 = vmatprep.subr.mxu0 0.0
      %1063 = vmatpush2.msra.mxu0 0.0
      %1064 = vmatprep.subr.mxu0 0.0
      %1065 = vmatpush2.msra.mxu0 0.0
      %1066 = vmatprep.subr.mxu0 0.0
      %1067 = vmatpush2.msra.mxu0 0.0
      %1068 = vmatprep.subr.mxu0 0.0
      %1069 = vmatpush2.msra.mxu0 0.0
      %1070 = vmatprep.subr.mxu0 0.0
      %1071 = vmatpush2.msra.mxu0 0.0
      %1072 = vmatprep.subr.mxu0 0.0
      %1073 = vmatpush2.msra.mxu0 0.0
      %1074 = vmatprep.subr.mxu0 0.0
      %1075 = vmatpush2.msra.mxu0 0.0
      %1076 = vmatprep.subr.mxu0 0.0
      %1077 = vmatpush2.msra.mxu0 0.0
      %1078 = vmatprep.mubr.f32.mxu0 0.0
      %1079 = vmatmul.mubr.f32.gmra.mxu0 %v1012
      %v1080 = vpop.f32.mrf.mxu0
      %v1081 = vadd.f32 %v1008, %v1080
      %v1082 = vpop.f32.mrf.mxu0
      %v1083 = vadd.f32 %v1008, %v1082
      %1084 = vdwg.mxu0
      %1085 = vmatprep.subr.mxu0 0.0
      %1086 = vmatpush1.msra.mxu0 0.0
      %1087 = vmatprep.subr.mxu0 0.0
      %1088 = vmatpush1.msra.mxu0 0.0
      %1089 = vmatprep.subr.mxu0 0.0
      %1090 = vmatpush1.msra.mxu0 0.0
      %1091 = vmatprep.subr.mxu0 0.0
      %1092 = vmatpush1.msra.mxu0 0.0
      %1093 = vmatprep.subr.mxu0 0.0
      %1094 = vmatpush1.msra.mxu0 0.0
      %1095 = vmatprep.subr.mxu0 0.0
      %1096 = vmatpush1.msra.mxu0 0.0
      %1097 = vmatprep.subr.mxu0 0.0
      %1098 = vmatpush1.msra.mxu0 0.0
      %1099 = vmatprep.subr.mxu0 0.0
      %1100 = vmatpush1.msra.mxu0 0.0
      %1101 = vmatprep.subr.mxu0 0.0
      %1102 = vmatpush1.msra.mxu0 0.0
      %1103 = vmatprep.subr.mxu0 0.0
      %1104 = vmatpush1.msra.mxu0 0.0
      %1105 = vmatprep.subr.mxu0 0.0
      %1106 = vmatpush1.msra.mxu0 0.0
      %1107 = vmatprep.subr.mxu0 0.0
      %1108 = vmatpush1.msra.mxu0 0.0
      %1109 = vmatprep.subr.mxu0 0.0
      %1110 = vmatpush1.msra.mxu0 0.0
      %1111 = vmatprep.subr.mxu0 0.0
      %1112 = vmatpush1.msra.mxu0 0.0
      %1113 = vmatprep.subr.mxu0 %v1002
      %1114 = vmatpush1.msra.mxu0 %v1001
      %1115 = vmatprep.subr.mxu0 %v998
      %1116 = vmatpush1.msra.mxu0 %v997
      %1117 = vmatprep.subr.mxu0 0.0
      %1118 = vmatpush2.msra.mxu0 0.0
      %1119 = vmatprep.subr.mxu0 0.0
      %1120 = vmatpush2.msra.mxu0 0.0
      %1121 = vmatprep.subr.mxu0 0.0
      %1122 = vmatpush2.msra.mxu0 0.0
      %1123 = vmatprep.subr.mxu0 0.0
      %1124 = vmatpush2.msra.mxu0 0.0
      %1125 = vmatprep.subr.mxu0 0.0
      %1126 = vmatpush2.msra.mxu0 0.0
      %1127 = vmatprep.subr.mxu0 0.0
      %1128 = vmatpush2.msra.mxu0 0.0
      %1129 = vmatprep.subr.mxu0 0.0
      %1130 = vmatpush2.msra.mxu0 0.0
      %1131 = vmatprep.subr.mxu0 0.0
      %1132 = vmatpush2.msra.mxu0 0.0
      %1133 = vmatprep.subr.mxu0 0.0
      %1134 = vmatpush2.msra.mxu0 0.0
      %1135 = vmatprep.subr.mxu0 0.0
      %1136 = vmatpush2.msra.mxu0 0.0
      %1137 = vmatprep.subr.mxu0 0.0
      %1138 = vmatpush2.msra.mxu0 0.0
      %1139 = vmatprep.subr.mxu0 0.0
      %1140 = vmatpush2.msra.mxu0 0.0
      %1141 = vmatprep.subr.mxu0 0.0
      %1142 = vmatpush2.msra.mxu0 0.0
      %1143 = vmatprep.subr.mxu0 0.0
      %1144 = vmatpush2.msra.mxu0 0.0
      %1145 = vmatprep.subr.mxu0 0.0
      %1146 = vmatpush2.msra.mxu0 0.0
      %1147 = vmatprep.subr.mxu0 0.0
      %1148 = vmatpush2.msra.mxu0 0.0
      %1149 = vmatprep.mubr.f32.mxu0 0.0
      %1150 = vmatmul.mubr.f32.gmra.mxu0 %v1012
      %v1151 = vpop.f32.mrf.mxu0
      %v1152 = vadd.f32 %v1008, %v1151
      %v1153 = vpop.f32.mrf.mxu0
      %v1154 = vadd.f32 %v1008, %v1153
      %1155 = vdwg.mxu0
      %v1158 = vadd.f32 %v1081, %v279
      %v1159 = vadd.f32 %v1083, %v297
      %v1160 = vadd.f32 %v1152, %v280
      %v1161 = vadd.f32 %v1154, %v298
      %v1166 = vcombine.low %v1158, %v1159
      %v1167 = vcombine.low %v1160, %v1161
      %1170 = vst [vmem:[%s278] sm:$0xff] %v1166
      %1171 = vst [vmem:[%s278 + $0x8] sm:$0xff] %v1167
      %p1172 = scmp.lt.s32.totalorder %s18, 1
      %s1173 = scalar_select %p1172, %s18, 1
      %s1174 = smul.addr %s1173, 4
      %s1175 = smul.addr %s1174, 4
      %s1176 = scalar_lea.vmem %s7, %s1175
      // Predicated region
      $region49: #{mv2block_forward.1} parent=47 // pred_check
        %p1177 = pneg %p188
      $region50: #{mv2block_forward.1} parent=47 // pred_check_branch
        %1179 = sbr.rel (%p1177) target = $region52
      $region51: #{mv2block_forward.1} parent=47 // pred_region
        _
      $region52: #{mv2block_forward.1} parent=47 // pred_fallthru
        _
    $region48: #{mv2block_forward.1} parent=5 // pred_fallthru
      _
    %p1180 = scmp.le.s32.totalorder 2, %s13
    // Predicated region
    $region53: #{mv2block_forward.1} parent=5 // pred_check
      %p1181 = pneg %p1180
    $region54: #{mv2block_forward.1} parent=5 // pred_check_branch
      %1183 = sbr.rel (%p1181) target = $region56
    $region55: #{mv2block_forward.1} parent=5 // pred_region
      %s1184 = ssub.s32 %s13, 2
      // Predicated region
      $region57: #{mv2block_forward.1} parent=55 // pred_check
        %p1185 = pneg %p194
      $region58: #{mv2block_forward.1} parent=55 // pred_check_branch
        %1187 = sbr.rel (%p1185) target = $region60
      $region59: #{mv2block_forward.1} parent=55 // pred_region
        %p1188 = scmp.lt.s32.totalorder %s19, 1
        %s1189 = scalar_select %p1188, %s19, 1
        %s1190 = smul.addr %s1189, 4
        %s1191 = smul.addr %s1190, 4
        %s1192 = scalar_lea.vmem %s7, %s1191
      $region60: #{mv2block_forward.1} parent=55 // pred_fallthru
        _
    $region56: #{mv2block_forward.1} parent=5 // pred_fallthru
      _
  $region6: #{mv2block_forward.1} parent=0 // loop_footer
    %s17 = sadd.s32 1, %s13
  $region7: #{mv2block_forward.1} parent=0 // loop_footer_branch
    %12 = sbr.rel target = $region3
  $region8: #{mv2block_forward.1} parent=0 // loop_exit
    _

</llo_original>
